<compile_context>
chip_gen: v7x
topology: tpu7x:2x2x1
jax: 0.10.0
libtpu: 0.0.40
codegen_flags: <defaults>
</compile_context>

<pallas_src>
import math

import jax
import jax.numpy as jnp
from jax.experimental import pallas as pl
from jax.experimental.pallas import tpu as pltpu

EMBED_DIM = 93
NUM_HEADS = 3
HEAD_DIM = EMBED_DIM // NUM_HEADS            # 31
HEAD_PAD = 128                               # lane-aligned per-head width
POOL = 4
POOL_OUT = (EMBED_DIM - POOL) // POOL + 1    # 23
POOL_PAD = 128                               # lane-dense kernel output width

HI = jax.lax.Precision.HIGHEST               # reference-only precision


# ----------------------------- Pallas kernel ---------------------------------

def _feature_attention_kernel(x_ref, w_in_ref, b_in_ref, w_out_ref, b_out_ref,
                              pool_ref, o_ref):
    bt, s, e = x_ref.shape
    r = bt * s
    nh, dp = NUM_HEADS, HEAD_PAD
    scale = 1.0 / math.sqrt(HEAD_DIM)

    # Flatten the batch tile to a row slab; S is a multiple of 8 so this is a
    # layout no-op.
    xf = x_ref[...].reshape(r, e)                                   # (R, 93) f32

    for layer in range(2):                                          # static unroll
        w_in = w_in_ref[layer]                                      # (93, 1152) bf16
        b_in = b_in_ref[layer]                                      # (1, 1152)  f32
        w_out = w_out_ref[layer]                                    # (384, 93)  bf16
        b_out = b_out_ref[layer]                                    # (1, 93)    f32

        # Fused Q/K/V projection for all heads: one wide, lane-aligned matmul.
        qkv = jnp.dot(xf.astype(jnp.bfloat16), w_in,
                      preferred_element_type=jnp.float32) + b_in    # (R, 1152)

        heads = []
        for h in range(nh):                                         # 3 heads, static
            q = qkv[:, h * dp:(h + 1) * dp].reshape(bt, s, dp).astype(jnp.bfloat16)
            k = qkv[:, (nh + h) * dp:(nh + h + 1) * dp].reshape(bt, s, dp).astype(jnp.bfloat16)
            v = qkv[:, (2 * nh + h) * dp:(2 * nh + h + 1) * dp].reshape(bt, s, dp).astype(jnp.bfloat16)

            # Padded lanes (31..127) are zero in q/k/v, so they contribute
            # nothing to the score contraction and never enter the reductions.
            sc = jnp.einsum("bqd,bkd->bqk", q, k,
                            preferred_element_type=jnp.float32) * scale   # (Bt,S,S)
            sc = sc - jnp.max(sc, axis=-1, keepdims=True)
            ex = jnp.exp(sc)
            inv = pl.reciprocal(jnp.sum(ex, axis=-1, keepdims=True), approx=True)
            p = ex * inv
            o = jnp.einsum("bqk,bkd->bqd", p.astype(jnp.bfloat16), v,
                           preferred_element_type=jnp.float32)            # (Bt,S,128)
            heads.append(o)

        # Lane-aligned concat of per-head outputs -> one output-proj matmul.
        o_cat = jnp.concatenate(heads, axis=-1).reshape(r, nh * dp)       # (R, 384)
        att = jnp.dot(o_cat.astype(jnp.bfloat16), w_out,
                      preferred_element_type=jnp.float32) + b_out         # (R, 93)

        gate = jnp.mean(att, axis=-1, keepdims=True)                      # (R, 1)
        xf = xf + att * gate                                              # residual

    # AvgPool1d(4, 4) over the embed axis as an exact f32 matmul; output is
    # lane-dense (128 columns, cols 23..127 are zero) and sliced in the wrapper.
    pooled = jnp.dot(xf, pool_ref[...], preferred_element_type=jnp.float32)
    o_ref[...] = pooled.reshape(bt, s, POOL_PAD)


# ----------------------------- host-side wrapper ------------------------------

def _pack_mha_params(in_w, in_b, out_w, out_b):
    """PyTorch MultiheadAttention layout -> fused, lane-aligned kernel layout."""
    E, H, Dh, Dp = EMBED_DIM, NUM_HEADS, HEAD_DIM, HEAD_PAD
    # in_w: (3E, E), rows = [q; k; v], head-major within each projection.
    w = in_w.reshape(3, H, Dh, E)                       # (3, H, 31, 93)
    w = jnp.transpose(w, (0, 1, 3, 2))                  # (3, H, 93, 31)
    w = jnp.pad(w, ((0, 0), (0, 0), (0, 0), (0, Dp - Dh)))            # (3, H, 93, 128)
    w_in = jnp.transpose(w, (2, 0, 1, 3)).reshape(E, 3 * H * Dp)      # (93, 1152)

    b = jnp.pad(in_b.reshape(3, H, Dh),
                ((0, 0), (0, 0), (0, Dp - Dh))).reshape(1, 3 * H * Dp)  # (1, 1152)

    # out_proj: y = att_concat @ out_w.T + out_b; rows of out_w.T split by head.
    wo = jnp.pad(out_w.T.reshape(H, Dh, E),
                 ((0, 0), (0, Dp - Dh), (0, 0))).reshape(H * Dp, E)     # (384, 93)
    bo = out_b.reshape(1, E)                                            # (1, 93)
    return w_in, b, wo, bo


def _const_spec(arr):
    return pl.BlockSpec(arr.shape, lambda b, _n=arr.ndim: (0,) * _n)


def _pick_batch_tile(batch, seq, target_rows=512):
    """Largest divisor of `batch` with Bt*S <= target_rows; keep >=2 grid steps
    (v7x megacore) when that does not starve the MXU of rows."""
    cap = max(1, target_rows // max(seq, 1))
    bt = 1
    for d in range(1, min(batch, cap) + 1):
        if batch % d == 0:
            bt = d
    if batch // bt == 1 and batch % 2 == 0 and (batch // 2) * seq >= 128:
        bt = batch // 2
    return bt


def feature_attention_forward(x, params, *, target_rows=512):
    """x: (B, S, 93) f32. params: PyTorch-layout weights for both MHA layers."""
    B, S, E = x.shape
    assert E == EMBED_DIM
    in_w1, in_b1, out_w1, out_b1, in_w2, in_b2, out_w2, out_b2 = params

    p1 = _pack_mha_params(in_w1, in_b1, out_w1, out_b1)
    p2 = _pack_mha_params(in_w2, in_b2, out_w2, out_b2)
    w_in = jnp.stack([p1[0], p2[0]]).astype(jnp.bfloat16)    # (2, 93, 1152)
    b_in = jnp.stack([p1[1], p2[1]])                         # (2, 1, 1152) f32
    w_out = jnp.stack([p1[2], p2[2]]).astype(jnp.bfloat16)   # (2, 384, 93)
    b_out = jnp.stack([p1[3], p2[3]])                        # (2, 1, 93)   f32

    # Pooling matrix: column i averages embed lanes [4i, 4i+4); lane 92 dropped;
    # columns 23..127 are zero so the kernel output store is lane-dense.
    rows = jnp.arange(POOL_OUT * POOL)
    pool_mat = (jnp.zeros((EMBED_DIM, POOL_PAD), jnp.float32)
                .at[rows, rows // POOL].set(1.0 / POOL))

    bt = _pick_batch_tile(B, S, target_rows)
    assert B % bt == 0

    consts = (w_in, b_in, w_out, b_out, pool_mat)

    out = pl.pallas_call(
        _feature_attention_kernel,
        out_shape=jax.ShapeDtypeStruct((B, S, POOL_PAD), jnp.float32),
        grid=(B // bt,),
        in_specs=[pl.BlockSpec((bt, S, EMBED_DIM), lambda b: (b, 0, 0))]
                + [_const_spec(a) for a in consts],
        out_specs=pl.BlockSpec((bt, S, POOL_PAD), lambda b: (b, 0, 0)),
        compiler_params=pltpu.CompilerParams(
            dimension_semantics=("parallel",),      # batch-tile axis -> megacore
            vmem_limit_bytes=32 * 1024 * 1024),
    )(x, *consts)

    return out[..., :POOL_OUT]


# ----------------------------- pure-JAX reference -----------------------------

def _mha_ref(x, in_w, in_b, out_w, out_b):
    """torch.nn.MultiheadAttention (batch_first, eval) reference, f32-highest."""
    B, S, E = x.shape
    H, Dh = NUM_HEADS, HEAD_DIM
    qkv = jnp.einsum("bse,fe->bsf", x, in_w, precision=HI) + in_b
    q, k, v = qkv[..., :E], qkv[..., E:2 * E], qkv[..., 2 * E:]
    split = lambda t: t.reshape(B, S, H, Dh).transpose(0, 2, 1, 3)
    q, k, v = split(q), split(k), split(v)
    s = jnp.einsum("bhqd,bhkd->bhqk", q, k, precision=HI) / math.sqrt(Dh)
    p = jax.nn.softmax(s, axis=-1)
    o = jnp.einsum("bhqk,bhkd->bhqd", p, v, precision=HI)
    o = o.transpose(0, 2, 1, 3).reshape(B, S, E)
    return jnp.einsum("bse,fe->bsf", o, out_w, precision=HI) + out_b


def feature_attention_reference(x, params):
    in_w1, in_b1, out_w1, out_b1, in_w2, in_b2, out_w2, out_b2 = params
    a = _mha_ref(x, in_w1, in_b1, out_w1, out_b1)
    x = x + a * jnp.mean(a, axis=-1, keepdims=True)
    a = _mha_ref(x, in_w2, in_b2, out_w2, out_b2)
    x = x + a * jnp.mean(a, axis=-1, keepdims=True)
    B, S, E = x.shape
    return jnp.mean(x[..., :POOL_OUT * POOL].reshape(B, S, POOL_OUT, POOL), axis=-1)


def make_params(key):
    """Deterministic synthetic weights in PyTorch MultiheadAttention layout."""
    E = EMBED_DIM
    bound = 1.0 / math.sqrt(E)
    params = []
    for _ in range(2):
        key, kw, kb, ko, kc = jax.random.split(key, 5)
        in_w = jax.random.uniform(kw, (3 * E, E), jnp.float32, -bound, bound)
        in_b = jax.random.uniform(kb, (3 * E,), jnp.float32, -bound, bound)
        out_w = jax.random.uniform(ko, (E, E), jnp.float32, -bound, bound)
        out_b = jax.random.uniform(kc, (E,), jnp.float32, -bound, bound)
        params += [in_w, in_b, out_w, out_b]
    return tuple(params)


if __name__ == "__main__":
    key = jax.random.PRNGKey(0)
    key, k_x, k_p = jax.random.split(key, 3)

    # Small shapes consistent with the module: batch=2, seq=8, embed_dim=93 (fixed).
    B, S = 2, 8
    x = jax.random.normal(k_x, (B, S, EMBED_DIM), jnp.float32)
    params = make_params(k_p)

    out = jax.block_until_ready(feature_attention_forward(x, params))
    ref = jax.block_until_ready(feature_attention_reference(x, params))

    assert out.shape == (B, S, POOL_OUT), out.shape
    max_err = float(jnp.max(jnp.abs(out - ref)))
    assert jnp.allclose(out, ref, rtol=1e-3, atol=1e-3), max_err

    print("KERNEL_OK")
</pallas_src>

<mosaic_0001>
module attributes {stable_mosaic.version = 11 : i64} {
  func.func @_feature_attention_kernel(%arg0: i32, %arg1: memref<2x8x93xf32, #tpu.memory_space<vmem>>, %arg2: memref<2x93x1152xbf16, #tpu.memory_space<vmem>>, %arg3: memref<2x1x1152xf32, #tpu.memory_space<vmem>>, %arg4: memref<2x384x93xbf16, #tpu.memory_space<vmem>>, %arg5: memref<2x1x93xf32, #tpu.memory_space<vmem>>, %arg6: memref<93x128xf32, #tpu.memory_space<vmem>>, %arg7: memref<2x8x128xf32, #tpu.memory_space<vmem>>) attributes {dimension_semantics = [#tpu.dimension_semantics<parallel>], iteration_bounds = array<i64: 1>, scalar_prefetch = 0 : i64, scratch_operands = 0 : i64, tpu.core_type = #tpu.core_type<tc>, window_params = [{transform_indices = @transform_0, window_bounds = array<i64: 2, 8, 93>}, {pipeline_mode = #tpu.pipeline_mode<synchronous>, transform_indices = @transform_1, window_bounds = array<i64: 2, 93, 1152>}, {pipeline_mode = #tpu.pipeline_mode<synchronous>, transform_indices = @transform_2, window_bounds = array<i64: 2, 1, 1152>}, {pipeline_mode = #tpu.pipeline_mode<synchronous>, transform_indices = @transform_3, window_bounds = array<i64: 2, 384, 93>}, {pipeline_mode = #tpu.pipeline_mode<synchronous>, transform_indices = @transform_4, window_bounds = array<i64: 2, 1, 93>}, {pipeline_mode = #tpu.pipeline_mode<synchronous>, transform_indices = @transform_5, window_bounds = array<i64: 93, 128>}, {transform_indices = @transform_6, window_bounds = array<i64: 2, 8, 128>}]} {
    %c0 = arith.constant 0 : index
    %c0_0 = arith.constant 0 : index
    %c0_1 = arith.constant 0 : index
    %0 = vector.load %arg1[%c0, %c0_0, %c0_1] : memref<2x8x93xf32, #tpu.memory_space<vmem>>, vector<2x8x93xf32>
    %1 = vector.shape_cast %0 : vector<2x8x93xf32> to vector<16x93xf32>
    %c0_2 = arith.constant 0 : index
    %c0_3 = arith.constant 0 : index
    %c0_4 = arith.constant 0 : index
    %2 = vector.load %arg2[%c0_2, %c0_3, %c0_4] : memref<2x93x1152xbf16, #tpu.memory_space<vmem>>, vector<1x93x1152xbf16>
    %3 = vector.shape_cast %2 : vector<1x93x1152xbf16> to vector<93x1152xbf16>
    %c0_5 = arith.constant 0 : index
    %c0_6 = arith.constant 0 : index
    %c0_7 = arith.constant 0 : index
    %4 = vector.load %arg3[%c0_5, %c0_6, %c0_7] : memref<2x1x1152xf32, #tpu.memory_space<vmem>>, vector<1x1x1152xf32>
    %5 = vector.shape_cast %4 : vector<1x1x1152xf32> to vector<1x1152xf32>
    %c0_8 = arith.constant 0 : index
    %c0_9 = arith.constant 0 : index
    %c0_10 = arith.constant 0 : index
    %6 = vector.load %arg4[%c0_8, %c0_9, %c0_10] : memref<2x384x93xbf16, #tpu.memory_space<vmem>>, vector<1x384x93xbf16>
    %7 = vector.shape_cast %6 : vector<1x384x93xbf16> to vector<384x93xbf16>
    %c0_11 = arith.constant 0 : index
    %c0_12 = arith.constant 0 : index
    %c0_13 = arith.constant 0 : index
    %8 = vector.load %arg5[%c0_11, %c0_12, %c0_13] : memref<2x1x93xf32, #tpu.memory_space<vmem>>, vector<1x1x93xf32>
    %9 = vector.shape_cast %8 : vector<1x1x93xf32> to vector<1x93xf32>
    %10 = arith.truncf %1 : vector<16x93xf32> to vector<16x93xbf16>
    %cst = arith.constant dense<0.000000e+00> : vector<16x1152xf32>
    %11 = tpu.matmul %10, %3, %cst {dimension_numbers = #tpu.dot_dimension_numbers<[1], [0], [0], [1], [0, 0, 1, 1], [], []>} : vector<16x93xbf16>, vector<93x1152xbf16>, vector<16x1152xf32> -> vector<16x1152xf32>
    %12 = vector.broadcast %5 : vector<1x1152xf32> to vector<16x1152xf32>
    %13 = arith.addf %11, %12 : vector<16x1152xf32>
    %14 = vector.extract_strided_slice %13 {offsets = [0, 0], sizes = [16, 128], strides = [1, 1]} : vector<16x1152xf32> to vector<16x128xf32>
    %15 = vector.shape_cast %14 : vector<16x128xf32> to vector<2x8x128xf32>
    %16 = arith.truncf %15 : vector<2x8x128xf32> to vector<2x8x128xbf16>
    %17 = vector.extract_strided_slice %13 {offsets = [0, 384], sizes = [16, 128], strides = [1, 1]} : vector<16x1152xf32> to vector<16x128xf32>
    %18 = vector.shape_cast %17 : vector<16x128xf32> to vector<2x8x128xf32>
    %19 = arith.truncf %18 : vector<2x8x128xf32> to vector<2x8x128xbf16>
    %20 = vector.extract_strided_slice %13 {offsets = [0, 768], sizes = [16, 128], strides = [1, 1]} : vector<16x1152xf32> to vector<16x128xf32>
    %21 = vector.shape_cast %20 : vector<16x128xf32> to vector<2x8x128xf32>
    %22 = arith.truncf %21 : vector<2x8x128xf32> to vector<2x8x128xbf16>
    "tpu.trace_start"() <{level = 10 : i32, message = "bqd,bkd->bqk"}> : () -> ()
    %cst_14 = arith.constant dense<0.000000e+00> : vector<2x8x8xf32>
    %23 = tpu.matmul %16, %19, %cst_14 {dimension_numbers = #tpu.dot_dimension_numbers<[2], [2], [1], [1], [0, 0, 0, 1, 1, 1], [0], [0]>} : vector<2x8x128xbf16>, vector<2x8x128xbf16>, vector<2x8x8xf32> -> vector<2x8x8xf32>
    "tpu.trace_stop"() : () -> ()
    %cst_15 = arith.constant 0.179605305 : f32
    %24 = vector.broadcast %cst_15 : f32 to vector<2x8x8xf32>
    %25 = arith.mulf %23, %24 : vector<2x8x8xf32>
    %cst_16 = arith.constant dense<0xFF800000> : vector<2x8xf32>
    %26 = vector.multi_reduction <maximumf>, %25, %cst_16 [2] : vector<2x8x8xf32> to vector<2x8xf32>
    %27 = vector.shape_cast %26 : vector<2x8xf32> to vector<2x8x1xf32>
    %28 = vector.broadcast %27 : vector<2x8x1xf32> to vector<2x8x8xf32>
    %29 = arith.subf %25, %28 : vector<2x8x8xf32>
    %30 = math.exp %29 : vector<2x8x8xf32>
    %cst_17 = arith.constant dense<0.000000e+00> : vector<2x8xf32>
    %31 = vector.multi_reduction <add>, %30, %cst_17 [2] : vector<2x8x8xf32> to vector<2x8xf32>
    %32 = vector.shape_cast %31 : vector<2x8xf32> to vector<2x8x1xf32>
    %33 = tpu.reciprocal %32 {approx = true} : vector<2x8x1xf32> -> vector<2x8x1xf32>
    %34 = vector.broadcast %33 : vector<2x8x1xf32> to vector<2x8x8xf32>
    %35 = arith.mulf %30, %34 : vector<2x8x8xf32>
    %36 = arith.truncf %35 : vector<2x8x8xf32> to vector<2x8x8xbf16>
    "tpu.trace_start"() <{level = 10 : i32, message = "bqk,bkd->bqd"}> : () -> ()
    %cst_18 = arith.constant dense<0.000000e+00> : vector<2x8x128xf32>
    %37 = tpu.matmul %36, %22, %cst_18 {dimension_numbers = #tpu.dot_dimension_numbers<[2], [1], [1], [2], [0, 0, 0, 1, 1, 2], [0], [0]>} : vector<2x8x8xbf16>, vector<2x8x128xbf16>, vector<2x8x128xf32> -> vector<2x8x128xf32>
    "tpu.trace_stop"() : () -> ()
    %38 = vector.extract_strided_slice %13 {offsets = [0, 128], sizes = [16, 128], strides = [1, 1]} : vector<16x1152xf32> to vector<16x128xf32>
    %39 = vector.shape_cast %38 : vector<16x128xf32> to vector<2x8x128xf32>
    %40 = arith.truncf %39 : vector<2x8x128xf32> to vector<2x8x128xbf16>
    %41 = vector.extract_strided_slice %13 {offsets = [0, 512], sizes = [16, 128], strides = [1, 1]} : vector<16x1152xf32> to vector<16x128xf32>
    %42 = vector.shape_cast %41 : vector<16x128xf32> to vector<2x8x128xf32>
    %43 = arith.truncf %42 : vector<2x8x128xf32> to vector<2x8x128xbf16>
    %44 = vector.extract_strided_slice %13 {offsets = [0, 896], sizes = [16, 128], strides = [1, 1]} : vector<16x1152xf32> to vector<16x128xf32>
    %45 = vector.shape_cast %44 : vector<16x128xf32> to vector<2x8x128xf32>
    %46 = arith.truncf %45 : vector<2x8x128xf32> to vector<2x8x128xbf16>
    "tpu.trace_start"() <{level = 10 : i32, message = "bqd,bkd->bqk"}> : () -> ()
    %cst_19 = arith.constant dense<0.000000e+00> : vector<2x8x8xf32>
    %47 = tpu.matmul %40, %43, %cst_19 {dimension_numbers = #tpu.dot_dimension_numbers<[2], [2], [1], [1], [0, 0, 0, 1, 1, 1], [0], [0]>} : vector<2x8x128xbf16>, vector<2x8x128xbf16>, vector<2x8x8xf32> -> vector<2x8x8xf32>
    "tpu.trace_stop"() : () -> ()
    %cst_20 = arith.constant 0.179605305 : f32
    %48 = vector.broadcast %cst_20 : f32 to vector<2x8x8xf32>
    %49 = arith.mulf %47, %48 : vector<2x8x8xf32>
    %cst_21 = arith.constant dense<0xFF800000> : vector<2x8xf32>
    %50 = vector.multi_reduction <maximumf>, %49, %cst_21 [2] : vector<2x8x8xf32> to vector<2x8xf32>
    %51 = vector.shape_cast %50 : vector<2x8xf32> to vector<2x8x1xf32>
    %52 = vector.broadcast %51 : vector<2x8x1xf32> to vector<2x8x8xf32>
    %53 = arith.subf %49, %52 : vector<2x8x8xf32>
    %54 = math.exp %53 : vector<2x8x8xf32>
    %cst_22 = arith.constant dense<0.000000e+00> : vector<2x8xf32>
    %55 = vector.multi_reduction <add>, %54, %cst_22 [2] : vector<2x8x8xf32> to vector<2x8xf32>
    %56 = vector.shape_cast %55 : vector<2x8xf32> to vector<2x8x1xf32>
    %57 = tpu.reciprocal %56 {approx = true} : vector<2x8x1xf32> -> vector<2x8x1xf32>
    %58 = vector.broadcast %57 : vector<2x8x1xf32> to vector<2x8x8xf32>
    %59 = arith.mulf %54, %58 : vector<2x8x8xf32>
    %60 = arith.truncf %59 : vector<2x8x8xf32> to vector<2x8x8xbf16>
    "tpu.trace_start"() <{level = 10 : i32, message = "bqk,bkd->bqd"}> : () -> ()
    %cst_23 = arith.constant dense<0.000000e+00> : vector<2x8x128xf32>
    %61 = tpu.matmul %60, %46, %cst_23 {dimension_numbers = #tpu.dot_dimension_numbers<[2], [1], [1], [2], [0, 0, 0, 1, 1, 2], [0], [0]>} : vector<2x8x8xbf16>, vector<2x8x128xbf16>, vector<2x8x128xf32> -> vector<2x8x128xf32>
    "tpu.trace_stop"() : () -> ()
    %62 = vector.extract_strided_slice %13 {offsets = [0, 256], sizes = [16, 128], strides = [1, 1]} : vector<16x1152xf32> to vector<16x128xf32>
    %63 = vector.shape_cast %62 : vector<16x128xf32> to vector<2x8x128xf32>
    %64 = arith.truncf %63 : vector<2x8x128xf32> to vector<2x8x128xbf16>
    %65 = vector.extract_strided_slice %13 {offsets = [0, 640], sizes = [16, 128], strides = [1, 1]} : vector<16x1152xf32> to vector<16x128xf32>
    %66 = vector.shape_cast %65 : vector<16x128xf32> to vector<2x8x128xf32>
    %67 = arith.truncf %66 : vector<2x8x128xf32> to vector<2x8x128xbf16>
    %68 = vector.extract_strided_slice %13 {offsets = [0, 1024], sizes = [16, 128], strides = [1, 1]} : vector<16x1152xf32> to vector<16x128xf32>
    %69 = vector.shape_cast %68 : vector<16x128xf32> to vector<2x8x128xf32>
    %70 = arith.truncf %69 : vector<2x8x128xf32> to vector<2x8x128xbf16>
    "tpu.trace_start"() <{level = 10 : i32, message = "bqd,bkd->bqk"}> : () -> ()
    %cst_24 = arith.constant dense<0.000000e+00> : vector<2x8x8xf32>
    %71 = tpu.matmul %64, %67, %cst_24 {dimension_numbers = #tpu.dot_dimension_numbers<[2], [2], [1], [1], [0, 0, 0, 1, 1, 1], [0], [0]>} : vector<2x8x128xbf16>, vector<2x8x128xbf16>, vector<2x8x8xf32> -> vector<2x8x8xf32>
    "tpu.trace_stop"() : () -> ()
    %cst_25 = arith.constant 0.179605305 : f32
    %72 = vector.broadcast %cst_25 : f32 to vector<2x8x8xf32>
    %73 = arith.mulf %71, %72 : vector<2x8x8xf32>
    %cst_26 = arith.constant dense<0xFF800000> : vector<2x8xf32>
    %74 = vector.multi_reduction <maximumf>, %73, %cst_26 [2] : vector<2x8x8xf32> to vector<2x8xf32>
    %75 = vector.shape_cast %74 : vector<2x8xf32> to vector<2x8x1xf32>
    %76 = vector.broadcast %75 : vector<2x8x1xf32> to vector<2x8x8xf32>
    %77 = arith.subf %73, %76 : vector<2x8x8xf32>
    %78 = math.exp %77 : vector<2x8x8xf32>
    %cst_27 = arith.constant dense<0.000000e+00> : vector<2x8xf32>
    %79 = vector.multi_reduction <add>, %78, %cst_27 [2] : vector<2x8x8xf32> to vector<2x8xf32>
    %80 = vector.shape_cast %79 : vector<2x8xf32> to vector<2x8x1xf32>
    %81 = tpu.reciprocal %80 {approx = true} : vector<2x8x1xf32> -> vector<2x8x1xf32>
    %82 = vector.broadcast %81 : vector<2x8x1xf32> to vector<2x8x8xf32>
    %83 = arith.mulf %78, %82 : vector<2x8x8xf32>
    %84 = arith.truncf %83 : vector<2x8x8xf32> to vector<2x8x8xbf16>
    "tpu.trace_start"() <{level = 10 : i32, message = "bqk,bkd->bqd"}> : () -> ()
    %cst_28 = arith.constant dense<0.000000e+00> : vector<2x8x128xf32>
    %85 = tpu.matmul %84, %70, %cst_28 {dimension_numbers = #tpu.dot_dimension_numbers<[2], [1], [1], [2], [0, 0, 0, 1, 1, 2], [0], [0]>} : vector<2x8x8xbf16>, vector<2x8x128xbf16>, vector<2x8x128xf32> -> vector<2x8x128xf32>
    "tpu.trace_stop"() : () -> ()
    %86 = tpu.concatenate %37, %61, %85 in 2 : vector<2x8x128xf32>, vector<2x8x128xf32>, vector<2x8x128xf32> -> vector<2x8x384xf32>
    %87 = vector.shape_cast %86 : vector<2x8x384xf32> to vector<16x384xf32>
    %88 = arith.truncf %87 : vector<16x384xf32> to vector<16x384xbf16>
    %cst_29 = arith.constant dense<0.000000e+00> : vector<16x93xf32>
    %89 = tpu.matmul %88, %7, %cst_29 {dimension_numbers = #tpu.dot_dimension_numbers<[1], [0], [0], [1], [0, 0, 1, 1], [], []>} : vector<16x384xbf16>, vector<384x93xbf16>, vector<16x93xf32> -> vector<16x93xf32>
    %90 = vector.broadcast %9 : vector<1x93xf32> to vector<16x93xf32>
    %91 = arith.addf %89, %90 : vector<16x93xf32>
    %cst_30 = arith.constant dense<0.000000e+00> : vector<16xf32>
    %92 = vector.multi_reduction <add>, %91, %cst_30 [1] : vector<16x93xf32> to vector<16xf32>
    %93 = vector.shape_cast %92 : vector<16xf32> to vector<16x1xf32>
    %cst_31 = arith.constant 9.300000e+01 : f32
    %94 = vector.broadcast %cst_31 : f32 to vector<16x1xf32>
    %95 = arith.divf %93, %94 : vector<16x1xf32>
    %96 = vector.broadcast %95 : vector<16x1xf32> to vector<16x93xf32>
    %97 = arith.mulf %91, %96 : vector<16x93xf32>
    %98 = arith.addf %1, %97 : vector<16x93xf32>
    %c1 = arith.constant 1 : index
    %c0_32 = arith.constant 0 : index
    %c0_33 = arith.constant 0 : index
    %99 = vector.load %arg2[%c1, %c0_32, %c0_33] : memref<2x93x1152xbf16, #tpu.memory_space<vmem>>, vector<1x93x1152xbf16>
    %100 = vector.shape_cast %99 : vector<1x93x1152xbf16> to vector<93x1152xbf16>
    %c1_34 = arith.constant 1 : index
    %c0_35 = arith.constant 0 : index
    %c0_36 = arith.constant 0 : index
    %101 = vector.load %arg3[%c1_34, %c0_35, %c0_36] : memref<2x1x1152xf32, #tpu.memory_space<vmem>>, vector<1x1x1152xf32>
    %102 = vector.shape_cast %101 : vector<1x1x1152xf32> to vector<1x1152xf32>
    %c1_37 = arith.constant 1 : index
    %c0_38 = arith.constant 0 : index
    %c0_39 = arith.constant 0 : index
    %103 = vector.load %arg4[%c1_37, %c0_38, %c0_39] : memref<2x384x93xbf16, #tpu.memory_space<vmem>>, vector<1x384x93xbf16>
    %104 = vector.shape_cast %103 : vector<1x384x93xbf16> to vector<384x93xbf16>
    %c1_40 = arith.constant 1 : index
    %c0_41 = arith.constant 0 : index
    %c0_42 = arith.constant 0 : index
    %105 = vector.load %arg5[%c1_40, %c0_41, %c0_42] : memref<2x1x93xf32, #tpu.memory_space<vmem>>, vector<1x1x93xf32>
    %106 = vector.shape_cast %105 : vector<1x1x93xf32> to vector<1x93xf32>
    %107 = arith.truncf %98 : vector<16x93xf32> to vector<16x93xbf16>
    %cst_43 = arith.constant dense<0.000000e+00> : vector<16x1152xf32>
    %108 = tpu.matmul %107, %100, %cst_43 {dimension_numbers = #tpu.dot_dimension_numbers<[1], [0], [0], [1], [0, 0, 1, 1], [], []>} : vector<16x93xbf16>, vector<93x1152xbf16>, vector<16x1152xf32> -> vector<16x1152xf32>
    %109 = vector.broadcast %102 : vector<1x1152xf32> to vector<16x1152xf32>
    %110 = arith.addf %108, %109 : vector<16x1152xf32>
    %111 = vector.extract_strided_slice %110 {offsets = [0, 0], sizes = [16, 128], strides = [1, 1]} : vector<16x1152xf32> to vector<16x128xf32>
    %112 = vector.shape_cast %111 : vector<16x128xf32> to vector<2x8x128xf32>
    %113 = arith.truncf %112 : vector<2x8x128xf32> to vector<2x8x128xbf16>
    %114 = vector.extract_strided_slice %110 {offsets = [0, 384], sizes = [16, 128], strides = [1, 1]} : vector<16x1152xf32> to vector<16x128xf32>
    %115 = vector.shape_cast %114 : vector<16x128xf32> to vector<2x8x128xf32>
    %116 = arith.truncf %115 : vector<2x8x128xf32> to vector<2x8x128xbf16>
    %117 = vector.extract_strided_slice %110 {offsets = [0, 768], sizes = [16, 128], strides = [1, 1]} : vector<16x1152xf32> to vector<16x128xf32>
    %118 = vector.shape_cast %117 : vector<16x128xf32> to vector<2x8x128xf32>
    %119 = arith.truncf %118 : vector<2x8x128xf32> to vector<2x8x128xbf16>
    "tpu.trace_start"() <{level = 10 : i32, message = "bqd,bkd->bqk"}> : () -> ()
    %cst_44 = arith.constant dense<0.000000e+00> : vector<2x8x8xf32>
    %120 = tpu.matmul %113, %116, %cst_44 {dimension_numbers = #tpu.dot_dimension_numbers<[2], [2], [1], [1], [0, 0, 0, 1, 1, 1], [0], [0]>} : vector<2x8x128xbf16>, vector<2x8x128xbf16>, vector<2x8x8xf32> -> vector<2x8x8xf32>
    "tpu.trace_stop"() : () -> ()
    %cst_45 = arith.constant 0.179605305 : f32
    %121 = vector.broadcast %cst_45 : f32 to vector<2x8x8xf32>
    %122 = arith.mulf %120, %121 : vector<2x8x8xf32>
    %cst_46 = arith.constant dense<0xFF800000> : vector<2x8xf32>
    %123 = vector.multi_reduction <maximumf>, %122, %cst_46 [2] : vector<2x8x8xf32> to vector<2x8xf32>
    %124 = vector.shape_cast %123 : vector<2x8xf32> to vector<2x8x1xf32>
    %125 = vector.broadcast %124 : vector<2x8x1xf32> to vector<2x8x8xf32>
    %126 = arith.subf %122, %125 : vector<2x8x8xf32>
    %127 = math.exp %126 : vector<2x8x8xf32>
    %cst_47 = arith.constant dense<0.000000e+00> : vector<2x8xf32>
    %128 = vector.multi_reduction <add>, %127, %cst_47 [2] : vector<2x8x8xf32> to vector<2x8xf32>
    %129 = vector.shape_cast %128 : vector<2x8xf32> to vector<2x8x1xf32>
    %130 = tpu.reciprocal %129 {approx = true} : vector<2x8x1xf32> -> vector<2x8x1xf32>
    %131 = vector.broadcast %130 : vector<2x8x1xf32> to vector<2x8x8xf32>
    %132 = arith.mulf %127, %131 : vector<2x8x8xf32>
    %133 = arith.truncf %132 : vector<2x8x8xf32> to vector<2x8x8xbf16>
    "tpu.trace_start"() <{level = 10 : i32, message = "bqk,bkd->bqd"}> : () -> ()
    %cst_48 = arith.constant dense<0.000000e+00> : vector<2x8x128xf32>
    %134 = tpu.matmul %133, %119, %cst_48 {dimension_numbers = #tpu.dot_dimension_numbers<[2], [1], [1], [2], [0, 0, 0, 1, 1, 2], [0], [0]>} : vector<2x8x8xbf16>, vector<2x8x128xbf16>, vector<2x8x128xf32> -> vector<2x8x128xf32>
    "tpu.trace_stop"() : () -> ()
    %135 = vector.extract_strided_slice %110 {offsets = [0, 128], sizes = [16, 128], strides = [1, 1]} : vector<16x1152xf32> to vector<16x128xf32>
    %136 = vector.shape_cast %135 : vector<16x128xf32> to vector<2x8x128xf32>
    %137 = arith.truncf %136 : vector<2x8x128xf32> to vector<2x8x128xbf16>
    %138 = vector.extract_strided_slice %110 {offsets = [0, 512], sizes = [16, 128], strides = [1, 1]} : vector<16x1152xf32> to vector<16x128xf32>
    %139 = vector.shape_cast %138 : vector<16x128xf32> to vector<2x8x128xf32>
    %140 = arith.truncf %139 : vector<2x8x128xf32> to vector<2x8x128xbf16>
    %141 = vector.extract_strided_slice %110 {offsets = [0, 896], sizes = [16, 128], strides = [1, 1]} : vector<16x1152xf32> to vector<16x128xf32>
    %142 = vector.shape_cast %141 : vector<16x128xf32> to vector<2x8x128xf32>
    %143 = arith.truncf %142 : vector<2x8x128xf32> to vector<2x8x128xbf16>
    "tpu.trace_start"() <{level = 10 : i32, message = "bqd,bkd->bqk"}> : () -> ()
    %cst_49 = arith.constant dense<0.000000e+00> : vector<2x8x8xf32>
    %144 = tpu.matmul %137, %140, %cst_49 {dimension_numbers = #tpu.dot_dimension_numbers<[2], [2], [1], [1], [0, 0, 0, 1, 1, 1], [0], [0]>} : vector<2x8x128xbf16>, vector<2x8x128xbf16>, vector<2x8x8xf32> -> vector<2x8x8xf32>
    "tpu.trace_stop"() : () -> ()
    %cst_50 = arith.constant 0.179605305 : f32
    %145 = vector.broadcast %cst_50 : f32 to vector<2x8x8xf32>
    %146 = arith.mulf %144, %145 : vector<2x8x8xf32>
    %cst_51 = arith.constant dense<0xFF800000> : vector<2x8xf32>
    %147 = vector.multi_reduction <maximumf>, %146, %cst_51 [2] : vector<2x8x8xf32> to vector<2x8xf32>
    %148 = vector.shape_cast %147 : vector<2x8xf32> to vector<2x8x1xf32>
    %149 = vector.broadcast %148 : vector<2x8x1xf32> to vector<2x8x8xf32>
    %150 = arith.subf %146, %149 : vector<2x8x8xf32>
    %151 = math.exp %150 : vector<2x8x8xf32>
    %cst_52 = arith.constant dense<0.000000e+00> : vector<2x8xf32>
    %152 = vector.multi_reduction <add>, %151, %cst_52 [2] : vector<2x8x8xf32> to vector<2x8xf32>
    %153 = vector.shape_cast %152 : vector<2x8xf32> to vector<2x8x1xf32>
    %154 = tpu.reciprocal %153 {approx = true} : vector<2x8x1xf32> -> vector<2x8x1xf32>
    %155 = vector.broadcast %154 : vector<2x8x1xf32> to vector<2x8x8xf32>
    %156 = arith.mulf %151, %155 : vector<2x8x8xf32>
    %157 = arith.truncf %156 : vector<2x8x8xf32> to vector<2x8x8xbf16>
    "tpu.trace_start"() <{level = 10 : i32, message = "bqk,bkd->bqd"}> : () -> ()
    %cst_53 = arith.constant dense<0.000000e+00> : vector<2x8x128xf32>
    %158 = tpu.matmul %157, %143, %cst_53 {dimension_numbers = #tpu.dot_dimension_numbers<[2], [1], [1], [2], [0, 0, 0, 1, 1, 2], [0], [0]>} : vector<2x8x8xbf16>, vector<2x8x128xbf16>, vector<2x8x128xf32> -> vector<2x8x128xf32>
    "tpu.trace_stop"() : () -> ()
    %159 = vector.extract_strided_slice %110 {offsets = [0, 256], sizes = [16, 128], strides = [1, 1]} : vector<16x1152xf32> to vector<16x128xf32>
    %160 = vector.shape_cast %159 : vector<16x128xf32> to vector<2x8x128xf32>
    %161 = arith.truncf %160 : vector<2x8x128xf32> to vector<2x8x128xbf16>
    %162 = vector.extract_strided_slice %110 {offsets = [0, 640], sizes = [16, 128], strides = [1, 1]} : vector<16x1152xf32> to vector<16x128xf32>
    %163 = vector.shape_cast %162 : vector<16x128xf32> to vector<2x8x128xf32>
    %164 = arith.truncf %163 : vector<2x8x128xf32> to vector<2x8x128xbf16>
    %165 = vector.extract_strided_slice %110 {offsets = [0, 1024], sizes = [16, 128], strides = [1, 1]} : vector<16x1152xf32> to vector<16x128xf32>
    %166 = vector.shape_cast %165 : vector<16x128xf32> to vector<2x8x128xf32>
    %167 = arith.truncf %166 : vector<2x8x128xf32> to vector<2x8x128xbf16>
    "tpu.trace_start"() <{level = 10 : i32, message = "bqd,bkd->bqk"}> : () -> ()
    %cst_54 = arith.constant dense<0.000000e+00> : vector<2x8x8xf32>
    %168 = tpu.matmul %161, %164, %cst_54 {dimension_numbers = #tpu.dot_dimension_numbers<[2], [2], [1], [1], [0, 0, 0, 1, 1, 1], [0], [0]>} : vector<2x8x128xbf16>, vector<2x8x128xbf16>, vector<2x8x8xf32> -> vector<2x8x8xf32>
    "tpu.trace_stop"() : () -> ()
    %cst_55 = arith.constant 0.179605305 : f32
    %169 = vector.broadcast %cst_55 : f32 to vector<2x8x8xf32>
    %170 = arith.mulf %168, %169 : vector<2x8x8xf32>
    %cst_56 = arith.constant dense<0xFF800000> : vector<2x8xf32>
    %171 = vector.multi_reduction <maximumf>, %170, %cst_56 [2] : vector<2x8x8xf32> to vector<2x8xf32>
    %172 = vector.shape_cast %171 : vector<2x8xf32> to vector<2x8x1xf32>
    %173 = vector.broadcast %172 : vector<2x8x1xf32> to vector<2x8x8xf32>
    %174 = arith.subf %170, %173 : vector<2x8x8xf32>
    %175 = math.exp %174 : vector<2x8x8xf32>
    %cst_57 = arith.constant dense<0.000000e+00> : vector<2x8xf32>
    %176 = vector.multi_reduction <add>, %175, %cst_57 [2] : vector<2x8x8xf32> to vector<2x8xf32>
    %177 = vector.shape_cast %176 : vector<2x8xf32> to vector<2x8x1xf32>
    %178 = tpu.reciprocal %177 {approx = true} : vector<2x8x1xf32> -> vector<2x8x1xf32>
    %179 = vector.broadcast %178 : vector<2x8x1xf32> to vector<2x8x8xf32>
    %180 = arith.mulf %175, %179 : vector<2x8x8xf32>
    %181 = arith.truncf %180 : vector<2x8x8xf32> to vector<2x8x8xbf16>
    "tpu.trace_start"() <{level = 10 : i32, message = "bqk,bkd->bqd"}> : () -> ()
    %cst_58 = arith.constant dense<0.000000e+00> : vector<2x8x128xf32>
    %182 = tpu.matmul %181, %167, %cst_58 {dimension_numbers = #tpu.dot_dimension_numbers<[2], [1], [1], [2], [0, 0, 0, 1, 1, 2], [0], [0]>} : vector<2x8x8xbf16>, vector<2x8x128xbf16>, vector<2x8x128xf32> -> vector<2x8x128xf32>
    "tpu.trace_stop"() : () -> ()
    %183 = tpu.concatenate %134, %158, %182 in 2 : vector<2x8x128xf32>, vector<2x8x128xf32>, vector<2x8x128xf32> -> vector<2x8x384xf32>
    %184 = vector.shape_cast %183 : vector<2x8x384xf32> to vector<16x384xf32>
    %185 = arith.truncf %184 : vector<16x384xf32> to vector<16x384xbf16>
    %cst_59 = arith.constant dense<0.000000e+00> : vector<16x93xf32>
    %186 = tpu.matmul %185, %104, %cst_59 {dimension_numbers = #tpu.dot_dimension_numbers<[1], [0], [0], [1], [0, 0, 1, 1], [], []>} : vector<16x384xbf16>, vector<384x93xbf16>, vector<16x93xf32> -> vector<16x93xf32>
    %187 = vector.broadcast %106 : vector<1x93xf32> to vector<16x93xf32>
    %188 = arith.addf %186, %187 : vector<16x93xf32>
    %cst_60 = arith.constant dense<0.000000e+00> : vector<16xf32>
    %189 = vector.multi_reduction <add>, %188, %cst_60 [1] : vector<16x93xf32> to vector<16xf32>
    %190 = vector.shape_cast %189 : vector<16xf32> to vector<16x1xf32>
    %cst_61 = arith.constant 9.300000e+01 : f32
    %191 = vector.broadcast %cst_61 : f32 to vector<16x1xf32>
    %192 = arith.divf %190, %191 : vector<16x1xf32>
    %193 = vector.broadcast %192 : vector<16x1xf32> to vector<16x93xf32>
    %194 = arith.mulf %188, %193 : vector<16x93xf32>
    %195 = arith.addf %98, %194 : vector<16x93xf32>
    %c0_62 = arith.constant 0 : index
    %c0_63 = arith.constant 0 : index
    %196 = vector.load %arg6[%c0_62, %c0_63] : memref<93x128xf32, #tpu.memory_space<vmem>>, vector<93x128xf32>
    %cst_64 = arith.constant dense<0.000000e+00> : vector<16x128xf32>
    %197 = tpu.matmul %195, %196, %cst_64 {dimension_numbers = #tpu.dot_dimension_numbers<[1], [0], [0], [1], [0, 0, 1, 1], [], []>} : vector<16x93xf32>, vector<93x128xf32>, vector<16x128xf32> -> vector<16x128xf32>
    %198 = vector.shape_cast %197 : vector<16x128xf32> to vector<2x8x128xf32>
    %c0_65 = arith.constant 0 : index
    %c0_66 = arith.constant 0 : index
    %c0_67 = arith.constant 0 : index
    %199 = vector.load %arg7[%c0_65, %c0_66, %c0_67] : memref<2x8x128xf32, #tpu.memory_space<vmem>>, vector<2x8x128xf32>
    tpu.vector_store %arg7[%c0_65, %c0_66, %c0_67], %198 {strides = array<i32>} : memref<2x8x128xf32, #tpu.memory_space<vmem>>, vector<2x8x128xf32>,
    return
  }
  func.func @transform_0(%arg0: i32) -> (i32, i32, i32) {
    %c0_i32 = arith.constant 0 : i32
    %c0_i32_0 = arith.constant 0 : i32
    %c0_i32_1 = arith.constant 0 : i32
    return %arg0, %c0_i32, %c0_i32_0 : i32, i32, i32
  }
  func.func @transform_1(%arg0: i32) -> (i32, i32, i32) {
    %c0_i32 = arith.constant 0 : i32
    %c0_i32_0 = arith.constant 0 : i32
    %c0_i32_1 = arith.constant 0 : i32
    %c0_i32_2 = arith.constant 0 : i32
    return %c0_i32, %c0_i32_0, %c0_i32_1 : i32, i32, i32
  }
  func.func @transform_2(%arg0: i32) -> (i32, i32, i32) {
    %c0_i32 = arith.constant 0 : i32
    %c0_i32_0 = arith.constant 0 : i32
    %c0_i32_1 = arith.constant 0 : i32
    %c0_i32_2 = arith.constant 0 : i32
    return %c0_i32, %c0_i32_0, %c0_i32_1 : i32, i32, i32
  }
  func.func @transform_3(%arg0: i32) -> (i32, i32, i32) {
    %c0_i32 = arith.constant 0 : i32
    %c0_i32_0 = arith.constant 0 : i32
    %c0_i32_1 = arith.constant 0 : i32
    %c0_i32_2 = arith.constant 0 : i32
    return %c0_i32, %c0_i32_0, %c0_i32_1 : i32, i32, i32
  }
  func.func @transform_4(%arg0: i32) -> (i32, i32, i32) {
    %c0_i32 = arith.constant 0 : i32
    %c0_i32_0 = arith.constant 0 : i32
    %c0_i32_1 = arith.constant 0 : i32
    %c0_i32_2 = arith.constant 0 : i32
    return %c0_i32, %c0_i32_0, %c0_i32_1 : i32, i32, i32
  }
  func.func @transform_5(%arg0: i32) -> (i32, i32) {
    %c0_i32 = arith.constant 0 : i32
    %c0_i32_0 = arith.constant 0 : i32
    %c0_i32_1 = arith.constant 0 : i32
    return %c0_i32, %c0_i32_0 : i32, i32
  }
  func.func @transform_6(%arg0: i32) -> (i32, i32, i32) {
    %c0_i32 = arith.constant 0 : i32
    %c0_i32_0 = arith.constant 0 : i32
    %c0_i32_1 = arith.constant 0 : i32
    return %arg0, %c0_i32, %c0_i32_0 : i32, i32, i32
  }
}

</mosaic_0001>

<llo_original>
// kernel: tpu_custom_call.1
$region0: #{tpu_custom_call.1}
  #allocation0 [shape = 'u32[]', space=smem, size = 0x4, offset = 0x4, fixed_abs, tag = 'smem constant byte address 0x4 - core index']
  #allocation1 [shape = 'u32[144,128]{1,0:T(1,128)}', space=vmem, size = 0x12000, scoped, tag = 'internal scratch']
  %s0 = inlined_call_operand.vmem [shape: f32[2,8,93], index: 0, kind: input, shape index: {}]
  %s1 = inlined_call_operand.vmem [shape: bf16[2,93,1152], index: 1, kind: input, shape index: {}]
  %s2 = inlined_call_operand.vmem [shape: f32[2,1,1152], index: 2, kind: input, shape index: {}]
  %s3 = inlined_call_operand.vmem [shape: bf16[2,384,93], index: 3, kind: input, shape index: {}]
  %s4 = inlined_call_operand.vmem [shape: f32[2,1,93], index: 4, kind: input, shape index: {}]
  %s5 = inlined_call_operand.vmem [shape: f32[93,128], index: 5, kind: input, shape index: {}]
  %s6 = inlined_call_operand.hbm [shape: f32[2,8,128], index: 6, kind: output, shape index: {}]
  %s7 = sld [smem:[#allocation0]]
  $region34: #{tpu_custom_call.1} parent=0
    _
  %s9 = ssub.s32 1, %s7
  %s10 = scalar_select 0, %s9, %s7
  $region1: #{tpu_custom_call.1} parent=0
    #allocation2 [shape = 'u8[8192]{0}', space=vmem, size = 0x2000, scoped, tag = 'output window, operand 0, single buffered']
    #allocation3 [shape = 's32[1]{0}', space=sflag, size = 0x4, scoped, tag = 'scoped memory for tpu_custom_call.1']
    %11 = vsyncpa [#allocation3], 0
    // Predicated region
    $region2: #{tpu_custom_call.1} parent=1 // pred_check
      _
    $region3: #{tpu_custom_call.1} parent=1 // pred_check_branch
      %13 = sbr.rel (0) target = $region5
    $region4: #{tpu_custom_call.1} parent=1 // pred_region
      _
    $region5: #{tpu_custom_call.1} parent=1 // pred_fallthru
      _
    // Predicated region
    $region6: #{tpu_custom_call.1} parent=1 // pred_check
      _
    $region7: #{tpu_custom_call.1} parent=1 // pred_check_branch
      %15 = sbr.rel (0) target = $region9
    $region8: #{tpu_custom_call.1} parent=1 // pred_region
      _
    $region9: #{tpu_custom_call.1} parent=1 // pred_fallthru
      _
    // Predicated region
    $region10: #{tpu_custom_call.1} parent=1 // pred_check
      _
    $region11: #{tpu_custom_call.1} parent=1 // pred_check_branch
      %17 = sbr.rel (0) target = $region13
    $region12: #{tpu_custom_call.1} parent=1 // pred_region
      _
    $region13: #{tpu_custom_call.1} parent=1 // pred_fallthru
      _
    // Predicated region
    $region14: #{tpu_custom_call.1} parent=1 // pred_check
      _
    $region15: #{tpu_custom_call.1} parent=1 // pred_check_branch
      %19 = sbr.rel (0) target = $region17
    $region16: #{tpu_custom_call.1} parent=1 // pred_region
      _
    $region17: #{tpu_custom_call.1} parent=1 // pred_fallthru
      _
    // Predicated region
    $region18: #{tpu_custom_call.1} parent=1 // pred_check
      _
    $region19: #{tpu_custom_call.1} parent=1 // pred_check_branch
      %21 = sbr.rel (0) target = $region21
    $region20: #{tpu_custom_call.1} parent=1 // pred_region
      _
    $region21: #{tpu_custom_call.1} parent=1 // pred_fallthru
      _
    // Predicated region
    $region22: #{tpu_custom_call.1} parent=1 // pred_check
      _
    $region23: #{tpu_custom_call.1} parent=1 // pred_check_branch
      %23 = sbr.rel (0) target = $region25
    $region24: #{tpu_custom_call.1} parent=1 // pred_region
      _
    $region25: #{tpu_custom_call.1} parent=1 // pred_fallthru
      _
    %v25 = vld [vmem:[%s0] sm:$0xff]
    %v26 = vld [vmem:[%s0 + $0x8] sm:$0xff]
    %v27 = vld [vmem:[%s1] sm:$0xff]
    %v28 = vld [vmem:[%s1 + $0x8] sm:$0xff]
    %v29 = vld [vmem:[%s1 + $0x10] sm:$0xff]
    %v30 = vld [vmem:[%s1 + $0x18] sm:$0xff]
    %v31 = vld [vmem:[%s1 + $0x20] sm:$0xf]
    %v32 = vld [vmem:[%s1 + $0x24] sm:$0xff]
    %v33 = vld [vmem:[%s1 + $0x2c] sm:$0xff]
    %v34 = vld [vmem:[%s1 + $0x34] sm:$0xff]
    %v35 = vld [vmem:[%s1 + $0x3c] sm:$0xff]
    %v36 = vld [vmem:[%s1 + $0x44] sm:$0xf]
    %v37 = vld [vmem:[%s1 + $0x48] sm:$0xff]
    %v38 = vld [vmem:[%s1 + $0x50] sm:$0xff]
    %v39 = vld [vmem:[%s1 + $0x58] sm:$0xff]
    %v40 = vld [vmem:[%s1 + $0x60] sm:$0xff]
    %v41 = vld [vmem:[%s1 + $0x68] sm:$0xf]
    %v42 = vld [vmem:[%s1 + $0x6c] sm:$0xff]
    %v43 = vld [vmem:[%s1 + $0x74] sm:$0xff]
    %v44 = vld [vmem:[%s1 + $0x7c] sm:$0xff]
    %v45 = vld [vmem:[%s1 + $0x84] sm:$0xff]
    %v46 = vld [vmem:[%s1 + $0x8c] sm:$0xf]
    %v47 = vld [vmem:[%s1 + $0x90] sm:$0xff]
    %v48 = vld [vmem:[%s1 + $0x98] sm:$0xff]
    %v49 = vld [vmem:[%s1 + $0xa0] sm:$0xff]
    %v50 = vld [vmem:[%s1 + $0xa8] sm:$0xff]
    %v51 = vld [vmem:[%s1 + $0xb0] sm:$0xf]
    %v52 = vld [vmem:[%s1 + $0xb4] sm:$0xff]
    %v53 = vld [vmem:[%s1 + $0xbc] sm:$0xff]
    %v54 = vld [vmem:[%s1 + $0xc4] sm:$0xff]
    %v55 = vld [vmem:[%s1 + $0xcc] sm:$0xff]
    %v56 = vld [vmem:[%s1 + $0xd4] sm:$0xf]
    %v57 = vld [vmem:[%s1 + $0xd8] sm:$0xff]
    %v58 = vld [vmem:[%s1 + $0xe0] sm:$0xff]
    %v59 = vld [vmem:[%s1 + $0xe8] sm:$0xff]
    %v60 = vld [vmem:[%s1 + $0xf0] sm:$0xff]
    %v61 = vld [vmem:[%s1 + $0xf8] sm:$0xf]
    %v62 = vld [vmem:[%s1 + $0xfc] sm:$0xff]
    %v63 = vld [vmem:[%s1 + $0x104] sm:$0xff]
    %v64 = vld [vmem:[%s1 + $0x10c] sm:$0xff]
    %v65 = vld [vmem:[%s1 + $0x114] sm:$0xff]
    %v66 = vld [vmem:[%s1 + $0x11c] sm:$0xf]
    %v67 = vld [vmem:[%s1 + $0x120] sm:$0xff]
    %v68 = vld [vmem:[%s1 + $0x128] sm:$0xff]
    %v69 = vld [vmem:[%s1 + $0x130] sm:$0xff]
    %v70 = vld [vmem:[%s1 + $0x138] sm:$0xff]
    %v71 = vld [vmem:[%s1 + $0x140] sm:$0xf]
    %v72 = vld [vmem:[%s1 + $0x144] sm:$0xff]
    %v73 = vld [vmem:[%s1 + $0x14c] sm:$0xff]
    %v74 = vld [vmem:[%s1 + $0x154] sm:$0xff]
    %v75 = vld [vmem:[%s1 + $0x15c] sm:$0xff]
    %v76 = vld [vmem:[%s1 + $0x164] sm:$0xf]
    %v77 = vld [vmem:[%s1 + $0x168] sm:$0xff]
    %v78 = vld [vmem:[%s1 + $0x170] sm:$0xff]
    %v79 = vld [vmem:[%s1 + $0x178] sm:$0xff]
    %v80 = vld [vmem:[%s1 + $0x180] sm:$0xff]
    %v81 = vld [vmem:[%s1 + $0x188] sm:$0xf]
    %v82 = vld [vmem:[%s1 + $0x18c] sm:$0x77]
    %v83 = vld [vmem:[%s1 + $0x194] sm:$0x77]
    %v84 = vld [vmem:[%s1 + $0x19c] sm:$0x77]
    %v85 = vld [vmem:[%s1 + $0x1a4] sm:$0x77]
    %v86 = vld [vmem:[%s1 + $0x1ac] sm:$0x7]
    %v87 = vld [vmem:[%s2] sm:$0xff]
    %v88 = vld [vmem:[%s2 + $0x8] sm:$0x1]
    %v89 = vld [vmem:[%s3] sm:$0xf]
    %v90 = vld [vmem:[%s3 + $0x4] sm:$0xf]
    %v91 = vld [vmem:[%s3 + $0x8] sm:$0xf]
    %v92 = vld [vmem:[%s3 + $0xc] sm:$0xf]
    %v93 = vld [vmem:[%s3 + $0x10] sm:$0xf]
    %v94 = vld [vmem:[%s3 + $0x14] sm:$0xf]
    %v95 = vld [vmem:[%s3 + $0x18] sm:$0xf]
    %v96 = vld [vmem:[%s3 + $0x1c] sm:$0xf]
    %v97 = vld [vmem:[%s3 + $0x20] sm:$0xf]
    %v98 = vld [vmem:[%s3 + $0x24] sm:$0xf]
    %v99 = vld [vmem:[%s3 + $0x28] sm:$0xf]
    %v100 = vld [vmem:[%s3 + $0x2c] sm:$0xf]
    %v101 = vld [vmem:[%s3 + $0x30] sm:$0xf]
    %v102 = vld [vmem:[%s3 + $0x34] sm:$0xf]
    %v103 = vld [vmem:[%s3 + $0x38] sm:$0xf]
    %v104 = vld [vmem:[%s3 + $0x3c] sm:$0xf]
    %v105 = vld [vmem:[%s3 + $0x40] sm:$0xf]
    %v106 = vld [vmem:[%s3 + $0x44] sm:$0xf]
    %v107 = vld [vmem:[%s3 + $0x48] sm:$0xf]
    %v108 = vld [vmem:[%s3 + $0x4c] sm:$0xf]
    %v109 = vld [vmem:[%s3 + $0x50] sm:$0xf]
    %v110 = vld [vmem:[%s3 + $0x54] sm:$0xf]
    %v111 = vld [vmem:[%s3 + $0x58] sm:$0xf]
    %v112 = vld [vmem:[%s3 + $0x5c] sm:$0xf]
    %v113 = vld [vmem:[%s3 + $0x60] sm:$0xf]
    %v114 = vld [vmem:[%s3 + $0x64] sm:$0xf]
    %v115 = vld [vmem:[%s3 + $0x68] sm:$0xf]
    %v116 = vld [vmem:[%s3 + $0x6c] sm:$0xf]
    %v117 = vld [vmem:[%s3 + $0x70] sm:$0xf]
    %v118 = vld [vmem:[%s3 + $0x74] sm:$0xf]
    %v119 = vld [vmem:[%s3 + $0x78] sm:$0xf]
    %v120 = vld [vmem:[%s3 + $0x7c] sm:$0xf]
    %v121 = vld [vmem:[%s3 + $0x80] sm:$0xf]
    %v122 = vld [vmem:[%s3 + $0x84] sm:$0xf]
    %v123 = vld [vmem:[%s3 + $0x88] sm:$0xf]
    %v124 = vld [vmem:[%s3 + $0x8c] sm:$0xf]
    %v125 = vld [vmem:[%s3 + $0x90] sm:$0xf]
    %v126 = vld [vmem:[%s3 + $0x94] sm:$0xf]
    %v127 = vld [vmem:[%s3 + $0x98] sm:$0xf]
    %v128 = vld [vmem:[%s3 + $0x9c] sm:$0xf]
    %v129 = vld [vmem:[%s3 + $0xa0] sm:$0xf]
    %v130 = vld [vmem:[%s3 + $0xa4] sm:$0xf]
    %v131 = vld [vmem:[%s3 + $0xa8] sm:$0xf]
    %v132 = vld [vmem:[%s3 + $0xac] sm:$0xf]
    %v133 = vld [vmem:[%s3 + $0xb0] sm:$0xf]
    %v134 = vld [vmem:[%s3 + $0xb4] sm:$0xf]
    %v135 = vld [vmem:[%s3 + $0xb8] sm:$0xf]
    %v136 = vld [vmem:[%s3 + $0xbc] sm:$0xf]
    %v137 = vld [vmem:[%s4] sm:$0x1]
    %v138 = vpack.c.bf16 %v26, %v25
    %v141 = vlaneseq
    %v142 = vshrl.u32 %v141, 7
    %v143 = vsub.s32 0, %v142
    %v144 = vrot.slane %v87, %v143
    %v145 = vlaneseq
    %v146 = vshrl.u32 %v145, 7
    %v147 = vsub.s32 1, %v146
    %v148 = vrot.slane %v87, %v147
    %v149 = vlaneseq
    %v150 = vshrl.u32 %v149, 7
    %v151 = vsub.s32 2, %v150
    %v152 = vrot.slane %v87, %v151
    %v153 = vlaneseq
    %v154 = vshrl.u32 %v153, 7
    %v155 = vsub.s32 3, %v154
    %v156 = vrot.slane %v87, %v155
    %v157 = vlaneseq
    %v158 = vshrl.u32 %v157, 7
    %v159 = vsub.s32 4, %v158
    %v160 = vrot.slane %v87, %v159
    %v161 = vlaneseq
    %v162 = vshrl.u32 %v161, 7
    %v163 = vsub.s32 5, %v162
    %v164 = vrot.slane %v87, %v163
    %v165 = vlaneseq
    %v166 = vshrl.u32 %v165, 7
    %v167 = vsub.s32 6, %v166
    %v168 = vrot.slane %v87, %v167
    %v169 = vlaneseq
    %v170 = vshrl.u32 %v169, 7
    %v171 = vsub.s32 7, %v170
    %v172 = vrot.slane %v87, %v171
    %v173 = vlaneseq
    %v174 = vshrl.u32 %v173, 7
    %v175 = vsub.s32 0, %v174
    %v176 = vrot.slane %v88, %v175
    %v246 = vunpack.c.l.b16 %v27
    %v247 = vunpack.c.h.b16 %v27
    %v248 = vunpack.c.l.b16 %v28
    %v249 = vunpack.c.h.b16 %v28
    %v250 = vunpack.c.l.b16 %v29
    %v251 = vunpack.c.h.b16 %v29
    %v252 = vunpack.c.l.b16 %v30
    %v253 = vunpack.c.h.b16 %v30
    %v254 = vunpack.c.l.b16 %v31
    %v255 = vunpack.c.l.b16 %v32
    %v256 = vunpack.c.h.b16 %v32
    %v257 = vunpack.c.l.b16 %v33
    %v258 = vunpack.c.h.b16 %v33
    %v259 = vunpack.c.l.b16 %v34
    %v260 = vunpack.c.h.b16 %v34
    %v261 = vunpack.c.l.b16 %v35
    %v262 = vunpack.c.h.b16 %v35
    %v263 = vunpack.c.l.b16 %v36
    %v264 = vunpack.c.l.b16 %v37
    %v265 = vunpack.c.h.b16 %v37
    %v266 = vunpack.c.l.b16 %v38
    %v267 = vunpack.c.h.b16 %v38
    %v268 = vunpack.c.l.b16 %v39
    %v269 = vunpack.c.h.b16 %v39
    %v270 = vunpack.c.l.b16 %v40
    %v271 = vunpack.c.h.b16 %v40
    %v272 = vunpack.c.l.b16 %v41
    %v273 = vunpack.c.l.b16 %v42
    %v274 = vunpack.c.h.b16 %v42
    %v275 = vunpack.c.l.b16 %v43
    %v276 = vunpack.c.h.b16 %v43
    %v277 = vunpack.c.l.b16 %v44
    %v278 = vunpack.c.h.b16 %v44
    %v279 = vunpack.c.l.b16 %v45
    %v280 = vunpack.c.h.b16 %v45
    %v281 = vunpack.c.l.b16 %v46
    %v282 = vunpack.c.l.b16 %v47
    %v283 = vunpack.c.h.b16 %v47
    %v284 = vunpack.c.l.b16 %v48
    %v285 = vunpack.c.h.b16 %v48
    %v286 = vunpack.c.l.b16 %v49
    %v287 = vunpack.c.h.b16 %v49
    %v288 = vunpack.c.l.b16 %v50
    %v289 = vunpack.c.h.b16 %v50
    %v290 = vunpack.c.l.b16 %v51
    %v291 = vunpack.c.l.b16 %v52
    %v292 = vunpack.c.h.b16 %v52
    %v293 = vunpack.c.l.b16 %v53
    %v294 = vunpack.c.h.b16 %v53
    %v295 = vunpack.c.l.b16 %v54
    %v296 = vunpack.c.h.b16 %v54
    %v297 = vunpack.c.l.b16 %v55
    %v298 = vunpack.c.h.b16 %v55
    %v299 = vunpack.c.l.b16 %v56
    %v300 = vunpack.c.l.b16 %v57
    %v301 = vunpack.c.h.b16 %v57
    %v302 = vunpack.c.l.b16 %v58
    %v303 = vunpack.c.h.b16 %v58
    %v304 = vunpack.c.l.b16 %v59
    %v305 = vunpack.c.h.b16 %v59
    %v306 = vunpack.c.l.b16 %v60
    %v307 = vunpack.c.h.b16 %v60
    %v308 = vunpack.c.l.b16 %v61
    %v309 = vunpack.c.l.b16 %v62
    %v310 = vunpack.c.h.b16 %v62
    %v311 = vunpack.c.l.b16 %v63
    %v312 = vunpack.c.h.b16 %v63
    %v313 = vunpack.c.l.b16 %v64
    %v314 = vunpack.c.h.b16 %v64
    %v315 = vunpack.c.l.b16 %v65
    %v316 = vunpack.c.h.b16 %v65
    %v317 = vunpack.c.l.b16 %v66
    %v318 = vunpack.c.l.b16 %v67
    %v319 = vunpack.c.h.b16 %v67
    %v320 = vunpack.c.l.b16 %v68
    %v321 = vunpack.c.h.b16 %v68
    %v322 = vunpack.c.l.b16 %v69
    %v323 = vunpack.c.h.b16 %v69
    %v324 = vunpack.c.l.b16 %v70
    %v325 = vunpack.c.h.b16 %v70
    %v326 = vunpack.c.l.b16 %v71
    %v327 = vunpack.c.l.b16 %v72
    %v328 = vunpack.c.h.b16 %v72
    %v329 = vunpack.c.l.b16 %v73
    %v330 = vunpack.c.h.b16 %v73
    %v331 = vunpack.c.l.b16 %v74
    %v332 = vunpack.c.h.b16 %v74
    %v333 = vunpack.c.l.b16 %v75
    %v334 = vunpack.c.h.b16 %v75
    %v335 = vunpack.c.l.b16 %v76
    %v336 = vunpack.c.l.b16 %v77
    %v337 = vunpack.c.h.b16 %v77
    %v338 = vunpack.c.l.b16 %v78
    %v339 = vunpack.c.h.b16 %v78
    %v340 = vunpack.c.l.b16 %v79
    %v341 = vunpack.c.h.b16 %v79
    %v342 = vunpack.c.l.b16 %v80
    %v343 = vunpack.c.h.b16 %v80
    %v344 = vunpack.c.l.b16 %v81
    %v345 = vunpack.c.l.b16 %v82
    %v346 = vunpack.c.h.b16 %v82
    %v347 = vunpack.c.l.b16 %v83
    %v348 = vunpack.c.h.b16 %v83
    %v349 = vunpack.c.l.b16 %v84
    %v350 = vunpack.c.h.b16 %v84
    %v351 = vunpack.c.l.b16 %v85
    %v352 = vunpack.c.h.b16 %v85
    %v353 = vunpack.c.l.b16 %v86
    %v354 = vpack.c.b16 %v255, %v246
    %v355 = vpack.c.b16 %v256, %v247
    %v356 = vpack.c.b16 %v257, %v248
    %v357 = vpack.c.b16 %v258, %v249
    %v358 = vpack.c.b16 %v259, %v250
    %v359 = vpack.c.b16 %v260, %v251
    %v360 = vpack.c.b16 %v261, %v252
    %v361 = vpack.c.b16 %v262, %v253
    %v362 = vpack.c.b16 %v263, %v254
    %v363 = vpack.c.b16 %v273, %v264
    %v364 = vpack.c.b16 %v274, %v265
    %v365 = vpack.c.b16 %v275, %v266
    %v366 = vpack.c.b16 %v276, %v267
    %v367 = vpack.c.b16 %v277, %v268
    %v368 = vpack.c.b16 %v278, %v269
    %v369 = vpack.c.b16 %v279, %v270
    %v370 = vpack.c.b16 %v280, %v271
    %v371 = vpack.c.b16 %v281, %v272
    %v372 = vpack.c.b16 %v291, %v282
    %v373 = vpack.c.b16 %v292, %v283
    %v374 = vpack.c.b16 %v293, %v284
    %v375 = vpack.c.b16 %v294, %v285
    %v376 = vpack.c.b16 %v295, %v286
    %v377 = vpack.c.b16 %v296, %v287
    %v378 = vpack.c.b16 %v297, %v288
    %v379 = vpack.c.b16 %v298, %v289
    %v380 = vpack.c.b16 %v299, %v290
    %v381 = vpack.c.b16 %v309, %v300
    %v382 = vpack.c.b16 %v310, %v301
    %v383 = vpack.c.b16 %v311, %v302
    %v384 = vpack.c.b16 %v312, %v303
    %v385 = vpack.c.b16 %v313, %v304
    %v386 = vpack.c.b16 %v314, %v305
    %v387 = vpack.c.b16 %v315, %v306
    %v388 = vpack.c.b16 %v316, %v307
    %v389 = vpack.c.b16 %v317, %v308
    %v390 = vpack.c.b16 %v327, %v318
    %v391 = vpack.c.b16 %v328, %v319
    %v392 = vpack.c.b16 %v329, %v320
    %v393 = vpack.c.b16 %v330, %v321
    %v394 = vpack.c.b16 %v331, %v322
    %v395 = vpack.c.b16 %v332, %v323
    %v396 = vpack.c.b16 %v333, %v324
    %v397 = vpack.c.b16 %v334, %v325
    %v398 = vpack.c.b16 %v335, %v326
    %v399 = vpack.c.b16 %v345, %v336
    %v400 = vpack.c.b16 %v346, %v337
    %v401 = vpack.c.b16 %v347, %v338
    %v402 = vpack.c.b16 %v348, %v339
    %v403 = vpack.c.b16 %v349, %v340
    %v404 = vpack.c.b16 %v350, %v341
    %v405 = vpack.c.b16 %v351, %v342
    %v406 = vpack.c.b16 %v352, %v343
    %v407 = vpack.c.b16 %v353, %v344
    %vm453 = vcmask 760832
    %v455 = vsel %vm453, %v138, 0
    %vm457 = vcmask 1045504
    %vm458 = vcmask 1046528
    %v459 = vsel %vm457, 4294967295, 65535
    %v460 = vsel %vm458, %v459, 0
    %v462 = vand.u32 %v399, %v460
    %v465 = vand.u32 %v400, %v460
    %v468 = vand.u32 %v401, %v460
    %v471 = vand.u32 %v402, %v460
    %v474 = vand.u32 %v403, %v460
    %v477 = vand.u32 %v404, %v460
    %v480 = vand.u32 %v405, %v460
    %v483 = vand.u32 %v406, %v460
    %v486 = vand.u32 %v407, %v460
    %488 = vmatprep.subr.bf16.mxu0 %v355
    %489 = vmatpush1.bf16.msra.mxu0 %v354
    %490 = vmatprep.subr.bf16.mxu0 %v364
    %491 = vmatpush1.bf16.msra.mxu0 %v363
    %492 = vmatprep.subr.bf16.mxu0 %v373
    %493 = vmatpush1.bf16.msra.mxu0 %v372
    %494 = vmatprep.subr.bf16.mxu0 %v382
    %495 = vmatpush1.bf16.msra.mxu0 %v381
    %496 = vmatprep.subr.bf16.mxu0 %v391
    %497 = vmatpush1.bf16.msra.mxu0 %v390
    %498 = vmatprep.subr.bf16.mxu0 %v465
    %499 = vmatpush1.bf16.msra.mxu0 %v462
    %500 = vmatprep.subr.bf16.mxu0 0
    %501 = vmatpush1.bf16.msra.mxu0 0
    %502 = vmatprep.subr.bf16.mxu0 0
    %503 = vmatpush1.bf16.msra.mxu0 0
    %504 = vmatprep.subr.bf16.mxu0 0
    %505 = vmatpush1.bf16.msra.mxu0 0
    %506 = vmatprep.subr.bf16.mxu0 0
    %507 = vmatpush1.bf16.msra.mxu0 0
    %508 = vmatprep.subr.bf16.mxu0 0
    %509 = vmatpush1.bf16.msra.mxu0 0
    %510 = vmatprep.subr.bf16.mxu0 0
    %511 = vmatpush1.bf16.msra.mxu0 0
    %512 = vmatprep.subr.bf16.mxu0 0
    %513 = vmatpush1.bf16.msra.mxu0 0
    %514 = vmatprep.subr.bf16.mxu0 0
    %515 = vmatpush1.bf16.msra.mxu0 0
    %516 = vmatprep.subr.bf16.mxu0 0
    %517 = vmatpush1.bf16.msra.mxu0 0
    %518 = vmatprep.subr.bf16.mxu0 0
    %519 = vmatpush1.bf16.msra.mxu0 0
    %520 = vmatprep.mubr.bf16.mxu0 0
    %521 = vmatmul.mubr.bf16.gmra.mrb[0].mxu0 %v455
    %v522 = vpop.f32.mrb[0].mxu0
    %v523 = vadd.f32 %v144, %v522
    %v524 = vpop.f32.mrb[0].mxu0
    %v525 = vadd.f32 %v148, %v524
    %v526 = vpop.f32.mrb[0].mxu0
    %v527 = vadd.f32 %v144, %v526
    %v528 = vpop.f32.mrb[0].mxu0
    %v529 = vadd.f32 %v148, %v528
    %530 = vdwg.mxu0
    %531 = vmatprep.subr.bf16.mxu0 %v357
    %532 = vmatpush1.bf16.msra.mxu0 %v356
    %533 = vmatprep.subr.bf16.mxu0 %v366
    %534 = vmatpush1.bf16.msra.mxu0 %v365
    %535 = vmatprep.subr.bf16.mxu0 %v375
    %536 = vmatpush1.bf16.msra.mxu0 %v374
    %537 = vmatprep.subr.bf16.mxu0 %v384
    %538 = vmatpush1.bf16.msra.mxu0 %v383
    %539 = vmatprep.subr.bf16.mxu0 %v393
    %540 = vmatpush1.bf16.msra.mxu0 %v392
    %541 = vmatprep.subr.bf16.mxu0 %v471
    %542 = vmatpush1.bf16.msra.mxu0 %v468
    %543 = vmatprep.subr.bf16.mxu0 0
    %544 = vmatpush1.bf16.msra.mxu0 0
    %545 = vmatprep.subr.bf16.mxu0 0
    %546 = vmatpush1.bf16.msra.mxu0 0
    %547 = vmatprep.subr.bf16.mxu0 0
    %548 = vmatpush1.bf16.msra.mxu0 0
    %549 = vmatprep.subr.bf16.mxu0 0
    %550 = vmatpush1.bf16.msra.mxu0 0
    %551 = vmatprep.subr.bf16.mxu0 0
    %552 = vmatpush1.bf16.msra.mxu0 0
    %553 = vmatprep.subr.bf16.mxu0 0
    %554 = vmatpush1.bf16.msra.mxu0 0
    %555 = vmatprep.subr.bf16.mxu0 0
    %556 = vmatpush1.bf16.msra.mxu0 0
    %557 = vmatprep.subr.bf16.mxu0 0
    %558 = vmatpush1.bf16.msra.mxu0 0
    %559 = vmatprep.subr.bf16.mxu0 0
    %560 = vmatpush1.bf16.msra.mxu0 0
    %561 = vmatprep.subr.bf16.mxu0 0
    %562 = vmatpush1.bf16.msra.mxu0 0
    %563 = vmatprep.mubr.bf16.mxu0 0
    %564 = vmatmul.mubr.bf16.gmra.mrb[0].mxu0 %v455
    %v565 = vpop.f32.mrb[0].mxu0
    %v566 = vadd.f32 %v152, %v565
    %v567 = vpop.f32.mrb[0].mxu0
    %v568 = vadd.f32 %v156, %v567
    %v569 = vpop.f32.mrb[0].mxu0
    %v570 = vadd.f32 %v152, %v569
    %v571 = vpop.f32.mrb[0].mxu0
    %v572 = vadd.f32 %v156, %v571
    %573 = vdwg.mxu0
    %574 = vmatprep.subr.bf16.mxu0 %v359
    %575 = vmatpush1.bf16.msra.mxu0 %v358
    %576 = vmatprep.subr.bf16.mxu0 %v368
    %577 = vmatpush1.bf16.msra.mxu0 %v367
    %578 = vmatprep.subr.bf16.mxu0 %v377
    %579 = vmatpush1.bf16.msra.mxu0 %v376
    %580 = vmatprep.subr.bf16.mxu0 %v386
    %581 = vmatpush1.bf16.msra.mxu0 %v385
    %582 = vmatprep.subr.bf16.mxu0 %v395
    %583 = vmatpush1.bf16.msra.mxu0 %v394
    %584 = vmatprep.subr.bf16.mxu0 %v477
    %585 = vmatpush1.bf16.msra.mxu0 %v474
    %586 = vmatprep.subr.bf16.mxu0 0
    %587 = vmatpush1.bf16.msra.mxu0 0
    %588 = vmatprep.subr.bf16.mxu0 0
    %589 = vmatpush1.bf16.msra.mxu0 0
    %590 = vmatprep.subr.bf16.mxu0 0
    %591 = vmatpush1.bf16.msra.mxu0 0
    %592 = vmatprep.subr.bf16.mxu0 0
    %593 = vmatpush1.bf16.msra.mxu0 0
    %594 = vmatprep.subr.bf16.mxu0 0
    %595 = vmatpush1.bf16.msra.mxu0 0
    %596 = vmatprep.subr.bf16.mxu0 0
    %597 = vmatpush1.bf16.msra.mxu0 0
    %598 = vmatprep.subr.bf16.mxu0 0
    %599 = vmatpush1.bf16.msra.mxu0 0
    %600 = vmatprep.subr.bf16.mxu0 0
    %601 = vmatpush1.bf16.msra.mxu0 0
    %602 = vmatprep.subr.bf16.mxu0 0
    %603 = vmatpush1.bf16.msra.mxu0 0
    %604 = vmatprep.subr.bf16.mxu0 0
    %605 = vmatpush1.bf16.msra.mxu0 0
    %606 = vmatprep.mubr.bf16.mxu0 0
    %607 = vmatmul.mubr.bf16.gmra.mrb[0].mxu0 %v455
    %v608 = vpop.f32.mrb[0].mxu0
    %v609 = vadd.f32 %v160, %v608
    %v610 = vpop.f32.mrb[0].mxu0
    %v611 = vadd.f32 %v164, %v610
    %v612 = vpop.f32.mrb[0].mxu0
    %v613 = vadd.f32 %v160, %v612
    %v614 = vpop.f32.mrb[0].mxu0
    %v615 = vadd.f32 %v164, %v614
    %616 = vdwg.mxu0
    %617 = vmatprep.subr.bf16.mxu0 %v361
    %618 = vmatpush1.bf16.msra.mxu0 %v360
    %619 = vmatprep.subr.bf16.mxu0 %v370
    %620 = vmatpush1.bf16.msra.mxu0 %v369
    %621 = vmatprep.subr.bf16.mxu0 %v379
    %622 = vmatpush1.bf16.msra.mxu0 %v378
    %623 = vmatprep.subr.bf16.mxu0 %v388
    %624 = vmatpush1.bf16.msra.mxu0 %v387
    %625 = vmatprep.subr.bf16.mxu0 %v397
    %626 = vmatpush1.bf16.msra.mxu0 %v396
    %627 = vmatprep.subr.bf16.mxu0 %v483
    %628 = vmatpush1.bf16.msra.mxu0 %v480
    %629 = vmatprep.subr.bf16.mxu0 0
    %630 = vmatpush1.bf16.msra.mxu0 0
    %631 = vmatprep.subr.bf16.mxu0 0
    %632 = vmatpush1.bf16.msra.mxu0 0
    %633 = vmatprep.subr.bf16.mxu0 0
    %634 = vmatpush1.bf16.msra.mxu0 0
    %635 = vmatprep.subr.bf16.mxu0 0
    %636 = vmatpush1.bf16.msra.mxu0 0
    %637 = vmatprep.subr.bf16.mxu0 0
    %638 = vmatpush1.bf16.msra.mxu0 0
    %639 = vmatprep.subr.bf16.mxu0 0
    %640 = vmatpush1.bf16.msra.mxu0 0
    %641 = vmatprep.subr.bf16.mxu0 0
    %642 = vmatpush1.bf16.msra.mxu0 0
    %643 = vmatprep.subr.bf16.mxu0 0
    %644 = vmatpush1.bf16.msra.mxu0 0
    %645 = vmatprep.subr.bf16.mxu0 0
    %646 = vmatpush1.bf16.msra.mxu0 0
    %647 = vmatprep.subr.bf16.mxu0 0
    %648 = vmatpush1.bf16.msra.mxu0 0
    %649 = vmatprep.mubr.bf16.mxu0 0
    %650 = vmatmul.mubr.bf16.gmra.mrb[0].mxu0 %v455
    %v651 = vpop.f32.mrb[0].mxu0
    %v652 = vadd.f32 %v168, %v651
    %v653 = vpop.f32.mrb[0].mxu0
    %v654 = vadd.f32 %v172, %v653
    %v655 = vpop.f32.mrb[0].mxu0
    %v656 = vadd.f32 %v168, %v655
    %v657 = vpop.f32.mrb[0].mxu0
    %v658 = vadd.f32 %v172, %v657
    %659 = vdwg.mxu0
    %660 = vmatprep.subr.bf16.mxu0 0
    %661 = vmatpush1.bf16.msra.mxu0 %v362
    %662 = vmatprep.subr.bf16.mxu0 0
    %663 = vmatpush1.bf16.msra.mxu0 %v371
    %664 = vmatprep.subr.bf16.mxu0 0
    %665 = vmatpush1.bf16.msra.mxu0 %v380
    %666 = vmatprep.subr.bf16.mxu0 0
    %667 = vmatpush1.bf16.msra.mxu0 %v389
    %668 = vmatprep.subr.bf16.mxu0 0
    %669 = vmatpush1.bf16.msra.mxu0 %v398
    %670 = vmatprep.subr.bf16.mxu0 0
    %671 = vmatpush1.bf16.msra.mxu0 %v486
    %672 = vmatprep.subr.bf16.mxu0 0
    %673 = vmatpush1.bf16.msra.mxu0 0
    %674 = vmatprep.subr.bf16.mxu0 0
    %675 = vmatpush1.bf16.msra.mxu0 0
    %676 = vmatprep.subr.bf16.mxu0 0
    %677 = vmatpush1.bf16.msra.mxu0 0
    %678 = vmatprep.subr.bf16.mxu0 0
    %679 = vmatpush1.bf16.msra.mxu0 0
    %680 = vmatprep.subr.bf16.mxu0 0
    %681 = vmatpush1.bf16.msra.mxu0 0
    %682 = vmatprep.subr.bf16.mxu0 0
    %683 = vmatpush1.bf16.msra.mxu0 0
    %684 = vmatprep.subr.bf16.mxu0 0
    %685 = vmatpush1.bf16.msra.mxu0 0
    %686 = vmatprep.subr.bf16.mxu0 0
    %687 = vmatpush1.bf16.msra.mxu0 0
    %688 = vmatprep.subr.bf16.mxu0 0
    %689 = vmatpush1.bf16.msra.mxu0 0
    %690 = vmatprep.subr.bf16.mxu0 0
    %691 = vmatpush1.bf16.msra.mxu0 0
    %692 = vmatprep.mubr.bf16.mxu0 0
    %693 = vmatmul.mubr.bf16.gmra.mrb[0].mxu0 %v455
    %v694 = vpop.f32.mrb[0].mxu0
    %v695 = vadd.f32 %v176, %v694
    %v696 = vpop.f32.mrb[0].mxu0
    %v697 = vpop.f32.mrb[0].mxu0
    %v698 = vadd.f32 %v176, %v697
    %v699 = vpop.f32.mrb[0].mxu0
    %700 = vdwg.mxu0
    %v701 = vpack.c.bf16 %v523, %v523
    %v702 = vpack.c.bf16 %v527, %v527
    %v703 = vpack.c.bf16 %v568, %v568
    %v704 = vpack.c.bf16 %v572, %v572
    %v705 = vpack.c.bf16 %v652, %v652
    %v706 = vpack.c.bf16 %v656, %v656
    %707 = vmatprep.subr.bf16.mxu0 0
    %708 = vmatpush1.bf16.xpose.msra.mxu0 %v703
    %709 = vmatprep.subr.bf16.mxu0 0
    %710 = vmatpush1.bf16.xpose.msra.mxu0 0
    %711 = vmatprep.subr.bf16.mxu0 0
    %712 = vmatpush1.bf16.xpose.msra.mxu0 0
    %713 = vmatprep.subr.bf16.mxu0 0
    %714 = vmatpush1.bf16.xpose.msra.mxu0 0
    %715 = vmatprep.subr.bf16.mxu0 0
    %716 = vmatpush1.bf16.xpose.msra.mxu0 0
    %717 = vmatprep.subr.bf16.mxu0 0
    %718 = vmatpush1.bf16.xpose.msra.mxu0 0
    %719 = vmatprep.subr.bf16.mxu0 0
    %720 = vmatpush1.bf16.xpose.msra.mxu0 0
    %721 = vmatprep.subr.bf16.mxu0 0
    %722 = vmatpush1.bf16.xpose.msra.mxu0 0
    %723 = vmatprep.subr.bf16.mxu0 0
    %724 = vmatpush1.bf16.xpose.msra.mxu0 0
    %725 = vmatprep.subr.bf16.mxu0 0
    %726 = vmatpush1.bf16.xpose.msra.mxu0 0
    %727 = vmatprep.subr.bf16.mxu0 0
    %728 = vmatpush1.bf16.xpose.msra.mxu0 0
    %729 = vmatprep.subr.bf16.mxu0 0
    %730 = vmatpush1.bf16.xpose.msra.mxu0 0
    %731 = vmatprep.subr.bf16.mxu0 0
    %732 = vmatpush1.bf16.xpose.msra.mxu0 0
    %733 = vmatprep.subr.bf16.mxu0 0
    %734 = vmatpush1.bf16.xpose.msra.mxu0 0
    %735 = vmatprep.subr.bf16.mxu0 0
    %736 = vmatpush1.bf16.xpose.msra.mxu0 0
    %737 = vmatprep.subr.bf16.mxu0 0
    %738 = vmatpush1.bf16.xpose.msra.mxu0 0
    %739 = vmatprep.mubr.bf16.mxu0 0
    %740 = vmatmul.mubr.bf16.gmra.mrb[0].mxu0 %v701
    %v741 = vpop.f32.mrb[0].mxu0
    %v742 = vadd.f32 0.0, %v741
    %v743 = vpop.f32.mrb[0].mxu0
    %v744 = vpop.f32.mrb[0].mxu0
    %v745 = vpop.f32.mrb[0].mxu0
    %746 = vdwg.mxu0
    %747 = vmatprep.subr.bf16.mxu0 0
    %748 = vmatpush1.bf16.xpose.msra.mxu0 %v704
    %749 = vmatprep.subr.bf16.mxu0 0
    %750 = vmatpush1.bf16.xpose.msra.mxu0 0
    %751 = vmatprep.subr.bf16.mxu0 0
    %752 = vmatpush1.bf16.xpose.msra.mxu0 0
    %753 = vmatprep.subr.bf16.mxu0 0
    %754 = vmatpush1.bf16.xpose.msra.mxu0 0
    %755 = vmatprep.subr.bf16.mxu0 0
    %756 = vmatpush1.bf16.xpose.msra.mxu0 0
    %757 = vmatprep.subr.bf16.mxu0 0
    %758 = vmatpush1.bf16.xpose.msra.mxu0 0
    %759 = vmatprep.subr.bf16.mxu0 0
    %760 = vmatpush1.bf16.xpose.msra.mxu0 0
    %761 = vmatprep.subr.bf16.mxu0 0
    %762 = vmatpush1.bf16.xpose.msra.mxu0 0
    %763 = vmatprep.subr.bf16.mxu0 0
    %764 = vmatpush1.bf16.xpose.msra.mxu0 0
    %765 = vmatprep.subr.bf16.mxu0 0
    %766 = vmatpush1.bf16.xpose.msra.mxu0 0
    %767 = vmatprep.subr.bf16.mxu0 0
    %768 = vmatpush1.bf16.xpose.msra.mxu0 0
    %769 = vmatprep.subr.bf16.mxu0 0
    %770 = vmatpush1.bf16.xpose.msra.mxu0 0
    %771 = vmatprep.subr.bf16.mxu0 0
    %772 = vmatpush1.bf16.xpose.msra.mxu0 0
    %773 = vmatprep.subr.bf16.mxu0 0
    %774 = vmatpush1.bf16.xpose.msra.mxu0 0
    %775 = vmatprep.subr.bf16.mxu0 0
    %776 = vmatpush1.bf16.xpose.msra.mxu0 0
    %777 = vmatprep.subr.bf16.mxu0 0
    %778 = vmatpush1.bf16.xpose.msra.mxu0 0
    %779 = vmatprep.mubr.bf16.mxu0 0
    %780 = vmatmul.mubr.bf16.gmra.mrb[0].mxu0 %v702
    %v781 = vpop.f32.mrb[0].mxu0
    %v782 = vadd.f32 0.0, %v781
    %v783 = vpop.f32.mrb[0].mxu0
    %v784 = vpop.f32.mrb[0].mxu0
    %v785 = vpop.f32.mrb[0].mxu0
    %786 = vdwg.mxu0
    %v787 = vmul.f32 %v742, 0.1796053
    %v788 = vmul.f32 %v782, 0.1796053
    %vm789 = vcmask 64512
    %v790 = vsel %vm789, %v787, -inf
    %791 = vmax.xlane.f32.xlu0 %v790
    %v792 = vpop.xlane.xlu0 %791
    %v793 = vsel %vm789, %v788, -inf
    %794 = vmax.xlane.f32.xlu0 %v793
    %v795 = vpop.xlane.xlu0 %794
    %v796 = vsub.f32 %v787, %v792
    %v797 = vsub.f32 %v788, %v795
    %v798 = vmul.f32 %v796, 1.442695
    %v799 = vpow.pop %v798
    %v800 = vmul.f32 %v797, 1.442695
    %v801 = vpow.pop %v800
    %v802 = vsel %vm789, %v799, 0.0
    %803 = vadd.xlane.f32.xlu0 %v802
    %v804 = vpop.xlane.xlu0 %803
    %v805 = vsel %vm789, %v801, 0.0
    %806 = vadd.xlane.f32.xlu0 %v805
    %v807 = vpop.xlane.xlu0 %806
    %v808 = vrcp.pop %v804
    %v809 = vrcp.pop %v807
    %v810 = vmul.f32 %v799, %v808
    %v811 = vmul.f32 %v801, %v809
    %v812 = vpack.c.bf16 %v810, %v810
    %v813 = vpack.c.bf16 %v811, %v811
    %v815 = vsel %vm789, %v812, 0
    %vm817 = vcmask 1043456
    %v819 = vsel %vm817, %v705, 0
    %821 = vmatprep.subr.bf16.mxu0 0
    %822 = vmatpush1.bf16.msra.mxu0 %v819
    %823 = vmatprep.subr.bf16.mxu0 0
    %824 = vmatpush1.bf16.msra.mxu0 0
    %825 = vmatprep.subr.bf16.mxu0 0
    %826 = vmatpush1.bf16.msra.mxu0 0
    %827 = vmatprep.subr.bf16.mxu0 0
    %828 = vmatpush1.bf16.msra.mxu0 0
    %829 = vmatprep.subr.bf16.mxu0 0
    %830 = vmatpush1.bf16.msra.mxu0 0
    %831 = vmatprep.subr.bf16.mxu0 0
    %832 = vmatpush1.bf16.msra.mxu0 0
    %833 = vmatprep.subr.bf16.mxu0 0
    %834 = vmatpush1.bf16.msra.mxu0 0
    %835 = vmatprep.subr.bf16.mxu0 0
    %836 = vmatpush1.bf16.msra.mxu0 0
    %837 = vmatprep.subr.bf16.mxu0 0
    %838 = vmatpush1.bf16.msra.mxu0 0
    %839 = vmatprep.subr.bf16.mxu0 0
    %840 = vmatpush1.bf16.msra.mxu0 0
    %841 = vmatprep.subr.bf16.mxu0 0
    %842 = vmatpush1.bf16.msra.mxu0 0
    %843 = vmatprep.subr.bf16.mxu0 0
    %844 = vmatpush1.bf16.msra.mxu0 0
    %845 = vmatprep.subr.bf16.mxu0 0
    %846 = vmatpush1.bf16.msra.mxu0 0
    %847 = vmatprep.subr.bf16.mxu0 0
    %848 = vmatpush1.bf16.msra.mxu0 0
    %849 = vmatprep.subr.bf16.mxu0 0
    %850 = vmatpush1.bf16.msra.mxu0 0
    %851 = vmatprep.subr.bf16.mxu0 0
    %852 = vmatpush1.bf16.msra.mxu0 0
    %853 = vmatprep.mubr.bf16.mxu0 0
    %854 = vmatmul.mubr.bf16.gmra.mrb[0].mxu0 %v815
    %v855 = vpop.f32.mrb[0].mxu0
    %v856 = vadd.f32 0.0, %v855
    %v857 = vpop.f32.mrb[0].mxu0
    %v858 = vpop.f32.mrb[0].mxu0
    %v859 = vpop.f32.mrb[0].mxu0
    %860 = vdwg.mxu0
    %v862 = vsel %vm789, %v813, 0
    %v865 = vsel %vm817, %v706, 0
    %867 = vmatprep.subr.bf16.mxu0 0
    %868 = vmatpush1.bf16.msra.mxu0 %v865
    %869 = vmatprep.subr.bf16.mxu0 0
    %870 = vmatpush1.bf16.msra.mxu0 0
    %871 = vmatprep.subr.bf16.mxu0 0
    %872 = vmatpush1.bf16.msra.mxu0 0
    %873 = vmatprep.subr.bf16.mxu0 0
    %874 = vmatpush1.bf16.msra.mxu0 0
    %875 = vmatprep.subr.bf16.mxu0 0
    %876 = vmatpush1.bf16.msra.mxu0 0
    %877 = vmatprep.subr.bf16.mxu0 0
    %878 = vmatpush1.bf16.msra.mxu0 0
    %879 = vmatprep.subr.bf16.mxu0 0
    %880 = vmatpush1.bf16.msra.mxu0 0
    %881 = vmatprep.subr.bf16.mxu0 0
    %882 = vmatpush1.bf16.msra.mxu0 0
    %883 = vmatprep.subr.bf16.mxu0 0
    %884 = vmatpush1.bf16.msra.mxu0 0
    %885 = vmatprep.subr.bf16.mxu0 0
    %886 = vmatpush1.bf16.msra.mxu0 0
    %887 = vmatprep.subr.bf16.mxu0 0
    %888 = vmatpush1.bf16.msra.mxu0 0
    %889 = vmatprep.subr.bf16.mxu0 0
    %890 = vmatpush1.bf16.msra.mxu0 0
    %891 = vmatprep.subr.bf16.mxu0 0
    %892 = vmatpush1.bf16.msra.mxu0 0
    %893 = vmatprep.subr.bf16.mxu0 0
    %894 = vmatpush1.bf16.msra.mxu0 0
    %895 = vmatprep.subr.bf16.mxu0 0
    %896 = vmatpush1.bf16.msra.mxu0 0
    %897 = vmatprep.subr.bf16.mxu0 0
    %898 = vmatpush1.bf16.msra.mxu0 0
    %899 = vmatprep.mubr.bf16.mxu0 0
    %900 = vmatmul.mubr.bf16.gmra.mrb[0].mxu0 %v862
    %v901 = vpop.f32.mrb[0].mxu0
    %v902 = vadd.f32 0.0, %v901
    %v903 = vpop.f32.mrb[0].mxu0
    %v904 = vpop.f32.mrb[0].mxu0
    %v905 = vpop.f32.mrb[0].mxu0
    %906 = vdwg.mxu0
    %v907 = vpack.c.bf16 %v525, %v525
    %v908 = vpack.c.bf16 %v529, %v529
    %v909 = vpack.c.bf16 %v609, %v609
    %v910 = vpack.c.bf16 %v613, %v613
    %v911 = vpack.c.bf16 %v654, %v654
    %v912 = vpack.c.bf16 %v658, %v658
    %913 = vmatprep.subr.bf16.mxu0 0
    %914 = vmatpush1.bf16.xpose.msra.mxu0 %v909
    %915 = vmatprep.subr.bf16.mxu0 0
    %916 = vmatpush1.bf16.xpose.msra.mxu0 0
    %917 = vmatprep.subr.bf16.mxu0 0
    %918 = vmatpush1.bf16.xpose.msra.mxu0 0
    %919 = vmatprep.subr.bf16.mxu0 0
    %920 = vmatpush1.bf16.xpose.msra.mxu0 0
    %921 = vmatprep.subr.bf16.mxu0 0
    %922 = vmatpush1.bf16.xpose.msra.mxu0 0
    %923 = vmatprep.subr.bf16.mxu0 0
    %924 = vmatpush1.bf16.xpose.msra.mxu0 0
    %925 = vmatprep.subr.bf16.mxu0 0
    %926 = vmatpush1.bf16.xpose.msra.mxu0 0
    %927 = vmatprep.subr.bf16.mxu0 0
    %928 = vmatpush1.bf16.xpose.msra.mxu0 0
    %929 = vmatprep.subr.bf16.mxu0 0
    %930 = vmatpush1.bf16.xpose.msra.mxu0 0
    %931 = vmatprep.subr.bf16.mxu0 0
    %932 = vmatpush1.bf16.xpose.msra.mxu0 0
    %933 = vmatprep.subr.bf16.mxu0 0
    %934 = vmatpush1.bf16.xpose.msra.mxu0 0
    %935 = vmatprep.subr.bf16.mxu0 0
    %936 = vmatpush1.bf16.xpose.msra.mxu0 0
    %937 = vmatprep.subr.bf16.mxu0 0
    %938 = vmatpush1.bf16.xpose.msra.mxu0 0
    %939 = vmatprep.subr.bf16.mxu0 0
    %940 = vmatpush1.bf16.xpose.msra.mxu0 0
    %941 = vmatprep.subr.bf16.mxu0 0
    %942 = vmatpush1.bf16.xpose.msra.mxu0 0
    %943 = vmatprep.subr.bf16.mxu0 0
    %944 = vmatpush1.bf16.xpose.msra.mxu0 0
    %945 = vmatprep.mubr.bf16.mxu0 0
    %946 = vmatmul.mubr.bf16.gmra.mrb[0].mxu0 %v907
    %v947 = vpop.f32.mrb[0].mxu0
    %v948 = vadd.f32 0.0, %v947
    %v949 = vpop.f32.mrb[0].mxu0
    %v950 = vpop.f32.mrb[0].mxu0
    %v951 = vpop.f32.mrb[0].mxu0
    %952 = vdwg.mxu0
    %953 = vmatprep.subr.bf16.mxu0 0
    %954 = vmatpush1.bf16.xpose.msra.mxu0 %v910
    %955 = vmatprep.subr.bf16.mxu0 0
    %956 = vmatpush1.bf16.xpose.msra.mxu0 0
    %957 = vmatprep.subr.bf16.mxu0 0
    %958 = vmatpush1.bf16.xpose.msra.mxu0 0
    %959 = vmatprep.subr.bf16.mxu0 0
    %960 = vmatpush1.bf16.xpose.msra.mxu0 0
    %961 = vmatprep.subr.bf16.mxu0 0
    %962 = vmatpush1.bf16.xpose.msra.mxu0 0
    %963 = vmatprep.subr.bf16.mxu0 0
    %964 = vmatpush1.bf16.xpose.msra.mxu0 0
    %965 = vmatprep.subr.bf16.mxu0 0
    %966 = vmatpush1.bf16.xpose.msra.mxu0 0
    %967 = vmatprep.subr.bf16.mxu0 0
    %968 = vmatpush1.bf16.xpose.msra.mxu0 0
    %969 = vmatprep.subr.bf16.mxu0 0
    %970 = vmatpush1.bf16.xpose.msra.mxu0 0
    %971 = vmatprep.subr.bf16.mxu0 0
    %972 = vmatpush1.bf16.xpose.msra.mxu0 0
    %973 = vmatprep.subr.bf16.mxu0 0
    %974 = vmatpush1.bf16.xpose.msra.mxu0 0
    %975 = vmatprep.subr.bf16.mxu0 0
    %976 = vmatpush1.bf16.xpose.msra.mxu0 0
    %977 = vmatprep.subr.bf16.mxu0 0
    %978 = vmatpush1.bf16.xpose.msra.mxu0 0
    %979 = vmatprep.subr.bf16.mxu0 0
    %980 = vmatpush1.bf16.xpose.msra.mxu0 0
    %981 = vmatprep.subr.bf16.mxu0 0
    %982 = vmatpush1.bf16.xpose.msra.mxu0 0
    %983 = vmatprep.subr.bf16.mxu0 0
    %984 = vmatpush1.bf16.xpose.msra.mxu0 0
    %985 = vmatprep.mubr.bf16.mxu0 0
    %986 = vmatmul.mubr.bf16.gmra.mrb[0].mxu0 %v908
    %v987 = vpop.f32.mrb[0].mxu0
    %v988 = vadd.f32 0.0, %v987
    %v989 = vpop.f32.mrb[0].mxu0
    %v990 = vpop.f32.mrb[0].mxu0
    %v991 = vpop.f32.mrb[0].mxu0
    %992 = vdwg.mxu0
    %v993 = vmul.f32 %v948, 0.1796053
    %v994 = vmul.f32 %v988, 0.1796053
    %v995 = vsel %vm789, %v993, -inf
    %996 = vmax.xlane.f32.xlu0 %v995
    %v997 = vpop.xlane.xlu0 %996
    %v998 = vsel %vm789, %v994, -inf
    %999 = vmax.xlane.f32.xlu0 %v998
    %v1000 = vpop.xlane.xlu0 %999
    %v1001 = vsub.f32 %v993, %v997
    %v1002 = vsub.f32 %v994, %v1000
    %v1003 = vmul.f32 %v1001, 1.442695
    %v1004 = vpow.pop %v1003
    %v1005 = vmul.f32 %v1002, 1.442695
    %v1006 = vpow.pop %v1005
    %v1007 = vsel %vm789, %v1004, 0.0
    %1008 = vadd.xlane.f32.xlu0 %v1007
    %v1009 = vpop.xlane.xlu0 %1008
    %v1010 = vsel %vm789, %v1006, 0.0
    %1011 = vadd.xlane.f32.xlu0 %v1010
    %v1012 = vpop.xlane.xlu0 %1011
    %v1013 = vrcp.pop %v1009
    %v1014 = vrcp.pop %v1012
    %v1015 = vmul.f32 %v1004, %v1013
    %v1016 = vmul.f32 %v1006, %v1014
    %v1017 = vpack.c.bf16 %v1015, %v1015
    %v1018 = vpack.c.bf16 %v1016, %v1016
    %v1020 = vsel %vm789, %v1017, 0
    %v1023 = vsel %vm817, %v911, 0
    %1025 = vmatprep.subr.bf16.mxu0 0
    %1026 = vmatpush1.bf16.msra.mxu0 %v1023
    %1027 = vmatprep.subr.bf16.mxu0 0
    %1028 = vmatpush1.bf16.msra.mxu0 0
    %1029 = vmatprep.subr.bf16.mxu0 0
    %1030 = vmatpush1.bf16.msra.mxu0 0
    %1031 = vmatprep.subr.bf16.mxu0 0
    %1032 = vmatpush1.bf16.msra.mxu0 0
    %1033 = vmatprep.subr.bf16.mxu0 0
    %1034 = vmatpush1.bf16.msra.mxu0 0
    %1035 = vmatprep.subr.bf16.mxu0 0
    %1036 = vmatpush1.bf16.msra.mxu0 0
    %1037 = vmatprep.subr.bf16.mxu0 0
    %1038 = vmatpush1.bf16.msra.mxu0 0
    %1039 = vmatprep.subr.bf16.mxu0 0
    %1040 = vmatpush1.bf16.msra.mxu0 0
    %1041 = vmatprep.subr.bf16.mxu0 0
    %1042 = vmatpush1.bf16.msra.mxu0 0
    %1043 = vmatprep.subr.bf16.mxu0 0
    %1044 = vmatpush1.bf16.msra.mxu0 0
    %1045 = vmatprep.subr.bf16.mxu0 0
    %1046 = vmatpush1.bf16.msra.mxu0 0
    %1047 = vmatprep.subr.bf16.mxu0 0
    %1048 = vmatpush1.bf16.msra.mxu0 0
    %1049 = vmatprep.subr.bf16.mxu0 0
    %1050 = vmatpush1.bf16.msra.mxu0 0
    %1051 = vmatprep.subr.bf16.mxu0 0
    %1052 = vmatpush1.bf16.msra.mxu0 0
    %1053 = vmatprep.subr.bf16.mxu0 0
    %1054 = vmatpush1.bf16.msra.mxu0 0
    %1055 = vmatprep.subr.bf16.mxu0 0
    %1056 = vmatpush1.bf16.msra.mxu0 0
    %1057 = vmatprep.mubr.bf16.mxu0 0
    %1058 = vmatmul.mubr.bf16.gmra.mrb[0].mxu0 %v1020
    %v1059 = vpop.f32.mrb[0].mxu0
    %v1060 = vadd.f32 0.0, %v1059
    %v1061 = vpop.f32.mrb[0].mxu0
    %v1062 = vpop.f32.mrb[0].mxu0
    %v1063 = vpop.f32.mrb[0].mxu0
    %1064 = vdwg.mxu0
    %v1066 = vsel %vm789, %v1018, 0
    %v1069 = vsel %vm817, %v912, 0
    %1071 = vmatprep.subr.bf16.mxu0 0
    %1072 = vmatpush1.bf16.msra.mxu0 %v1069
    %1073 = vmatprep.subr.bf16.mxu0 0
    %1074 = vmatpush1.bf16.msra.mxu0 0
    %1075 = vmatprep.subr.bf16.mxu0 0
    %1076 = vmatpush1.bf16.msra.mxu0 0
    %1077 = vmatprep.subr.bf16.mxu0 0
    %1078 = vmatpush1.bf16.msra.mxu0 0
    %1079 = vmatprep.subr.bf16.mxu0 0
    %1080 = vmatpush1.bf16.msra.mxu0 0
    %1081 = vmatprep.subr.bf16.mxu0 0
    %1082 = vmatpush1.bf16.msra.mxu0 0
    %1083 = vmatprep.subr.bf16.mxu0 0
    %1084 = vmatpush1.bf16.msra.mxu0 0
    %1085 = vmatprep.subr.bf16.mxu0 0
    %1086 = vmatpush1.bf16.msra.mxu0 0
    %1087 = vmatprep.subr.bf16.mxu0 0
    %1088 = vmatpush1.bf16.msra.mxu0 0
    %1089 = vmatprep.subr.bf16.mxu0 0
    %1090 = vmatpush1.bf16.msra.mxu0 0
    %1091 = vmatprep.subr.bf16.mxu0 0
    %1092 = vmatpush1.bf16.msra.mxu0 0
    %1093 = vmatprep.subr.bf16.mxu0 0
    %1094 = vmatpush1.bf16.msra.mxu0 0
    %1095 = vmatprep.subr.bf16.mxu0 0
    %1096 = vmatpush1.bf16.msra.mxu0 0
    %1097 = vmatprep.subr.bf16.mxu0 0
    %1098 = vmatpush1.bf16.msra.mxu0 0
    %1099 = vmatprep.subr.bf16.mxu0 0
    %1100 = vmatpush1.bf16.msra.mxu0 0
    %1101 = vmatprep.subr.bf16.mxu0 0
    %1102 = vmatpush1.bf16.msra.mxu0 0
    %1103 = vmatprep.mubr.bf16.mxu0 0
    %1104 = vmatmul.mubr.bf16.gmra.mrb[0].mxu0 %v1066
    %v1105 = vpop.f32.mrb[0].mxu0
    %v1106 = vadd.f32 0.0, %v1105
    %v1107 = vpop.f32.mrb[0].mxu0
    %v1108 = vpop.f32.mrb[0].mxu0
    %v1109 = vpop.f32.mrb[0].mxu0
    %1110 = vdwg.mxu0
    %v1111 = vpack.c.bf16 %v566, %v566
    %v1112 = vpack.c.bf16 %v570, %v570
    %v1113 = vpack.c.bf16 %v611, %v611
    %v1114 = vpack.c.bf16 %v615, %v615
    %v1115 = vpack.c.bf16 %v695, %v695
    %v1116 = vpack.c.bf16 %v698, %v698
    %1117 = vmatprep.subr.bf16.mxu0 0
    %1118 = vmatpush1.bf16.xpose.msra.mxu0 %v1113
    %1119 = vmatprep.subr.bf16.mxu0 0
    %1120 = vmatpush1.bf16.xpose.msra.mxu0 0
    %1121 = vmatprep.subr.bf16.mxu0 0
    %1122 = vmatpush1.bf16.xpose.msra.mxu0 0
    %1123 = vmatprep.subr.bf16.mxu0 0
    %1124 = vmatpush1.bf16.xpose.msra.mxu0 0
    %1125 = vmatprep.subr.bf16.mxu0 0
    %1126 = vmatpush1.bf16.xpose.msra.mxu0 0
    %1127 = vmatprep.subr.bf16.mxu0 0
    %1128 = vmatpush1.bf16.xpose.msra.mxu0 0
    %1129 = vmatprep.subr.bf16.mxu0 0
    %1130 = vmatpush1.bf16.xpose.msra.mxu0 0
    %1131 = vmatprep.subr.bf16.mxu0 0
    %1132 = vmatpush1.bf16.xpose.msra.mxu0 0
    %1133 = vmatprep.subr.bf16.mxu0 0
    %1134 = vmatpush1.bf16.xpose.msra.mxu0 0
    %1135 = vmatprep.subr.bf16.mxu0 0
    %1136 = vmatpush1.bf16.xpose.msra.mxu0 0
    %1137 = vmatprep.subr.bf16.mxu0 0
    %1138 = vmatpush1.bf16.xpose.msra.mxu0 0
    %1139 = vmatprep.subr.bf16.mxu0 0
    %1140 = vmatpush1.bf16.xpose.msra.mxu0 0
    %1141 = vmatprep.subr.bf16.mxu0 0
    %1142 = vmatpush1.bf16.xpose.msra.mxu0 0
    %1143 = vmatprep.subr.bf16.mxu0 0
    %1144 = vmatpush1.bf16.xpose.msra.mxu0 0
    %1145 = vmatprep.subr.bf16.mxu0 0
    %1146 = vmatpush1.bf16.xpose.msra.mxu0 0
    %1147 = vmatprep.subr.bf16.mxu0 0
    %1148 = vmatpush1.bf16.xpose.msra.mxu0 0
    %1149 = vmatprep.mubr.bf16.mxu0 0
    %1150 = vmatmul.mubr.bf16.gmra.mrb[0].mxu0 %v1111
    %v1151 = vpop.f32.mrb[0].mxu0
    %v1152 = vadd.f32 0.0, %v1151
    %v1153 = vpop.f32.mrb[0].mxu0
    %v1154 = vpop.f32.mrb[0].mxu0
    %v1155 = vpop.f32.mrb[0].mxu0
    %1156 = vdwg.mxu0
    %1157 = vmatprep.subr.bf16.mxu0 0
    %1158 = vmatpush1.bf16.xpose.msra.mxu0 %v1114
    %1159 = vmatprep.subr.bf16.mxu0 0
    %1160 = vmatpush1.bf16.xpose.msra.mxu0 0
    %1161 = vmatprep.subr.bf16.mxu0 0
    %1162 = vmatpush1.bf16.xpose.msra.mxu0 0
    %1163 = vmatprep.subr.bf16.mxu0 0
    %1164 = vmatpush1.bf16.xpose.msra.mxu0 0
    %1165 = vmatprep.subr.bf16.mxu0 0
    %1166 = vmatpush1.bf16.xpose.msra.mxu0 0
    %1167 = vmatprep.subr.bf16.mxu0 0
    %1168 = vmatpush1.bf16.xpose.msra.mxu0 0
    %1169 = vmatprep.subr.bf16.mxu0 0
    %1170 = vmatpush1.bf16.xpose.msra.mxu0 0
    %1171 = vmatprep.subr.bf16.mxu0 0
    %1172 = vmatpush1.bf16.xpose.msra.mxu0 0
    %1173 = vmatprep.subr.bf16.mxu0 0
    %1174 = vmatpush1.bf16.xpose.msra.mxu0 0
    %1175 = vmatprep.subr.bf16.mxu0 0
    %1176 = vmatpush1.bf16.xpose.msra.mxu0 0
    %1177 = vmatprep.subr.bf16.mxu0 0
    %1178 = vmatpush1.bf16.xpose.msra.mxu0 0
    %1179 = vmatprep.subr.bf16.mxu0 0
    %1180 = vmatpush1.bf16.xpose.msra.mxu0 0
    %1181 = vmatprep.subr.bf16.mxu0 0
    %1182 = vmatpush1.bf16.xpose.msra.mxu0 0
    %1183 = vmatprep.subr.bf16.mxu0 0
    %1184 = vmatpush1.bf16.xpose.msra.mxu0 0
    %1185 = vmatprep.subr.bf16.mxu0 0
    %1186 = vmatpush1.bf16.xpose.msra.mxu0 0
    %1187 = vmatprep.subr.bf16.mxu0 0
    %1188 = vmatpush1.bf16.xpose.msra.mxu0 0
    %1189 = vmatprep.mubr.bf16.mxu0 0
    %1190 = vmatmul.mubr.bf16.gmra.mrb[0].mxu0 %v1112
    %v1191 = vpop.f32.mrb[0].mxu0
    %v1192 = vadd.f32 0.0, %v1191
    %v1193 = vpop.f32.mrb[0].mxu0
    %v1194 = vpop.f32.mrb[0].mxu0
    %v1195 = vpop.f32.mrb[0].mxu0
    %1196 = vdwg.mxu0
    %v1197 = vmul.f32 %v1152, 0.1796053
    %v1198 = vmul.f32 %v1192, 0.1796053
    %v1199 = vsel %vm789, %v1197, -inf
    %1200 = vmax.xlane.f32.xlu0 %v1199
    %v1201 = vpop.xlane.xlu0 %1200
    %v1202 = vsel %vm789, %v1198, -inf
    %1203 = vmax.xlane.f32.xlu0 %v1202
    %v1204 = vpop.xlane.xlu0 %1203
    %v1205 = vsub.f32 %v1197, %v1201
    %v1206 = vsub.f32 %v1198, %v1204
    %v1207 = vmul.f32 %v1205, 1.442695
    %v1208 = vpow.pop %v1207
    %v1209 = vmul.f32 %v1206, 1.442695
    %v1210 = vpow.pop %v1209
    %v1211 = vsel %vm789, %v1208, 0.0
    %1212 = vadd.xlane.f32.xlu0 %v1211
    %v1213 = vpop.xlane.xlu0 %1212
    %v1214 = vsel %vm789, %v1210, 0.0
    %1215 = vadd.xlane.f32.xlu0 %v1214
    %v1216 = vpop.xlane.xlu0 %1215
    %v1217 = vrcp.pop %v1213
    %v1218 = vrcp.pop %v1216
    %v1219 = vmul.f32 %v1208, %v1217
    %v1220 = vmul.f32 %v1210, %v1218
    %v1221 = vpack.c.bf16 %v1219, %v1219
    %v1222 = vpack.c.bf16 %v1220, %v1220
    %v1224 = vsel %vm789, %v1221, 0
    %v1227 = vsel %vm817, %v1115, 0
    %1229 = vmatprep.subr.bf16.mxu0 0
    %1230 = vmatpush1.bf16.msra.mxu0 %v1227
    %1231 = vmatprep.subr.bf16.mxu0 0
    %1232 = vmatpush1.bf16.msra.mxu0 0
    %1233 = vmatprep.subr.bf16.mxu0 0
    %1234 = vmatpush1.bf16.msra.mxu0 0
    %1235 = vmatprep.subr.bf16.mxu0 0
    %1236 = vmatpush1.bf16.msra.mxu0 0
    %1237 = vmatprep.subr.bf16.mxu0 0
    %1238 = vmatpush1.bf16.msra.mxu0 0
    %1239 = vmatprep.subr.bf16.mxu0 0
    %1240 = vmatpush1.bf16.msra.mxu0 0
    %1241 = vmatprep.subr.bf16.mxu0 0
    %1242 = vmatpush1.bf16.msra.mxu0 0
    %1243 = vmatprep.subr.bf16.mxu0 0
    %1244 = vmatpush1.bf16.msra.mxu0 0
    %1245 = vmatprep.subr.bf16.mxu0 0
    %1246 = vmatpush1.bf16.msra.mxu0 0
    %1247 = vmatprep.subr.bf16.mxu0 0
    %1248 = vmatpush1.bf16.msra.mxu0 0
    %1249 = vmatprep.subr.bf16.mxu0 0
    %1250 = vmatpush1.bf16.msra.mxu0 0
    %1251 = vmatprep.subr.bf16.mxu0 0
    %1252 = vmatpush1.bf16.msra.mxu0 0
    %1253 = vmatprep.subr.bf16.mxu0 0
    %1254 = vmatpush1.bf16.msra.mxu0 0
    %1255 = vmatprep.subr.bf16.mxu0 0
    %1256 = vmatpush1.bf16.msra.mxu0 0
    %1257 = vmatprep.subr.bf16.mxu0 0
    %1258 = vmatpush1.bf16.msra.mxu0 0
    %1259 = vmatprep.subr.bf16.mxu0 0
    %1260 = vmatpush1.bf16.msra.mxu0 0
    %1261 = vmatprep.mubr.bf16.mxu0 0
    %1262 = vmatmul.mubr.bf16.gmra.mrb[0].mxu0 %v1224
    %v1263 = vpop.f32.mrb[0].mxu0
    %v1264 = vadd.f32 0.0, %v1263
    %v1265 = vpop.f32.mrb[0].mxu0
    %v1266 = vpop.f32.mrb[0].mxu0
    %v1267 = vpop.f32.mrb[0].mxu0
    %1268 = vdwg.mxu0
    %v1270 = vsel %vm789, %v1222, 0
    %v1273 = vsel %vm817, %v1116, 0
    %1275 = vmatprep.subr.bf16.mxu0 0
    %1276 = vmatpush1.bf16.msra.mxu0 %v1273
    %1277 = vmatprep.subr.bf16.mxu0 0
    %1278 = vmatpush1.bf16.msra.mxu0 0
    %1279 = vmatprep.subr.bf16.mxu0 0
    %1280 = vmatpush1.bf16.msra.mxu0 0
    %1281 = vmatprep.subr.bf16.mxu0 0
    %1282 = vmatpush1.bf16.msra.mxu0 0
    %1283 = vmatprep.subr.bf16.mxu0 0
    %1284 = vmatpush1.bf16.msra.mxu0 0
    %1285 = vmatprep.subr.bf16.mxu0 0
    %1286 = vmatpush1.bf16.msra.mxu0 0
    %1287 = vmatprep.subr.bf16.mxu0 0
    %1288 = vmatpush1.bf16.msra.mxu0 0
    %1289 = vmatprep.subr.bf16.mxu0 0
    %1290 = vmatpush1.bf16.msra.mxu0 0
    %1291 = vmatprep.subr.bf16.mxu0 0
    %1292 = vmatpush1.bf16.msra.mxu0 0
    %1293 = vmatprep.subr.bf16.mxu0 0
    %1294 = vmatpush1.bf16.msra.mxu0 0
    %1295 = vmatprep.subr.bf16.mxu0 0
    %1296 = vmatpush1.bf16.msra.mxu0 0
    %1297 = vmatprep.subr.bf16.mxu0 0
    %1298 = vmatpush1.bf16.msra.mxu0 0
    %1299 = vmatprep.subr.bf16.mxu0 0
    %1300 = vmatpush1.bf16.msra.mxu0 0
    %1301 = vmatprep.subr.bf16.mxu0 0
    %1302 = vmatpush1.bf16.msra.mxu0 0
    %1303 = vmatprep.subr.bf16.mxu0 0
    %1304 = vmatpush1.bf16.msra.mxu0 0
    %1305 = vmatprep.subr.bf16.mxu0 0
    %1306 = vmatpush1.bf16.msra.mxu0 0
    %1307 = vmatprep.mubr.bf16.mxu0 0
    %1308 = vmatmul.mubr.bf16.gmra.mrb[0].mxu0 %v1270
    %v1309 = vpop.f32.mrb[0].mxu0
    %v1310 = vadd.f32 0.0, %v1309
    %v1311 = vpop.f32.mrb[0].mxu0
    %v1312 = vpop.f32.mrb[0].mxu0
    %v1313 = vpop.f32.mrb[0].mxu0
    %1314 = vdwg.mxu0
    %v1315 = vpack.c.bf16 %v902, %v856
    %v1316 = vpack.c.bf16 %v1106, %v1060
    %v1317 = vpack.c.bf16 %v1310, %v1264
    %v1319 = vlaneseq
    %v1320 = vshrl.u32 %v1319, 7
    %v1321 = vsub.s32 0, %v1320
    %v1322 = vrot.slane %v137, %v1321
    %v1372 = vunpack.c.l.b16 %v89
    %v1373 = vunpack.c.l.b16 %v90
    %v1374 = vunpack.c.l.b16 %v91
    %v1375 = vunpack.c.l.b16 %v92
    %v1376 = vunpack.c.l.b16 %v93
    %v1377 = vunpack.c.l.b16 %v94
    %v1378 = vunpack.c.l.b16 %v95
    %v1379 = vunpack.c.l.b16 %v96
    %v1380 = vunpack.c.l.b16 %v97
    %v1381 = vunpack.c.l.b16 %v98
    %v1382 = vunpack.c.l.b16 %v99
    %v1383 = vunpack.c.l.b16 %v100
    %v1384 = vunpack.c.l.b16 %v101
    %v1385 = vunpack.c.l.b16 %v102
    %v1386 = vunpack.c.l.b16 %v103
    %v1387 = vunpack.c.l.b16 %v104
    %v1388 = vunpack.c.l.b16 %v105
    %v1389 = vunpack.c.l.b16 %v106
    %v1390 = vunpack.c.l.b16 %v107
    %v1391 = vunpack.c.l.b16 %v108
    %v1392 = vunpack.c.l.b16 %v109
    %v1393 = vunpack.c.l.b16 %v110
    %v1394 = vunpack.c.l.b16 %v111
    %v1395 = vunpack.c.l.b16 %v112
    %v1396 = vunpack.c.l.b16 %v113
    %v1397 = vunpack.c.l.b16 %v114
    %v1398 = vunpack.c.l.b16 %v115
    %v1399 = vunpack.c.l.b16 %v116
    %v1400 = vunpack.c.l.b16 %v117
    %v1401 = vunpack.c.l.b16 %v118
    %v1402 = vunpack.c.l.b16 %v119
    %v1403 = vunpack.c.l.b16 %v120
    %v1404 = vunpack.c.l.b16 %v121
    %v1405 = vunpack.c.l.b16 %v122
    %v1406 = vunpack.c.l.b16 %v123
    %v1407 = vunpack.c.l.b16 %v124
    %v1408 = vunpack.c.l.b16 %v125
    %v1409 = vunpack.c.l.b16 %v126
    %v1410 = vunpack.c.l.b16 %v127
    %v1411 = vunpack.c.l.b16 %v128
    %v1412 = vunpack.c.l.b16 %v129
    %v1413 = vunpack.c.l.b16 %v130
    %v1414 = vunpack.c.l.b16 %v131
    %v1415 = vunpack.c.l.b16 %v132
    %v1416 = vunpack.c.l.b16 %v133
    %v1417 = vunpack.c.l.b16 %v134
    %v1418 = vunpack.c.l.b16 %v135
    %v1419 = vunpack.c.l.b16 %v136
    %v1420 = vpack.c.b16 %v1373, %v1372
    %v1421 = vpack.c.b16 %v1375, %v1374
    %v1422 = vpack.c.b16 %v1377, %v1376
    %v1423 = vpack.c.b16 %v1379, %v1378
    %v1424 = vpack.c.b16 %v1381, %v1380
    %v1425 = vpack.c.b16 %v1383, %v1382
    %v1426 = vpack.c.b16 %v1385, %v1384
    %v1427 = vpack.c.b16 %v1387, %v1386
    %v1428 = vpack.c.b16 %v1389, %v1388
    %v1429 = vpack.c.b16 %v1391, %v1390
    %v1430 = vpack.c.b16 %v1393, %v1392
    %v1431 = vpack.c.b16 %v1395, %v1394
    %v1432 = vpack.c.b16 %v1397, %v1396
    %v1433 = vpack.c.b16 %v1399, %v1398
    %v1434 = vpack.c.b16 %v1401, %v1400
    %v1435 = vpack.c.b16 %v1403, %v1402
    %v1436 = vpack.c.b16 %v1405, %v1404
    %v1437 = vpack.c.b16 %v1407, %v1406
    %v1438 = vpack.c.b16 %v1409, %v1408
    %v1439 = vpack.c.b16 %v1411, %v1410
    %v1440 = vpack.c.b16 %v1413, %v1412
    %v1441 = vpack.c.b16 %v1415, %v1414
    %v1442 = vpack.c.b16 %v1417, %v1416
    %v1443 = vpack.c.b16 %v1419, %v1418
    %1468 = vmatprep.subr.bf16.mxu0 0
    %1469 = vmatpush1.bf16.msra.mxu0 %v1420
    %1470 = vmatprep.subr.bf16.mxu0 0
    %1471 = vmatpush1.bf16.msra.mxu0 %v1421
    %1472 = vmatprep.subr.bf16.mxu0 0
    %1473 = vmatpush1.bf16.msra.mxu0 %v1422
    %1474 = vmatprep.subr.bf16.mxu0 0
    %1475 = vmatpush1.bf16.msra.mxu0 %v1423
    %1476 = vmatprep.subr.bf16.mxu0 0
    %1477 = vmatpush1.bf16.msra.mxu0 %v1424
    %1478 = vmatprep.subr.bf16.mxu0 0
    %1479 = vmatpush1.bf16.msra.mxu0 %v1425
    %1480 = vmatprep.subr.bf16.mxu0 0
    %1481 = vmatpush1.bf16.msra.mxu0 %v1426
    %1482 = vmatprep.subr.bf16.mxu0 0
    %1483 = vmatpush1.bf16.msra.mxu0 %v1427
    %1484 = vmatprep.subr.bf16.mxu0 0
    %1485 = vmatpush1.bf16.msra.mxu0 %v1428
    %1486 = vmatprep.subr.bf16.mxu0 0
    %1487 = vmatpush1.bf16.msra.mxu0 %v1429
    %1488 = vmatprep.subr.bf16.mxu0 0
    %1489 = vmatpush1.bf16.msra.mxu0 %v1430
    %1490 = vmatprep.subr.bf16.mxu0 0
    %1491 = vmatpush1.bf16.msra.mxu0 %v1431
    %1492 = vmatprep.subr.bf16.mxu0 0
    %1493 = vmatpush1.bf16.msra.mxu0 %v1432
    %1494 = vmatprep.subr.bf16.mxu0 0
    %1495 = vmatpush1.bf16.msra.mxu0 %v1433
    %1496 = vmatprep.subr.bf16.mxu0 0
    %1497 = vmatpush1.bf16.msra.mxu0 %v1434
    %1498 = vmatprep.subr.bf16.mxu0 0
    %1499 = vmatpush1.bf16.msra.mxu0 %v1435
    %1500 = vmatprep.mubr.bf16.mxu0 %v1316
    %1501 = vmatmul.mubr.bf16.gmra.mrb[0].mxu0 %v1315
    %v1502 = vpop.f32.mrb[0].mxu0
    %v1503 = vadd.f32 %v1322, %v1502
    %v1504 = vpop.f32.mrb[0].mxu0
    %v1505 = vpop.f32.mrb[0].mxu0
    %v1506 = vadd.f32 %v1322, %v1505
    %v1507 = vpop.f32.mrb[0].mxu0
    %1508 = vdwg.mxu0
    %1509 = vmatprep.subr.bf16.mxu0 0
    %1510 = vmatpush1.bf16.msra.mxu0 %v1436
    %1511 = vmatprep.subr.bf16.mxu0 0
    %1512 = vmatpush1.bf16.msra.mxu0 %v1437
    %1513 = vmatprep.subr.bf16.mxu0 0
    %1514 = vmatpush1.bf16.msra.mxu0 %v1438
    %1515 = vmatprep.subr.bf16.mxu0 0
    %1516 = vmatpush1.bf16.msra.mxu0 %v1439
    %1517 = vmatprep.subr.bf16.mxu0 0
    %1518 = vmatpush1.bf16.msra.mxu0 %v1440
    %1519 = vmatprep.subr.bf16.mxu0 0
    %1520 = vmatpush1.bf16.msra.mxu0 %v1441
    %1521 = vmatprep.subr.bf16.mxu0 0
    %1522 = vmatpush1.bf16.msra.mxu0 %v1442
    %1523 = vmatprep.subr.bf16.mxu0 0
    %1524 = vmatpush1.bf16.msra.mxu0 %v1443
    %1525 = vmatprep.subr.bf16.mxu0 0
    %1526 = vmatpush1.bf16.msra.mxu0 0
    %1527 = vmatprep.subr.bf16.mxu0 0
    %1528 = vmatpush1.bf16.msra.mxu0 0
    %1529 = vmatprep.subr.bf16.mxu0 0
    %1530 = vmatpush1.bf16.msra.mxu0 0
    %1531 = vmatprep.subr.bf16.mxu0 0
    %1532 = vmatpush1.bf16.msra.mxu0 0
    %1533 = vmatprep.subr.bf16.mxu0 0
    %1534 = vmatpush1.bf16.msra.mxu0 0
    %1535 = vmatprep.subr.bf16.mxu0 0
    %1536 = vmatpush1.bf16.msra.mxu0 0
    %1537 = vmatprep.subr.bf16.mxu0 0
    %1538 = vmatpush1.bf16.msra.mxu0 0
    %1539 = vmatprep.subr.bf16.mxu0 0
    %1540 = vmatpush1.bf16.msra.mxu0 0
    %1541 = vmatprep.mubr.bf16.mxu0 0
    %1542 = vmatmul.mubr.bf16.gmra.mrb[0].mxu0 %v1317
    %v1543 = vpop.f32.mrb[0].mxu0
    %v1544 = vadd.f32 %v1503, %v1543
    %v1545 = vpop.f32.mrb[0].mxu0
    %v1546 = vpop.f32.mrb[0].mxu0
    %v1547 = vadd.f32 %v1506, %v1546
    %v1548 = vpop.f32.mrb[0].mxu0
    %1549 = vdwg.mxu0
    %v1550 = vsel %vm453, %v1544, 0.0
    %1551 = vadd.xlane.f32.xlu0 %v1550
    %v1552 = vpop.xlane.xlu0 %1551
    %v1553 = vsel %vm453, %v1547, 0.0
    %1554 = vadd.xlane.f32.xlu0 %v1553
    %v1555 = vpop.xlane.xlu0 %1554
    %v1556 = vrcp.pop 93.0
    %v1557 = vmul.f32 %v1552, %v1556
    %v1558 = vmul.f32 %v1555, %v1556
    %v1559 = vmul.f32 %v1544, %v1557
    %v1560 = vmul.f32 %v1547, %v1558
    %v1561 = vadd.f32 %v25, %v1559
    %v1562 = vadd.f32 %v26, %v1560
    %s1563 = scalar_lea.vmem %s1, 432
    %v1564 = vld [vmem:[%s1563] sm:$0xff]
    %v1565 = vld [vmem:[%s1563 + $0x8] sm:$0xff]
    %v1566 = vld [vmem:[%s1563 + $0x10] sm:$0xff]
    %v1567 = vld [vmem:[%s1563 + $0x18] sm:$0xff]
    %v1568 = vld [vmem:[%s1563 + $0x20] sm:$0xf]
    %v1569 = vld [vmem:[%s1563 + $0x24] sm:$0xff]
    %v1570 = vld [vmem:[%s1563 + $0x2c] sm:$0xff]
    %v1571 = vld [vmem:[%s1563 + $0x34] sm:$0xff]
    %v1572 = vld [vmem:[%s1563 + $0x3c] sm:$0xff]
    %v1573 = vld [vmem:[%s1563 + $0x44] sm:$0xf]
    %v1574 = vld [vmem:[%s1563 + $0x48] sm:$0xff]
    %v1575 = vld [vmem:[%s1563 + $0x50] sm:$0xff]
    %v1576 = vld [vmem:[%s1563 + $0x58] sm:$0xff]
    %v1577 = vld [vmem:[%s1563 + $0x60] sm:$0xff]
    %v1578 = vld [vmem:[%s1563 + $0x68] sm:$0xf]
    %v1579 = vld [vmem:[%s1563 + $0x6c] sm:$0xff]
    %v1580 = vld [vmem:[%s1563 + $0x74] sm:$0xff]
    %v1581 = vld [vmem:[%s1563 + $0x7c] sm:$0xff]
    %v1582 = vld [vmem:[%s1563 + $0x84] sm:$0xff]
    %v1583 = vld [vmem:[%s1563 + $0x8c] sm:$0xf]
    %v1584 = vld [vmem:[%s1563 + $0x90] sm:$0xff]
    %v1585 = vld [vmem:[%s1563 + $0x98] sm:$0xff]
    %v1586 = vld [vmem:[%s1563 + $0xa0] sm:$0xff]
    %v1587 = vld [vmem:[%s1563 + $0xa8] sm:$0xff]
    %v1588 = vld [vmem:[%s1563 + $0xb0] sm:$0xf]
    %v1589 = vld [vmem:[%s1563 + $0xb4] sm:$0xff]
    %v1590 = vld [vmem:[%s1563 + $0xbc] sm:$0xff]
    %v1591 = vld [vmem:[%s1563 + $0xc4] sm:$0xff]
    %v1592 = vld [vmem:[%s1563 + $0xcc] sm:$0xff]
    %v1593 = vld [vmem:[%s1563 + $0xd4] sm:$0xf]
    %v1594 = vld [vmem:[%s1563 + $0xd8] sm:$0xff]
    %v1595 = vld [vmem:[%s1563 + $0xe0] sm:$0xff]
    %v1596 = vld [vmem:[%s1563 + $0xe8] sm:$0xff]
    %v1597 = vld [vmem:[%s1563 + $0xf0] sm:$0xff]
    %v1598 = vld [vmem:[%s1563 + $0xf8] sm:$0xf]
    %v1599 = vld [vmem:[%s1563 + $0xfc] sm:$0xff]
    %v1600 = vld [vmem:[%s1563 + $0x104] sm:$0xff]
    %v1601 = vld [vmem:[%s1563 + $0x10c] sm:$0xff]
    %v1602 = vld [vmem:[%s1563 + $0x114] sm:$0xff]
    %v1603 = vld [vmem:[%s1563 + $0x11c] sm:$0xf]
    %v1604 = vld [vmem:[%s1563 + $0x120] sm:$0xff]
    %v1605 = vld [vmem:[%s1563 + $0x128] sm:$0xff]
    %v1606 = vld [vmem:[%s1563 + $0x130] sm:$0xff]
    %v1607 = vld [vmem:[%s1563 + $0x138] sm:$0xff]
    %v1608 = vld [vmem:[%s1563 + $0x140] sm:$0xf]
    %v1609 = vld [vmem:[%s1563 + $0x144] sm:$0xff]
    %v1610 = vld [vmem:[%s1563 + $0x14c] sm:$0xff]
    %v1611 = vld [vmem:[%s1563 + $0x154] sm:$0xff]
    %v1612 = vld [vmem:[%s1563 + $0x15c] sm:$0xff]
    %v1613 = vld [vmem:[%s1563 + $0x164] sm:$0xf]
    %v1614 = vld [vmem:[%s1563 + $0x168] sm:$0xff]
    %v1615 = vld [vmem:[%s1563 + $0x170] sm:$0xff]
    %v1616 = vld [vmem:[%s1563 + $0x178] sm:$0xff]
    %v1617 = vld [vmem:[%s1563 + $0x180] sm:$0xff]
    %v1618 = vld [vmem:[%s1563 + $0x188] sm:$0xf]
    %v1619 = vld [vmem:[%s1563 + $0x18c] sm:$0x77]
    %v1620 = vld [vmem:[%s1563 + $0x194] sm:$0x77]
    %v1621 = vld [vmem:[%s1563 + $0x19c] sm:$0x77]
    %v1622 = vld [vmem:[%s1563 + $0x1a4] sm:$0x77]
    %v1623 = vld [vmem:[%s1563 + $0x1ac] sm:$0x7]
    %s1624 = scalar_lea.vmem %s2, 9
    %v1625 = vld [vmem:[%s1624] sm:$0xff]
    %v1626 = vld [vmem:[%s1624 + $0x8] sm:$0x1]
    %s1627 = scalar_lea.vmem %s3, 192
    %v1628 = vld [vmem:[%s1627] sm:$0xf]
    %v1629 = vld [vmem:[%s1627 + $0x4] sm:$0xf]
    %v1630 = vld [vmem:[%s1627 + $0x8] sm:$0xf]
    %v1631 = vld [vmem:[%s1627 + $0xc] sm:$0xf]
    %v1632 = vld [vmem:[%s1627 + $0x10] sm:$0xf]
    %v1633 = vld [vmem:[%s1627 + $0x14] sm:$0xf]
    %v1634 = vld [vmem:[%s1627 + $0x18] sm:$0xf]
    %v1635 = vld [vmem:[%s1627 + $0x1c] sm:$0xf]
    %v1636 = vld [vmem:[%s1627 + $0x20] sm:$0xf]
    %v1637 = vld [vmem:[%s1627 + $0x24] sm:$0xf]
    %v1638 = vld [vmem:[%s1627 + $0x28] sm:$0xf]
    %v1639 = vld [vmem:[%s1627 + $0x2c] sm:$0xf]
    %v1640 = vld [vmem:[%s1627 + $0x30] sm:$0xf]
    %v1641 = vld [vmem:[%s1627 + $0x34] sm:$0xf]
    %v1642 = vld [vmem:[%s1627 + $0x38] sm:$0xf]
    %v1643 = vld [vmem:[%s1627 + $0x3c] sm:$0xf]
    %v1644 = vld [vmem:[%s1627 + $0x40] sm:$0xf]
    %v1645 = vld [vmem:[%s1627 + $0x44] sm:$0xf]
    %v1646 = vld [vmem:[%s1627 + $0x48] sm:$0xf]
    %v1647 = vld [vmem:[%s1627 + $0x4c] sm:$0xf]
    %v1648 = vld [vmem:[%s1627 + $0x50] sm:$0xf]
    %v1649 = vld [vmem:[%s1627 + $0x54] sm:$0xf]
    %v1650 = vld [vmem:[%s1627 + $0x58] sm:$0xf]
    %v1651 = vld [vmem:[%s1627 + $0x5c] sm:$0xf]
    %v1652 = vld [vmem:[%s1627 + $0x60] sm:$0xf]
    %v1653 = vld [vmem:[%s1627 + $0x64] sm:$0xf]
    %v1654 = vld [vmem:[%s1627 + $0x68] sm:$0xf]
    %v1655 = vld [vmem:[%s1627 + $0x6c] sm:$0xf]
    %v1656 = vld [vmem:[%s1627 + $0x70] sm:$0xf]
    %v1657 = vld [vmem:[%s1627 + $0x74] sm:$0xf]
    %v1658 = vld [vmem:[%s1627 + $0x78] sm:$0xf]
    %v1659 = vld [vmem:[%s1627 + $0x7c] sm:$0xf]
    %v1660 = vld [vmem:[%s1627 + $0x80] sm:$0xf]
    %v1661 = vld [vmem:[%s1627 + $0x84] sm:$0xf]
    %v1662 = vld [vmem:[%s1627 + $0x88] sm:$0xf]
    %v1663 = vld [vmem:[%s1627 + $0x8c] sm:$0xf]
    %v1664 = vld [vmem:[%s1627 + $0x90] sm:$0xf]
    %v1665 = vld [vmem:[%s1627 + $0x94] sm:$0xf]
    %v1666 = vld [vmem:[%s1627 + $0x98] sm:$0xf]
    %v1667 = vld [vmem:[%s1627 + $0x9c] sm:$0xf]
    %v1668 = vld [vmem:[%s1627 + $0xa0] sm:$0xf]
    %v1669 = vld [vmem:[%s1627 + $0xa4] sm:$0xf]
    %v1670 = vld [vmem:[%s1627 + $0xa8] sm:$0xf]
    %v1671 = vld [vmem:[%s1627 + $0xac] sm:$0xf]
    %v1672 = vld [vmem:[%s1627 + $0xb0] sm:$0xf]
    %v1673 = vld [vmem:[%s1627 + $0xb4] sm:$0xf]
    %v1674 = vld [vmem:[%s1627 + $0xb8] sm:$0xf]
    %v1675 = vld [vmem:[%s1627 + $0xbc] sm:$0xf]
    %s1676 = scalar_lea.vmem %s4, 1
    %v1677 = vld [vmem:[%s1676] sm:$0x1]
    %v1678 = vpack.c.bf16 %v1562, %v1561
    %v1681 = vlaneseq
    %v1682 = vshrl.u32 %v1681, 7
    %v1683 = vsub.s32 0, %v1682
    %v1684 = vrot.slane %v1625, %v1683
    %v1685 = vlaneseq
    %v1686 = vshrl.u32 %v1685, 7
    %v1687 = vsub.s32 1, %v1686
    %v1688 = vrot.slane %v1625, %v1687
    %v1689 = vlaneseq
    %v1690 = vshrl.u32 %v1689, 7
    %v1691 = vsub.s32 2, %v1690
    %v1692 = vrot.slane %v1625, %v1691
    %v1693 = vlaneseq
    %v1694 = vshrl.u32 %v1693, 7
    %v1695 = vsub.s32 3, %v1694
    %v1696 = vrot.slane %v1625, %v1695
    %v1697 = vlaneseq
    %v1698 = vshrl.u32 %v1697, 7
    %v1699 = vsub.s32 4, %v1698
    %v1700 = vrot.slane %v1625, %v1699
    %v1701 = vlaneseq
    %v1702 = vshrl.u32 %v1701, 7
    %v1703 = vsub.s32 5, %v1702
    %v1704 = vrot.slane %v1625, %v1703
    %v1705 = vlaneseq
    %v1706 = vshrl.u32 %v1705, 7
    %v1707 = vsub.s32 6, %v1706
    %v1708 = vrot.slane %v1625, %v1707
    %v1709 = vlaneseq
    %v1710 = vshrl.u32 %v1709, 7
    %v1711 = vsub.s32 7, %v1710
    %v1712 = vrot.slane %v1625, %v1711
    %v1713 = vlaneseq
    %v1714 = vshrl.u32 %v1713, 7
    %v1715 = vsub.s32 0, %v1714
    %v1716 = vrot.slane %v1626, %v1715
    %v1786 = vunpack.c.l.b16 %v1564
    %v1787 = vunpack.c.h.b16 %v1564
    %v1788 = vunpack.c.l.b16 %v1565
    %v1789 = vunpack.c.h.b16 %v1565
    %v1790 = vunpack.c.l.b16 %v1566
    %v1791 = vunpack.c.h.b16 %v1566
    %v1792 = vunpack.c.l.b16 %v1567
    %v1793 = vunpack.c.h.b16 %v1567
    %v1794 = vunpack.c.l.b16 %v1568
    %v1795 = vunpack.c.l.b16 %v1569
    %v1796 = vunpack.c.h.b16 %v1569
    %v1797 = vunpack.c.l.b16 %v1570
    %v1798 = vunpack.c.h.b16 %v1570
    %v1799 = vunpack.c.l.b16 %v1571
    %v1800 = vunpack.c.h.b16 %v1571
    %v1801 = vunpack.c.l.b16 %v1572
    %v1802 = vunpack.c.h.b16 %v1572
    %v1803 = vunpack.c.l.b16 %v1573
    %v1804 = vunpack.c.l.b16 %v1574
    %v1805 = vunpack.c.h.b16 %v1574
    %v1806 = vunpack.c.l.b16 %v1575
    %v1807 = vunpack.c.h.b16 %v1575
    %v1808 = vunpack.c.l.b16 %v1576
    %v1809 = vunpack.c.h.b16 %v1576
    %v1810 = vunpack.c.l.b16 %v1577
    %v1811 = vunpack.c.h.b16 %v1577
    %v1812 = vunpack.c.l.b16 %v1578
    %v1813 = vunpack.c.l.b16 %v1579
    %v1814 = vunpack.c.h.b16 %v1579
    %v1815 = vunpack.c.l.b16 %v1580
    %v1816 = vunpack.c.h.b16 %v1580
    %v1817 = vunpack.c.l.b16 %v1581
    %v1818 = vunpack.c.h.b16 %v1581
    %v1819 = vunpack.c.l.b16 %v1582
    %v1820 = vunpack.c.h.b16 %v1582
    %v1821 = vunpack.c.l.b16 %v1583
    %v1822 = vunpack.c.l.b16 %v1584
    %v1823 = vunpack.c.h.b16 %v1584
    %v1824 = vunpack.c.l.b16 %v1585
    %v1825 = vunpack.c.h.b16 %v1585
    %v1826 = vunpack.c.l.b16 %v1586
    %v1827 = vunpack.c.h.b16 %v1586
    %v1828 = vunpack.c.l.b16 %v1587
    %v1829 = vunpack.c.h.b16 %v1587
    %v1830 = vunpack.c.l.b16 %v1588
    %v1831 = vunpack.c.l.b16 %v1589
    %v1832 = vunpack.c.h.b16 %v1589
    %v1833 = vunpack.c.l.b16 %v1590
    %v1834 = vunpack.c.h.b16 %v1590
    %v1835 = vunpack.c.l.b16 %v1591
    %v1836 = vunpack.c.h.b16 %v1591
    %v1837 = vunpack.c.l.b16 %v1592
    %v1838 = vunpack.c.h.b16 %v1592
    %v1839 = vunpack.c.l.b16 %v1593
    %v1840 = vunpack.c.l.b16 %v1594
    %v1841 = vunpack.c.h.b16 %v1594
    %v1842 = vunpack.c.l.b16 %v1595
    %v1843 = vunpack.c.h.b16 %v1595
    %v1844 = vunpack.c.l.b16 %v1596
    %v1845 = vunpack.c.h.b16 %v1596
    %v1846 = vunpack.c.l.b16 %v1597
    %v1847 = vunpack.c.h.b16 %v1597
    %v1848 = vunpack.c.l.b16 %v1598
    %v1849 = vunpack.c.l.b16 %v1599
    %v1850 = vunpack.c.h.b16 %v1599
    %v1851 = vunpack.c.l.b16 %v1600
    %v1852 = vunpack.c.h.b16 %v1600
    %v1853 = vunpack.c.l.b16 %v1601
    %v1854 = vunpack.c.h.b16 %v1601
    %v1855 = vunpack.c.l.b16 %v1602
    %v1856 = vunpack.c.h.b16 %v1602
    %v1857 = vunpack.c.l.b16 %v1603
    %v1858 = vunpack.c.l.b16 %v1604
    %v1859 = vunpack.c.h.b16 %v1604
    %v1860 = vunpack.c.l.b16 %v1605
    %v1861 = vunpack.c.h.b16 %v1605
    %v1862 = vunpack.c.l.b16 %v1606
    %v1863 = vunpack.c.h.b16 %v1606
    %v1864 = vunpack.c.l.b16 %v1607
    %v1865 = vunpack.c.h.b16 %v1607
    %v1866 = vunpack.c.l.b16 %v1608
    %v1867 = vunpack.c.l.b16 %v1609
    %v1868 = vunpack.c.h.b16 %v1609
    %v1869 = vunpack.c.l.b16 %v1610
    %v1870 = vunpack.c.h.b16 %v1610
    %v1871 = vunpack.c.l.b16 %v1611
    %v1872 = vunpack.c.h.b16 %v1611
    %v1873 = vunpack.c.l.b16 %v1612
    %v1874 = vunpack.c.h.b16 %v1612
    %v1875 = vunpack.c.l.b16 %v1613
    %v1876 = vunpack.c.l.b16 %v1614
    %v1877 = vunpack.c.h.b16 %v1614
    %v1878 = vunpack.c.l.b16 %v1615
    %v1879 = vunpack.c.h.b16 %v1615
    %v1880 = vunpack.c.l.b16 %v1616
    %v1881 = vunpack.c.h.b16 %v1616
    %v1882 = vunpack.c.l.b16 %v1617
    %v1883 = vunpack.c.h.b16 %v1617
    %v1884 = vunpack.c.l.b16 %v1618
    %v1885 = vunpack.c.l.b16 %v1619
    %v1886 = vunpack.c.h.b16 %v1619
    %v1887 = vunpack.c.l.b16 %v1620
    %v1888 = vunpack.c.h.b16 %v1620
    %v1889 = vunpack.c.l.b16 %v1621
    %v1890 = vunpack.c.h.b16 %v1621
    %v1891 = vunpack.c.l.b16 %v1622
    %v1892 = vunpack.c.h.b16 %v1622
    %v1893 = vunpack.c.l.b16 %v1623
    %v1894 = vpack.c.b16 %v1795, %v1786
    %v1895 = vpack.c.b16 %v1796, %v1787
    %v1896 = vpack.c.b16 %v1797, %v1788
    %v1897 = vpack.c.b16 %v1798, %v1789
    %v1898 = vpack.c.b16 %v1799, %v1790
    %v1899 = vpack.c.b16 %v1800, %v1791
    %v1900 = vpack.c.b16 %v1801, %v1792
    %v1901 = vpack.c.b16 %v1802, %v1793
    %v1902 = vpack.c.b16 %v1803, %v1794
    %v1903 = vpack.c.b16 %v1813, %v1804
    %v1904 = vpack.c.b16 %v1814, %v1805
    %v1905 = vpack.c.b16 %v1815, %v1806
    %v1906 = vpack.c.b16 %v1816, %v1807
    %v1907 = vpack.c.b16 %v1817, %v1808
    %v1908 = vpack.c.b16 %v1818, %v1809
    %v1909 = vpack.c.b16 %v1819, %v1810
    %v1910 = vpack.c.b16 %v1820, %v1811
    %v1911 = vpack.c.b16 %v1821, %v1812
    %v1912 = vpack.c.b16 %v1831, %v1822
    %v1913 = vpack.c.b16 %v1832, %v1823
    %v1914 = vpack.c.b16 %v1833, %v1824
    %v1915 = vpack.c.b16 %v1834, %v1825
    %v1916 = vpack.c.b16 %v1835, %v1826
    %v1917 = vpack.c.b16 %v1836, %v1827
    %v1918 = vpack.c.b16 %v1837, %v1828
    %v1919 = vpack.c.b16 %v1838, %v1829
    %v1920 = vpack.c.b16 %v1839, %v1830
    %v1921 = vpack.c.b16 %v1849, %v1840
    %v1922 = vpack.c.b16 %v1850, %v1841
    %v1923 = vpack.c.b16 %v1851, %v1842
    %v1924 = vpack.c.b16 %v1852, %v1843
    %v1925 = vpack.c.b16 %v1853, %v1844
    %v1926 = vpack.c.b16 %v1854, %v1845
    %v1927 = vpack.c.b16 %v1855, %v1846
    %v1928 = vpack.c.b16 %v1856, %v1847
    %v1929 = vpack.c.b16 %v1857, %v1848
    %v1930 = vpack.c.b16 %v1867, %v1858
    %v1931 = vpack.c.b16 %v1868, %v1859
    %v1932 = vpack.c.b16 %v1869, %v1860
    %v1933 = vpack.c.b16 %v1870, %v1861
    %v1934 = vpack.c.b16 %v1871, %v1862
    %v1935 = vpack.c.b16 %v1872, %v1863
    %v1936 = vpack.c.b16 %v1873, %v1864
    %v1937 = vpack.c.b16 %v1874, %v1865
    %v1938 = vpack.c.b16 %v1875, %v1866
    %v1939 = vpack.c.b16 %v1885, %v1876
    %v1940 = vpack.c.b16 %v1886, %v1877
    %v1941 = vpack.c.b16 %v1887, %v1878
    %v1942 = vpack.c.b16 %v1888, %v1879
    %v1943 = vpack.c.b16 %v1889, %v1880
    %v1944 = vpack.c.b16 %v1890, %v1881
    %v1945 = vpack.c.b16 %v1891, %v1882
    %v1946 = vpack.c.b16 %v1892, %v1883
    %v1947 = vpack.c.b16 %v1893, %v1884
    %v1994 = vsel %vm453, %v1678, 0
    %v1997 = vand.u32 %v1939, %v460
    %v2000 = vand.u32 %v1940, %v460
    %v2003 = vand.u32 %v1941, %v460
    %v2006 = vand.u32 %v1942, %v460
    %v2009 = vand.u32 %v1943, %v460
    %v2012 = vand.u32 %v1944, %v460
    %v2015 = vand.u32 %v1945, %v460
    %v2018 = vand.u32 %v1946, %v460
    %v2021 = vand.u32 %v1947, %v460
    %2023 = vmatprep.subr.bf16.mxu0 %v1895
    %2024 = vmatpush1.bf16.msra.mxu0 %v1894
    %2025 = vmatprep.subr.bf16.mxu0 %v1904
    %2026 = vmatpush1.bf16.msra.mxu0 %v1903
    %2027 = vmatprep.subr.bf16.mxu0 %v1913
    %2028 = vmatpush1.bf16.msra.mxu0 %v1912
    %2029 = vmatprep.subr.bf16.mxu0 %v1922
    %2030 = vmatpush1.bf16.msra.mxu0 %v1921
    %2031 = vmatprep.subr.bf16.mxu0 %v1931
    %2032 = vmatpush1.bf16.msra.mxu0 %v1930
    %2033 = vmatprep.subr.bf16.mxu0 %v2000
    %2034 = vmatpush1.bf16.msra.mxu0 %v1997
    %2035 = vmatprep.subr.bf16.mxu0 0
    %2036 = vmatpush1.bf16.msra.mxu0 0
    %2037 = vmatprep.subr.bf16.mxu0 0
    %2038 = vmatpush1.bf16.msra.mxu0 0
    %2039 = vmatprep.subr.bf16.mxu0 0
    %2040 = vmatpush1.bf16.msra.mxu0 0
    %2041 = vmatprep.subr.bf16.mxu0 0
    %2042 = vmatpush1.bf16.msra.mxu0 0
    %2043 = vmatprep.subr.bf16.mxu0 0
    %2044 = vmatpush1.bf16.msra.mxu0 0
    %2045 = vmatprep.subr.bf16.mxu0 0
    %2046 = vmatpush1.bf16.msra.mxu0 0
    %2047 = vmatprep.subr.bf16.mxu0 0
    %2048 = vmatpush1.bf16.msra.mxu0 0
    %2049 = vmatprep.subr.bf16.mxu0 0
    %2050 = vmatpush1.bf16.msra.mxu0 0
    %2051 = vmatprep.subr.bf16.mxu0 0
    %2052 = vmatpush1.bf16.msra.mxu0 0
    %2053 = vmatprep.subr.bf16.mxu0 0
    %2054 = vmatpush1.bf16.msra.mxu0 0
    %2055 = vmatprep.mubr.bf16.mxu0 0
    %2056 = vmatmul.mubr.bf16.gmra.mrb[0].mxu0 %v1994
    %v2057 = vpop.f32.mrb[0].mxu0
    %v2058 = vadd.f32 %v1684, %v2057
    %v2059 = vpop.f32.mrb[0].mxu0
    %v2060 = vadd.f32 %v1688, %v2059
    %v2061 = vpop.f32.mrb[0].mxu0
    %v2062 = vadd.f32 %v1684, %v2061
    %v2063 = vpop.f32.mrb[0].mxu0
    %v2064 = vadd.f32 %v1688, %v2063
    %2065 = vdwg.mxu0
    %2066 = vmatprep.subr.bf16.mxu0 %v1897
    %2067 = vmatpush1.bf16.msra.mxu0 %v1896
    %2068 = vmatprep.subr.bf16.mxu0 %v1906
    %2069 = vmatpush1.bf16.msra.mxu0 %v1905
    %2070 = vmatprep.subr.bf16.mxu0 %v1915
    %2071 = vmatpush1.bf16.msra.mxu0 %v1914
    %2072 = vmatprep.subr.bf16.mxu0 %v1924
    %2073 = vmatpush1.bf16.msra.mxu0 %v1923
    %2074 = vmatprep.subr.bf16.mxu0 %v1933
    %2075 = vmatpush1.bf16.msra.mxu0 %v1932
    %2076 = vmatprep.subr.bf16.mxu0 %v2006
    %2077 = vmatpush1.bf16.msra.mxu0 %v2003
    %2078 = vmatprep.subr.bf16.mxu0 0
    %2079 = vmatpush1.bf16.msra.mxu0 0
    %2080 = vmatprep.subr.bf16.mxu0 0
    %2081 = vmatpush1.bf16.msra.mxu0 0
    %2082 = vmatprep.subr.bf16.mxu0 0
    %2083 = vmatpush1.bf16.msra.mxu0 0
    %2084 = vmatprep.subr.bf16.mxu0 0
    %2085 = vmatpush1.bf16.msra.mxu0 0
    %2086 = vmatprep.subr.bf16.mxu0 0
    %2087 = vmatpush1.bf16.msra.mxu0 0
    %2088 = vmatprep.subr.bf16.mxu0 0
    %2089 = vmatpush1.bf16.msra.mxu0 0
    %2090 = vmatprep.subr.bf16.mxu0 0
    %2091 = vmatpush1.bf16.msra.mxu0 0
    %2092 = vmatprep.subr.bf16.mxu0 0
    %2093 = vmatpush1.bf16.msra.mxu0 0
    %2094 = vmatprep.subr.bf16.mxu0 0
    %2095 = vmatpush1.bf16.msra.mxu0 0
    %2096 = vmatprep.subr.bf16.mxu0 0
    %2097 = vmatpush1.bf16.msra.mxu0 0
    %2098 = vmatprep.mubr.bf16.mxu0 0
    %2099 = vmatmul.mubr.bf16.gmra.mrb[0].mxu0 %v1994
    %v2100 = vpop.f32.mrb[0].mxu0
    %v2101 = vadd.f32 %v1692, %v2100
    %v2102 = vpop.f32.mrb[0].mxu0
    %v2103 = vadd.f32 %v1696, %v2102
    %v2104 = vpop.f32.mrb[0].mxu0
    %v2105 = vadd.f32 %v1692, %v2104
    %v2106 = vpop.f32.mrb[0].mxu0
    %v2107 = vadd.f32 %v1696, %v2106
    %2108 = vdwg.mxu0
    %2109 = vmatprep.subr.bf16.mxu0 %v1899
    %2110 = vmatpush1.bf16.msra.mxu0 %v1898
    %2111 = vmatprep.subr.bf16.mxu0 %v1908
    %2112 = vmatpush1.bf16.msra.mxu0 %v1907
    %2113 = vmatprep.subr.bf16.mxu0 %v1917
    %2114 = vmatpush1.bf16.msra.mxu0 %v1916
    %2115 = vmatprep.subr.bf16.mxu0 %v1926
    %2116 = vmatpush1.bf16.msra.mxu0 %v1925
    %2117 = vmatprep.subr.bf16.mxu0 %v1935
    %2118 = vmatpush1.bf16.msra.mxu0 %v1934
    %2119 = vmatprep.subr.bf16.mxu0 %v2012
    %2120 = vmatpush1.bf16.msra.mxu0 %v2009
    %2121 = vmatprep.subr.bf16.mxu0 0
    %2122 = vmatpush1.bf16.msra.mxu0 0
    %2123 = vmatprep.subr.bf16.mxu0 0
    %2124 = vmatpush1.bf16.msra.mxu0 0
    %2125 = vmatprep.subr.bf16.mxu0 0
    %2126 = vmatpush1.bf16.msra.mxu0 0
    %2127 = vmatprep.subr.bf16.mxu0 0
    %2128 = vmatpush1.bf16.msra.mxu0 0
    %2129 = vmatprep.subr.bf16.mxu0 0
    %2130 = vmatpush1.bf16.msra.mxu0 0
    %2131 = vmatprep.subr.bf16.mxu0 0
    %2132 = vmatpush1.bf16.msra.mxu0 0
    %2133 = vmatprep.subr.bf16.mxu0 0
    %2134 = vmatpush1.bf16.msra.mxu0 0
    %2135 = vmatprep.subr.bf16.mxu0 0
    %2136 = vmatpush1.bf16.msra.mxu0 0
    %2137 = vmatprep.subr.bf16.mxu0 0
    %2138 = vmatpush1.bf16.msra.mxu0 0
    %2139 = vmatprep.subr.bf16.mxu0 0
    %2140 = vmatpush1.bf16.msra.mxu0 0
    %2141 = vmatprep.mubr.bf16.mxu0 0
    %2142 = vmatmul.mubr.bf16.gmra.mrb[0].mxu0 %v1994
    %v2143 = vpop.f32.mrb[0].mxu0
    %v2144 = vadd.f32 %v1700, %v2143
    %v2145 = vpop.f32.mrb[0].mxu0
    %v2146 = vadd.f32 %v1704, %v2145
    %v2147 = vpop.f32.mrb[0].mxu0
    %v2148 = vadd.f32 %v1700, %v2147
    %v2149 = vpop.f32.mrb[0].mxu0
    %v2150 = vadd.f32 %v1704, %v2149
    %2151 = vdwg.mxu0
    %2152 = vmatprep.subr.bf16.mxu0 %v1901
    %2153 = vmatpush1.bf16.msra.mxu0 %v1900
    %2154 = vmatprep.subr.bf16.mxu0 %v1910
    %2155 = vmatpush1.bf16.msra.mxu0 %v1909
    %2156 = vmatprep.subr.bf16.mxu0 %v1919
    %2157 = vmatpush1.bf16.msra.mxu0 %v1918
    %2158 = vmatprep.subr.bf16.mxu0 %v1928
    %2159 = vmatpush1.bf16.msra.mxu0 %v1927
    %2160 = vmatprep.subr.bf16.mxu0 %v1937
    %2161 = vmatpush1.bf16.msra.mxu0 %v1936
    %2162 = vmatprep.subr.bf16.mxu0 %v2018
    %2163 = vmatpush1.bf16.msra.mxu0 %v2015
    %2164 = vmatprep.subr.bf16.mxu0 0
    %2165 = vmatpush1.bf16.msra.mxu0 0
    %2166 = vmatprep.subr.bf16.mxu0 0
    %2167 = vmatpush1.bf16.msra.mxu0 0
    %2168 = vmatprep.subr.bf16.mxu0 0
    %2169 = vmatpush1.bf16.msra.mxu0 0
    %2170 = vmatprep.subr.bf16.mxu0 0
    %2171 = vmatpush1.bf16.msra.mxu0 0
    %2172 = vmatprep.subr.bf16.mxu0 0
    %2173 = vmatpush1.bf16.msra.mxu0 0
    %2174 = vmatprep.subr.bf16.mxu0 0
    %2175 = vmatpush1.bf16.msra.mxu0 0
    %2176 = vmatprep.subr.bf16.mxu0 0
    %2177 = vmatpush1.bf16.msra.mxu0 0
    %2178 = vmatprep.subr.bf16.mxu0 0
    %2179 = vmatpush1.bf16.msra.mxu0 0
    %2180 = vmatprep.subr.bf16.mxu0 0
    %2181 = vmatpush1.bf16.msra.mxu0 0
    %2182 = vmatprep.subr.bf16.mxu0 0
    %2183 = vmatpush1.bf16.msra.mxu0 0
    %2184 = vmatprep.mubr.bf16.mxu0 0
    %2185 = vmatmul.mubr.bf16.gmra.mrb[0].mxu0 %v1994
    %v2186 = vpop.f32.mrb[0].mxu0
    %v2187 = vadd.f32 %v1708, %v2186
    %v2188 = vpop.f32.mrb[0].mxu0
    %v2189 = vadd.f32 %v1712, %v2188
    %v2190 = vpop.f32.mrb[0].mxu0
    %v2191 = vadd.f32 %v1708, %v2190
    %v2192 = vpop.f32.mrb[0].mxu0
    %v2193 = vadd.f32 %v1712, %v2192
    %2194 = vdwg.mxu0
    %2195 = vmatprep.subr.bf16.mxu0 0
    %2196 = vmatpush1.bf16.msra.mxu0 %v1902
    %2197 = vmatprep.subr.bf16.mxu0 0
    %2198 = vmatpush1.bf16.msra.mxu0 %v1911
    %2199 = vmatprep.subr.bf16.mxu0 0
    %2200 = vmatpush1.bf16.msra.mxu0 %v1920
    %2201 = vmatprep.subr.bf16.mxu0 0
    %2202 = vmatpush1.bf16.msra.mxu0 %v1929
    %2203 = vmatprep.subr.bf16.mxu0 0
    %2204 = vmatpush1.bf16.msra.mxu0 %v1938
    %2205 = vmatprep.subr.bf16.mxu0 0
    %2206 = vmatpush1.bf16.msra.mxu0 %v2021
    %2207 = vmatprep.subr.bf16.mxu0 0
    %2208 = vmatpush1.bf16.msra.mxu0 0
    %2209 = vmatprep.subr.bf16.mxu0 0
    %2210 = vmatpush1.bf16.msra.mxu0 0
    %2211 = vmatprep.subr.bf16.mxu0 0
    %2212 = vmatpush1.bf16.msra.mxu0 0
    %2213 = vmatprep.subr.bf16.mxu0 0
    %2214 = vmatpush1.bf16.msra.mxu0 0
    %2215 = vmatprep.subr.bf16.mxu0 0
    %2216 = vmatpush1.bf16.msra.mxu0 0
    %2217 = vmatprep.subr.bf16.mxu0 0
    %2218 = vmatpush1.bf16.msra.mxu0 0
    %2219 = vmatprep.subr.bf16.mxu0 0
    %2220 = vmatpush1.bf16.msra.mxu0 0
    %2221 = vmatprep.subr.bf16.mxu0 0
    %2222 = vmatpush1.bf16.msra.mxu0 0
    %2223 = vmatprep.subr.bf16.mxu0 0
    %2224 = vmatpush1.bf16.msra.mxu0 0
    %2225 = vmatprep.subr.bf16.mxu0 0
    %2226 = vmatpush1.bf16.msra.mxu0 0
    %2227 = vmatprep.mubr.bf16.mxu0 0
    %2228 = vmatmul.mubr.bf16.gmra.mrb[0].mxu0 %v1994
    %v2229 = vpop.f32.mrb[0].mxu0
    %v2230 = vadd.f32 %v1716, %v2229
    %v2231 = vpop.f32.mrb[0].mxu0
    %v2232 = vpop.f32.mrb[0].mxu0
    %v2233 = vadd.f32 %v1716, %v2232
    %v2234 = vpop.f32.mrb[0].mxu0
    %2235 = vdwg.mxu0
    %v2236 = vpack.c.bf16 %v2058, %v2058
    %v2237 = vpack.c.bf16 %v2062, %v2062
    %v2238 = vpack.c.bf16 %v2103, %v2103
    %v2239 = vpack.c.bf16 %v2107, %v2107
    %v2240 = vpack.c.bf16 %v2187, %v2187
    %v2241 = vpack.c.bf16 %v2191, %v2191
    %2242 = vmatprep.subr.bf16.mxu0 0
    %2243 = vmatpush1.bf16.xpose.msra.mxu0 %v2238
    %2244 = vmatprep.subr.bf16.mxu0 0
    %2245 = vmatpush1.bf16.xpose.msra.mxu0 0
    %2246 = vmatprep.subr.bf16.mxu0 0
    %2247 = vmatpush1.bf16.xpose.msra.mxu0 0
    %2248 = vmatprep.subr.bf16.mxu0 0
    %2249 = vmatpush1.bf16.xpose.msra.mxu0 0
    %2250 = vmatprep.subr.bf16.mxu0 0
    %2251 = vmatpush1.bf16.xpose.msra.mxu0 0
    %2252 = vmatprep.subr.bf16.mxu0 0
    %2253 = vmatpush1.bf16.xpose.msra.mxu0 0
    %2254 = vmatprep.subr.bf16.mxu0 0
    %2255 = vmatpush1.bf16.xpose.msra.mxu0 0
    %2256 = vmatprep.subr.bf16.mxu0 0
    %2257 = vmatpush1.bf16.xpose.msra.mxu0 0
    %2258 = vmatprep.subr.bf16.mxu0 0
    %2259 = vmatpush1.bf16.xpose.msra.mxu0 0
    %2260 = vmatprep.subr.bf16.mxu0 0
    %2261 = vmatpush1.bf16.xpose.msra.mxu0 0
    %2262 = vmatprep.subr.bf16.mxu0 0
    %2263 = vmatpush1.bf16.xpose.msra.mxu0 0
    %2264 = vmatprep.subr.bf16.mxu0 0
    %2265 = vmatpush1.bf16.xpose.msra.mxu0 0
    %2266 = vmatprep.subr.bf16.mxu0 0
    %2267 = vmatpush1.bf16.xpose.msra.mxu0 0
    %2268 = vmatprep.subr.bf16.mxu0 0
    %2269 = vmatpush1.bf16.xpose.msra.mxu0 0
    %2270 = vmatprep.subr.bf16.mxu0 0
    %2271 = vmatpush1.bf16.xpose.msra.mxu0 0
    %2272 = vmatprep.subr.bf16.mxu0 0
    %2273 = vmatpush1.bf16.xpose.msra.mxu0 0
    %2274 = vmatprep.mubr.bf16.mxu0 0
    %2275 = vmatmul.mubr.bf16.gmra.mrb[0].mxu0 %v2236
    %v2276 = vpop.f32.mrb[0].mxu0
    %v2277 = vadd.f32 0.0, %v2276
    %v2278 = vpop.f32.mrb[0].mxu0
    %v2279 = vpop.f32.mrb[0].mxu0
    %v2280 = vpop.f32.mrb[0].mxu0
    %2281 = vdwg.mxu0
    %2282 = vmatprep.subr.bf16.mxu0 0
    %2283 = vmatpush1.bf16.xpose.msra.mxu0 %v2239
    %2284 = vmatprep.subr.bf16.mxu0 0
    %2285 = vmatpush1.bf16.xpose.msra.mxu0 0
    %2286 = vmatprep.subr.bf16.mxu0 0
    %2287 = vmatpush1.bf16.xpose.msra.mxu0 0
    %2288 = vmatprep.subr.bf16.mxu0 0
    %2289 = vmatpush1.bf16.xpose.msra.mxu0 0
    %2290 = vmatprep.subr.bf16.mxu0 0
    %2291 = vmatpush1.bf16.xpose.msra.mxu0 0
    %2292 = vmatprep.subr.bf16.mxu0 0
    %2293 = vmatpush1.bf16.xpose.msra.mxu0 0
    %2294 = vmatprep.subr.bf16.mxu0 0
    %2295 = vmatpush1.bf16.xpose.msra.mxu0 0
    %2296 = vmatprep.subr.bf16.mxu0 0
    %2297 = vmatpush1.bf16.xpose.msra.mxu0 0
    %2298 = vmatprep.subr.bf16.mxu0 0
    %2299 = vmatpush1.bf16.xpose.msra.mxu0 0
    %2300 = vmatprep.subr.bf16.mxu0 0
    %2301 = vmatpush1.bf16.xpose.msra.mxu0 0
    %2302 = vmatprep.subr.bf16.mxu0 0
    %2303 = vmatpush1.bf16.xpose.msra.mxu0 0
    %2304 = vmatprep.subr.bf16.mxu0 0
    %2305 = vmatpush1.bf16.xpose.msra.mxu0 0
    %2306 = vmatprep.subr.bf16.mxu0 0
    %2307 = vmatpush1.bf16.xpose.msra.mxu0 0
    %2308 = vmatprep.subr.bf16.mxu0 0
    %2309 = vmatpush1.bf16.xpose.msra.mxu0 0
    %2310 = vmatprep.subr.bf16.mxu0 0
    %2311 = vmatpush1.bf16.xpose.msra.mxu0 0
    %2312 = vmatprep.subr.bf16.mxu0 0
    %2313 = vmatpush1.bf16.xpose.msra.mxu0 0
    %2314 = vmatprep.mubr.bf16.mxu0 0
    %2315 = vmatmul.mubr.bf16.gmra.mrb[0].mxu0 %v2237
    %v2316 = vpop.f32.mrb[0].mxu0
    %v2317 = vadd.f32 0.0, %v2316
    %v2318 = vpop.f32.mrb[0].mxu0
    %v2319 = vpop.f32.mrb[0].mxu0
    %v2320 = vpop.f32.mrb[0].mxu0
    %2321 = vdwg.mxu0
    %v2322 = vmul.f32 %v2277, 0.1796053
    %v2323 = vmul.f32 %v2317, 0.1796053
    %v2324 = vsel %vm789, %v2322, -inf
    %2325 = vmax.xlane.f32.xlu0 %v2324
    %v2326 = vpop.xlane.xlu0 %2325
    %v2327 = vsel %vm789, %v2323, -inf
    %2328 = vmax.xlane.f32.xlu0 %v2327
    %v2329 = vpop.xlane.xlu0 %2328
    %v2330 = vsub.f32 %v2322, %v2326
    %v2331 = vsub.f32 %v2323, %v2329
    %v2332 = vmul.f32 %v2330, 1.442695
    %v2333 = vpow.pop %v2332
    %v2334 = vmul.f32 %v2331, 1.442695
    %v2335 = vpow.pop %v2334
    %v2336 = vsel %vm789, %v2333, 0.0
    %2337 = vadd.xlane.f32.xlu0 %v2336
    %v2338 = vpop.xlane.xlu0 %2337
    %v2339 = vsel %vm789, %v2335, 0.0
    %2340 = vadd.xlane.f32.xlu0 %v2339
    %v2341 = vpop.xlane.xlu0 %2340
    %v2342 = vrcp.pop %v2338
    %v2343 = vrcp.pop %v2341
    %v2344 = vmul.f32 %v2333, %v2342
    %v2345 = vmul.f32 %v2335, %v2343
    %v2346 = vpack.c.bf16 %v2344, %v2344
    %v2347 = vpack.c.bf16 %v2345, %v2345
    %v2349 = vsel %vm789, %v2346, 0
    %v2352 = vsel %vm817, %v2240, 0
    %2354 = vmatprep.subr.bf16.mxu0 0
    %2355 = vmatpush1.bf16.msra.mxu0 %v2352
    %2356 = vmatprep.subr.bf16.mxu0 0
    %2357 = vmatpush1.bf16.msra.mxu0 0
    %2358 = vmatprep.subr.bf16.mxu0 0
    %2359 = vmatpush1.bf16.msra.mxu0 0
    %2360 = vmatprep.subr.bf16.mxu0 0
    %2361 = vmatpush1.bf16.msra.mxu0 0
    %2362 = vmatprep.subr.bf16.mxu0 0
    %2363 = vmatpush1.bf16.msra.mxu0 0
    %2364 = vmatprep.subr.bf16.mxu0 0
    %2365 = vmatpush1.bf16.msra.mxu0 0
    %2366 = vmatprep.subr.bf16.mxu0 0
    %2367 = vmatpush1.bf16.msra.mxu0 0
    %2368 = vmatprep.subr.bf16.mxu0 0
    %2369 = vmatpush1.bf16.msra.mxu0 0
    %2370 = vmatprep.subr.bf16.mxu0 0
    %2371 = vmatpush1.bf16.msra.mxu0 0
    %2372 = vmatprep.subr.bf16.mxu0 0
    %2373 = vmatpush1.bf16.msra.mxu0 0
    %2374 = vmatprep.subr.bf16.mxu0 0
    %2375 = vmatpush1.bf16.msra.mxu0 0
    %2376 = vmatprep.subr.bf16.mxu0 0
    %2377 = vmatpush1.bf16.msra.mxu0 0
    %2378 = vmatprep.subr.bf16.mxu0 0
    %2379 = vmatpush1.bf16.msra.mxu0 0
    %2380 = vmatprep.subr.bf16.mxu0 0
    %2381 = vmatpush1.bf16.msra.mxu0 0
    %2382 = vmatprep.subr.bf16.mxu0 0
    %2383 = vmatpush1.bf16.msra.mxu0 0
    %2384 = vmatprep.subr.bf16.mxu0 0
    %2385 = vmatpush1.bf16.msra.mxu0 0
    %2386 = vmatprep.mubr.bf16.mxu0 0
    %2387 = vmatmul.mubr.bf16.gmra.mrb[0].mxu0 %v2349
    %v2388 = vpop.f32.mrb[0].mxu0
    %v2389 = vadd.f32 0.0, %v2388
    %v2390 = vpop.f32.mrb[0].mxu0
    %v2391 = vpop.f32.mrb[0].mxu0
    %v2392 = vpop.f32.mrb[0].mxu0
    %2393 = vdwg.mxu0
    %v2395 = vsel %vm789, %v2347, 0
    %v2398 = vsel %vm817, %v2241, 0
    %2400 = vmatprep.subr.bf16.mxu0 0
    %2401 = vmatpush1.bf16.msra.mxu0 %v2398
    %2402 = vmatprep.subr.bf16.mxu0 0
    %2403 = vmatpush1.bf16.msra.mxu0 0
    %2404 = vmatprep.subr.bf16.mxu0 0
    %2405 = vmatpush1.bf16.msra.mxu0 0
    %2406 = vmatprep.subr.bf16.mxu0 0
    %2407 = vmatpush1.bf16.msra.mxu0 0
    %2408 = vmatprep.subr.bf16.mxu0 0
    %2409 = vmatpush1.bf16.msra.mxu0 0
    %2410 = vmatprep.subr.bf16.mxu0 0
    %2411 = vmatpush1.bf16.msra.mxu0 0
    %2412 = vmatprep.subr.bf16.mxu0 0
    %2413 = vmatpush1.bf16.msra.mxu0 0
    %2414 = vmatprep.subr.bf16.mxu0 0
    %2415 = vmatpush1.bf16.msra.mxu0 0
    %2416 = vmatprep.subr.bf16.mxu0 0
    %2417 = vmatpush1.bf16.msra.mxu0 0
    %2418 = vmatprep.subr.bf16.mxu0 0
    %2419 = vmatpush1.bf16.msra.mxu0 0
    %2420 = vmatprep.subr.bf16.mxu0 0
    %2421 = vmatpush1.bf16.msra.mxu0 0
    %2422 = vmatprep.subr.bf16.mxu0 0
    %2423 = vmatpush1.bf16.msra.mxu0 0
    %2424 = vmatprep.subr.bf16.mxu0 0
    %2425 = vmatpush1.bf16.msra.mxu0 0
    %2426 = vmatprep.subr.bf16.mxu0 0
    %2427 = vmatpush1.bf16.msra.mxu0 0
    %2428 = vmatprep.subr.bf16.mxu0 0
    %2429 = vmatpush1.bf16.msra.mxu0 0
    %2430 = vmatprep.subr.bf16.mxu0 0
    %2431 = vmatpush1.bf16.msra.mxu0 0
    %2432 = vmatprep.mubr.bf16.mxu0 0
    %2433 = vmatmul.mubr.bf16.gmra.mrb[0].mxu0 %v2395
    %v2434 = vpop.f32.mrb[0].mxu0
    %v2435 = vadd.f32 0.0, %v2434
    %v2436 = vpop.f32.mrb[0].mxu0
    %v2437 = vpop.f32.mrb[0].mxu0
    %v2438 = vpop.f32.mrb[0].mxu0
    %2439 = vdwg.mxu0
    %v2440 = vpack.c.bf16 %v2060, %v2060
    %v2441 = vpack.c.bf16 %v2064, %v2064
    %v2442 = vpack.c.bf16 %v2144, %v2144
    %v2443 = vpack.c.bf16 %v2148, %v2148
    %v2444 = vpack.c.bf16 %v2189, %v2189
    %v2445 = vpack.c.bf16 %v2193, %v2193
    %2446 = vmatprep.subr.bf16.mxu0 0
    %2447 = vmatpush1.bf16.xpose.msra.mxu0 %v2442
    %2448 = vmatprep.subr.bf16.mxu0 0
    %2449 = vmatpush1.bf16.xpose.msra.mxu0 0
    %2450 = vmatprep.subr.bf16.mxu0 0
    %2451 = vmatpush1.bf16.xpose.msra.mxu0 0
    %2452 = vmatprep.subr.bf16.mxu0 0
    %2453 = vmatpush1.bf16.xpose.msra.mxu0 0
    %2454 = vmatprep.subr.bf16.mxu0 0
    %2455 = vmatpush1.bf16.xpose.msra.mxu0 0
    %2456 = vmatprep.subr.bf16.mxu0 0
    %2457 = vmatpush1.bf16.xpose.msra.mxu0 0
    %2458 = vmatprep.subr.bf16.mxu0 0
    %2459 = vmatpush1.bf16.xpose.msra.mxu0 0
    %2460 = vmatprep.subr.bf16.mxu0 0
    %2461 = vmatpush1.bf16.xpose.msra.mxu0 0
    %2462 = vmatprep.subr.bf16.mxu0 0
    %2463 = vmatpush1.bf16.xpose.msra.mxu0 0
    %2464 = vmatprep.subr.bf16.mxu0 0
    %2465 = vmatpush1.bf16.xpose.msra.mxu0 0
    %2466 = vmatprep.subr.bf16.mxu0 0
    %2467 = vmatpush1.bf16.xpose.msra.mxu0 0
    %2468 = vmatprep.subr.bf16.mxu0 0
    %2469 = vmatpush1.bf16.xpose.msra.mxu0 0
    %2470 = vmatprep.subr.bf16.mxu0 0
    %2471 = vmatpush1.bf16.xpose.msra.mxu0 0
    %2472 = vmatprep.subr.bf16.mxu0 0
    %2473 = vmatpush1.bf16.xpose.msra.mxu0 0
    %2474 = vmatprep.subr.bf16.mxu0 0
    %2475 = vmatpush1.bf16.xpose.msra.mxu0 0
    %2476 = vmatprep.subr.bf16.mxu0 0
    %2477 = vmatpush1.bf16.xpose.msra.mxu0 0
    %2478 = vmatprep.mubr.bf16.mxu0 0
    %2479 = vmatmul.mubr.bf16.gmra.mrb[0].mxu0 %v2440
    %v2480 = vpop.f32.mrb[0].mxu0
    %v2481 = vadd.f32 0.0, %v2480
    %v2482 = vpop.f32.mrb[0].mxu0
    %v2483 = vpop.f32.mrb[0].mxu0
    %v2484 = vpop.f32.mrb[0].mxu0
    %2485 = vdwg.mxu0
    %2486 = vmatprep.subr.bf16.mxu0 0
    %2487 = vmatpush1.bf16.xpose.msra.mxu0 %v2443
    %2488 = vmatprep.subr.bf16.mxu0 0
    %2489 = vmatpush1.bf16.xpose.msra.mxu0 0
    %2490 = vmatprep.subr.bf16.mxu0 0
    %2491 = vmatpush1.bf16.xpose.msra.mxu0 0
    %2492 = vmatprep.subr.bf16.mxu0 0
    %2493 = vmatpush1.bf16.xpose.msra.mxu0 0
    %2494 = vmatprep.subr.bf16.mxu0 0
    %2495 = vmatpush1.bf16.xpose.msra.mxu0 0
    %2496 = vmatprep.subr.bf16.mxu0 0
    %2497 = vmatpush1.bf16.xpose.msra.mxu0 0
    %2498 = vmatprep.subr.bf16.mxu0 0
    %2499 = vmatpush1.bf16.xpose.msra.mxu0 0
    %2500 = vmatprep.subr.bf16.mxu0 0
    %2501 = vmatpush1.bf16.xpose.msra.mxu0 0
    %2502 = vmatprep.subr.bf16.mxu0 0
    %2503 = vmatpush1.bf16.xpose.msra.mxu0 0
    %2504 = vmatprep.subr.bf16.mxu0 0
    %2505 = vmatpush1.bf16.xpose.msra.mxu0 0
    %2506 = vmatprep.subr.bf16.mxu0 0
    %2507 = vmatpush1.bf16.xpose.msra.mxu0 0
    %2508 = vmatprep.subr.bf16.mxu0 0
    %2509 = vmatpush1.bf16.xpose.msra.mxu0 0
    %2510 = vmatprep.subr.bf16.mxu0 0
    %2511 = vmatpush1.bf16.xpose.msra.mxu0 0
    %2512 = vmatprep.subr.bf16.mxu0 0
    %2513 = vmatpush1.bf16.xpose.msra.mxu0 0
    %2514 = vmatprep.subr.bf16.mxu0 0
    %2515 = vmatpush1.bf16.xpose.msra.mxu0 0
    %2516 = vmatprep.subr.bf16.mxu0 0
    %2517 = vmatpush1.bf16.xpose.msra.mxu0 0
    %2518 = vmatprep.mubr.bf16.mxu0 0
    %2519 = vmatmul.mubr.bf16.gmra.mrb[0].mxu0 %v2441
    %v2520 = vpop.f32.mrb[0].mxu0
    %v2521 = vadd.f32 0.0, %v2520
    %v2522 = vpop.f32.mrb[0].mxu0
    %v2523 = vpop.f32.mrb[0].mxu0
    %v2524 = vpop.f32.mrb[0].mxu0
    %2525 = vdwg.mxu0
    %v2526 = vmul.f32 %v2481, 0.1796053
    %v2527 = vmul.f32 %v2521, 0.1796053
    %v2528 = vsel %vm789, %v2526, -inf
    %2529 = vmax.xlane.f32.xlu0 %v2528
    %v2530 = vpop.xlane.xlu0 %2529
    %v2531 = vsel %vm789, %v2527, -inf
    %2532 = vmax.xlane.f32.xlu0 %v2531
    %v2533 = vpop.xlane.xlu0 %2532
    %v2534 = vsub.f32 %v2526, %v2530
    %v2535 = vsub.f32 %v2527, %v2533
    %v2536 = vmul.f32 %v2534, 1.442695
    %v2537 = vpow.pop %v2536
    %v2538 = vmul.f32 %v2535, 1.442695
    %v2539 = vpow.pop %v2538
    %v2540 = vsel %vm789, %v2537, 0.0
    %2541 = vadd.xlane.f32.xlu0 %v2540
    %v2542 = vpop.xlane.xlu0 %2541
    %v2543 = vsel %vm789, %v2539, 0.0
    %2544 = vadd.xlane.f32.xlu0 %v2543
    %v2545 = vpop.xlane.xlu0 %2544
    %v2546 = vrcp.pop %v2542
    %v2547 = vrcp.pop %v2545
    %v2548 = vmul.f32 %v2537, %v2546
    %v2549 = vmul.f32 %v2539, %v2547
    %v2550 = vpack.c.bf16 %v2548, %v2548
    %v2551 = vpack.c.bf16 %v2549, %v2549
    %v2553 = vsel %vm789, %v2550, 0
    %v2556 = vsel %vm817, %v2444, 0
    %2558 = vmatprep.subr.bf16.mxu0 0
    %2559 = vmatpush1.bf16.msra.mxu0 %v2556
    %2560 = vmatprep.subr.bf16.mxu0 0
    %2561 = vmatpush1.bf16.msra.mxu0 0
    %2562 = vmatprep.subr.bf16.mxu0 0
    %2563 = vmatpush1.bf16.msra.mxu0 0
    %2564 = vmatprep.subr.bf16.mxu0 0
    %2565 = vmatpush1.bf16.msra.mxu0 0
    %2566 = vmatprep.subr.bf16.mxu0 0
    %2567 = vmatpush1.bf16.msra.mxu0 0
    %2568 = vmatprep.subr.bf16.mxu0 0
    %2569 = vmatpush1.bf16.msra.mxu0 0
    %2570 = vmatprep.subr.bf16.mxu0 0
    %2571 = vmatpush1.bf16.msra.mxu0 0
    %2572 = vmatprep.subr.bf16.mxu0 0
    %2573 = vmatpush1.bf16.msra.mxu0 0
    %2574 = vmatprep.subr.bf16.mxu0 0
    %2575 = vmatpush1.bf16.msra.mxu0 0
    %2576 = vmatprep.subr.bf16.mxu0 0
    %2577 = vmatpush1.bf16.msra.mxu0 0
    %2578 = vmatprep.subr.bf16.mxu0 0
    %2579 = vmatpush1.bf16.msra.mxu0 0
    %2580 = vmatprep.subr.bf16.mxu0 0
    %2581 = vmatpush1.bf16.msra.mxu0 0
    %2582 = vmatprep.subr.bf16.mxu0 0
    %2583 = vmatpush1.bf16.msra.mxu0 0
    %2584 = vmatprep.subr.bf16.mxu0 0
    %2585 = vmatpush1.bf16.msra.mxu0 0
    %2586 = vmatprep.subr.bf16.mxu0 0
    %2587 = vmatpush1.bf16.msra.mxu0 0
    %2588 = vmatprep.subr.bf16.mxu0 0
    %2589 = vmatpush1.bf16.msra.mxu0 0
    %2590 = vmatprep.mubr.bf16.mxu0 0
    %2591 = vmatmul.mubr.bf16.gmra.mrb[0].mxu0 %v2553
    %v2592 = vpop.f32.mrb[0].mxu0
    %v2593 = vadd.f32 0.0, %v2592
    %v2594 = vpop.f32.mrb[0].mxu0
    %v2595 = vpop.f32.mrb[0].mxu0
    %v2596 = vpop.f32.mrb[0].mxu0
    %2597 = vdwg.mxu0
    %v2599 = vsel %vm789, %v2551, 0
    %v2602 = vsel %vm817, %v2445, 0
    %2604 = vmatprep.subr.bf16.mxu0 0
    %2605 = vmatpush1.bf16.msra.mxu0 %v2602
    %2606 = vmatprep.subr.bf16.mxu0 0
    %2607 = vmatpush1.bf16.msra.mxu0 0
    %2608 = vmatprep.subr.bf16.mxu0 0
    %2609 = vmatpush1.bf16.msra.mxu0 0
    %2610 = vmatprep.subr.bf16.mxu0 0
    %2611 = vmatpush1.bf16.msra.mxu0 0
    %2612 = vmatprep.subr.bf16.mxu0 0
    %2613 = vmatpush1.bf16.msra.mxu0 0
    %2614 = vmatprep.subr.bf16.mxu0 0
    %2615 = vmatpush1.bf16.msra.mxu0 0
    %2616 = vmatprep.subr.bf16.mxu0 0
    %2617 = vmatpush1.bf16.msra.mxu0 0
    %2618 = vmatprep.subr.bf16.mxu0 0
    %2619 = vmatpush1.bf16.msra.mxu0 0
    %2620 = vmatprep.subr.bf16.mxu0 0
    %2621 = vmatpush1.bf16.msra.mxu0 0
    %2622 = vmatprep.subr.bf16.mxu0 0
    %2623 = vmatpush1.bf16.msra.mxu0 0
    %2624 = vmatprep.subr.bf16.mxu0 0
    %2625 = vmatpush1.bf16.msra.mxu0 0
    %2626 = vmatprep.subr.bf16.mxu0 0
    %2627 = vmatpush1.bf16.msra.mxu0 0
    %2628 = vmatprep.subr.bf16.mxu0 0
    %2629 = vmatpush1.bf16.msra.mxu0 0
    %2630 = vmatprep.subr.bf16.mxu0 0
    %2631 = vmatpush1.bf16.msra.mxu0 0
    %2632 = vmatprep.subr.bf16.mxu0 0
    %2633 = vmatpush1.bf16.msra.mxu0 0
    %2634 = vmatprep.subr.bf16.mxu0 0
    %2635 = vmatpush1.bf16.msra.mxu0 0
    %2636 = vmatprep.mubr.bf16.mxu0 0
    %2637 = vmatmul.mubr.bf16.gmra.mrb[0].mxu0 %v2599
    %v2638 = vpop.f32.mrb[0].mxu0
    %v2639 = vadd.f32 0.0, %v2638
    %v2640 = vpop.f32.mrb[0].mxu0
    %v2641 = vpop.f32.mrb[0].mxu0
    %v2642 = vpop.f32.mrb[0].mxu0
    %2643 = vdwg.mxu0
    %v2644 = vpack.c.bf16 %v2101, %v2101
    %v2645 = vpack.c.bf16 %v2105, %v2105
    %v2646 = vpack.c.bf16 %v2146, %v2146
    %v2647 = vpack.c.bf16 %v2150, %v2150
    %v2648 = vpack.c.bf16 %v2230, %v2230
    %v2649 = vpack.c.bf16 %v2233, %v2233
    %2650 = vmatprep.subr.bf16.mxu0 0
    %2651 = vmatpush1.bf16.xpose.msra.mxu0 %v2646
    %2652 = vmatprep.subr.bf16.mxu0 0
    %2653 = vmatpush1.bf16.xpose.msra.mxu0 0
    %2654 = vmatprep.subr.bf16.mxu0 0
    %2655 = vmatpush1.bf16.xpose.msra.mxu0 0
    %2656 = vmatprep.subr.bf16.mxu0 0
    %2657 = vmatpush1.bf16.xpose.msra.mxu0 0
    %2658 = vmatprep.subr.bf16.mxu0 0
    %2659 = vmatpush1.bf16.xpose.msra.mxu0 0
    %2660 = vmatprep.subr.bf16.mxu0 0
    %2661 = vmatpush1.bf16.xpose.msra.mxu0 0
    %2662 = vmatprep.subr.bf16.mxu0 0
    %2663 = vmatpush1.bf16.xpose.msra.mxu0 0
    %2664 = vmatprep.subr.bf16.mxu0 0
    %2665 = vmatpush1.bf16.xpose.msra.mxu0 0
    %2666 = vmatprep.subr.bf16.mxu0 0
    %2667 = vmatpush1.bf16.xpose.msra.mxu0 0
    %2668 = vmatprep.subr.bf16.mxu0 0
    %2669 = vmatpush1.bf16.xpose.msra.mxu0 0
    %2670 = vmatprep.subr.bf16.mxu0 0
    %2671 = vmatpush1.bf16.xpose.msra.mxu0 0
    %2672 = vmatprep.subr.bf16.mxu0 0
    %2673 = vmatpush1.bf16.xpose.msra.mxu0 0
    %2674 = vmatprep.subr.bf16.mxu0 0
    %2675 = vmatpush1.bf16.xpose.msra.mxu0 0
    %2676 = vmatprep.subr.bf16.mxu0 0
    %2677 = vmatpush1.bf16.xpose.msra.mxu0 0
    %2678 = vmatprep.subr.bf16.mxu0 0
    %2679 = vmatpush1.bf16.xpose.msra.mxu0 0
    %2680 = vmatprep.subr.bf16.mxu0 0
    %2681 = vmatpush1.bf16.xpose.msra.mxu0 0
    %2682 = vmatprep.mubr.bf16.mxu0 0
    %2683 = vmatmul.mubr.bf16.gmra.mrb[0].mxu0 %v2644
    %v2684 = vpop.f32.mrb[0].mxu0
    %v2685 = vadd.f32 0.0, %v2684
    %v2686 = vpop.f32.mrb[0].mxu0
    %v2687 = vpop.f32.mrb[0].mxu0
    %v2688 = vpop.f32.mrb[0].mxu0
    %2689 = vdwg.mxu0
    %2690 = vmatprep.subr.bf16.mxu0 0
    %2691 = vmatpush1.bf16.xpose.msra.mxu0 %v2647
    %2692 = vmatprep.subr.bf16.mxu0 0
    %2693 = vmatpush1.bf16.xpose.msra.mxu0 0
    %2694 = vmatprep.subr.bf16.mxu0 0
    %2695 = vmatpush1.bf16.xpose.msra.mxu0 0
    %2696 = vmatprep.subr.bf16.mxu0 0
    %2697 = vmatpush1.bf16.xpose.msra.mxu0 0
    %2698 = vmatprep.subr.bf16.mxu0 0
    %2699 = vmatpush1.bf16.xpose.msra.mxu0 0
    %2700 = vmatprep.subr.bf16.mxu0 0
    %2701 = vmatpush1.bf16.xpose.msra.mxu0 0
    %2702 = vmatprep.subr.bf16.mxu0 0
    %2703 = vmatpush1.bf16.xpose.msra.mxu0 0
    %2704 = vmatprep.subr.bf16.mxu0 0
    %2705 = vmatpush1.bf16.xpose.msra.mxu0 0
    %2706 = vmatprep.subr.bf16.mxu0 0
    %2707 = vmatpush1.bf16.xpose.msra.mxu0 0
    %2708 = vmatprep.subr.bf16.mxu0 0
    %2709 = vmatpush1.bf16.xpose.msra.mxu0 0
    %2710 = vmatprep.subr.bf16.mxu0 0
    %2711 = vmatpush1.bf16.xpose.msra.mxu0 0
    %2712 = vmatprep.subr.bf16.mxu0 0
    %2713 = vmatpush1.bf16.xpose.msra.mxu0 0
    %2714 = vmatprep.subr.bf16.mxu0 0
    %2715 = vmatpush1.bf16.xpose.msra.mxu0 0
    %2716 = vmatprep.subr.bf16.mxu0 0
    %2717 = vmatpush1.bf16.xpose.msra.mxu0 0
    %2718 = vmatprep.subr.bf16.mxu0 0
    %2719 = vmatpush1.bf16.xpose.msra.mxu0 0
    %2720 = vmatprep.subr.bf16.mxu0 0
    %2721 = vmatpush1.bf16.xpose.msra.mxu0 0
    %2722 = vmatprep.mubr.bf16.mxu0 0
    %2723 = vmatmul.mubr.bf16.gmra.mrb[0].mxu0 %v2645
    %v2724 = vpop.f32.mrb[0].mxu0
    %v2725 = vadd.f32 0.0, %v2724
    %v2726 = vpop.f32.mrb[0].mxu0
    %v2727 = vpop.f32.mrb[0].mxu0
    %v2728 = vpop.f32.mrb[0].mxu0
    %2729 = vdwg.mxu0
    %v2730 = vmul.f32 %v2685, 0.1796053
    %v2731 = vmul.f32 %v2725, 0.1796053
    %v2732 = vsel %vm789, %v2730, -inf
    %2733 = vmax.xlane.f32.xlu0 %v2732
    %v2734 = vpop.xlane.xlu0 %2733
    %v2735 = vsel %vm789, %v2731, -inf
    %2736 = vmax.xlane.f32.xlu0 %v2735
    %v2737 = vpop.xlane.xlu0 %2736
    %v2738 = vsub.f32 %v2730, %v2734
    %v2739 = vsub.f32 %v2731, %v2737
    %v2740 = vmul.f32 %v2738, 1.442695
    %v2741 = vpow.pop %v2740
    %v2742 = vmul.f32 %v2739, 1.442695
    %v2743 = vpow.pop %v2742
    %v2744 = vsel %vm789, %v2741, 0.0
    %2745 = vadd.xlane.f32.xlu0 %v2744
    %v2746 = vpop.xlane.xlu0 %2745
    %v2747 = vsel %vm789, %v2743, 0.0
    %2748 = vadd.xlane.f32.xlu0 %v2747
    %v2749 = vpop.xlane.xlu0 %2748
    %v2750 = vrcp.pop %v2746
    %v2751 = vrcp.pop %v2749
    %v2752 = vmul.f32 %v2741, %v2750
    %v2753 = vmul.f32 %v2743, %v2751
    %v2754 = vpack.c.bf16 %v2752, %v2752
    %v2755 = vpack.c.bf16 %v2753, %v2753
    %v2757 = vsel %vm789, %v2754, 0
    %v2760 = vsel %vm817, %v2648, 0
    %2762 = vmatprep.subr.bf16.mxu0 0
    %2763 = vmatpush1.bf16.msra.mxu0 %v2760
    %2764 = vmatprep.subr.bf16.mxu0 0
    %2765 = vmatpush1.bf16.msra.mxu0 0
    %2766 = vmatprep.subr.bf16.mxu0 0
    %2767 = vmatpush1.bf16.msra.mxu0 0
    %2768 = vmatprep.subr.bf16.mxu0 0
    %2769 = vmatpush1.bf16.msra.mxu0 0
    %2770 = vmatprep.subr.bf16.mxu0 0
    %2771 = vmatpush1.bf16.msra.mxu0 0
    %2772 = vmatprep.subr.bf16.mxu0 0
    %2773 = vmatpush1.bf16.msra.mxu0 0
    %2774 = vmatprep.subr.bf16.mxu0 0
    %2775 = vmatpush1.bf16.msra.mxu0 0
    %2776 = vmatprep.subr.bf16.mxu0 0
    %2777 = vmatpush1.bf16.msra.mxu0 0
    %2778 = vmatprep.subr.bf16.mxu0 0
    %2779 = vmatpush1.bf16.msra.mxu0 0
    %2780 = vmatprep.subr.bf16.mxu0 0
    %2781 = vmatpush1.bf16.msra.mxu0 0
    %2782 = vmatprep.subr.bf16.mxu0 0
    %2783 = vmatpush1.bf16.msra.mxu0 0
    %2784 = vmatprep.subr.bf16.mxu0 0
    %2785 = vmatpush1.bf16.msra.mxu0 0
    %2786 = vmatprep.subr.bf16.mxu0 0
    %2787 = vmatpush1.bf16.msra.mxu0 0
    %2788 = vmatprep.subr.bf16.mxu0 0
    %2789 = vmatpush1.bf16.msra.mxu0 0
    %2790 = vmatprep.subr.bf16.mxu0 0
    %2791 = vmatpush1.bf16.msra.mxu0 0
    %2792 = vmatprep.subr.bf16.mxu0 0
    %2793 = vmatpush1.bf16.msra.mxu0 0
    %2794 = vmatprep.mubr.bf16.mxu0 0
    %2795 = vmatmul.mubr.bf16.gmra.mrb[0].mxu0 %v2757
    %v2796 = vpop.f32.mrb[0].mxu0
    %v2797 = vadd.f32 0.0, %v2796
    %v2798 = vpop.f32.mrb[0].mxu0
    %v2799 = vpop.f32.mrb[0].mxu0
    %v2800 = vpop.f32.mrb[0].mxu0
    %2801 = vdwg.mxu0
    %v2803 = vsel %vm789, %v2755, 0
    %v2806 = vsel %vm817, %v2649, 0
    %2808 = vmatprep.subr.bf16.mxu0 0
    %2809 = vmatpush1.bf16.msra.mxu0 %v2806
    %2810 = vmatprep.subr.bf16.mxu0 0
    %2811 = vmatpush1.bf16.msra.mxu0 0
    %2812 = vmatprep.subr.bf16.mxu0 0
    %2813 = vmatpush1.bf16.msra.mxu0 0
    %2814 = vmatprep.subr.bf16.mxu0 0
    %2815 = vmatpush1.bf16.msra.mxu0 0
    %2816 = vmatprep.subr.bf16.mxu0 0
    %2817 = vmatpush1.bf16.msra.mxu0 0
    %2818 = vmatprep.subr.bf16.mxu0 0
    %2819 = vmatpush1.bf16.msra.mxu0 0
    %2820 = vmatprep.subr.bf16.mxu0 0
    %2821 = vmatpush1.bf16.msra.mxu0 0
    %2822 = vmatprep.subr.bf16.mxu0 0
    %2823 = vmatpush1.bf16.msra.mxu0 0
    %2824 = vmatprep.subr.bf16.mxu0 0
    %2825 = vmatpush1.bf16.msra.mxu0 0
    %2826 = vmatprep.subr.bf16.mxu0 0
    %2827 = vmatpush1.bf16.msra.mxu0 0
    %2828 = vmatprep.subr.bf16.mxu0 0
    %2829 = vmatpush1.bf16.msra.mxu0 0
    %2830 = vmatprep.subr.bf16.mxu0 0
    %2831 = vmatpush1.bf16.msra.mxu0 0
    %2832 = vmatprep.subr.bf16.mxu0 0
    %2833 = vmatpush1.bf16.msra.mxu0 0
    %2834 = vmatprep.subr.bf16.mxu0 0
    %2835 = vmatpush1.bf16.msra.mxu0 0
    %2836 = vmatprep.subr.bf16.mxu0 0
    %2837 = vmatpush1.bf16.msra.mxu0 0
    %2838 = vmatprep.subr.bf16.mxu0 0
    %2839 = vmatpush1.bf16.msra.mxu0 0
    %2840 = vmatprep.mubr.bf16.mxu0 0
    %2841 = vmatmul.mubr.bf16.gmra.mrb[0].mxu0 %v2803
    %v2842 = vpop.f32.mrb[0].mxu0
    %v2843 = vadd.f32 0.0, %v2842
    %v2844 = vpop.f32.mrb[0].mxu0
    %v2845 = vpop.f32.mrb[0].mxu0
    %v2846 = vpop.f32.mrb[0].mxu0
    %2847 = vdwg.mxu0
    %v2848 = vpack.c.bf16 %v2435, %v2389
    %v2849 = vpack.c.bf16 %v2639, %v2593
    %v2850 = vpack.c.bf16 %v2843, %v2797
    %v2852 = vlaneseq
    %v2853 = vshrl.u32 %v2852, 7
    %v2854 = vsub.s32 0, %v2853
    %v2855 = vrot.slane %v1677, %v2854
    %v2905 = vunpack.c.l.b16 %v1628
    %v2906 = vunpack.c.l.b16 %v1629
    %v2907 = vunpack.c.l.b16 %v1630
    %v2908 = vunpack.c.l.b16 %v1631
    %v2909 = vunpack.c.l.b16 %v1632
    %v2910 = vunpack.c.l.b16 %v1633
    %v2911 = vunpack.c.l.b16 %v1634
    %v2912 = vunpack.c.l.b16 %v1635
    %v2913 = vunpack.c.l.b16 %v1636
    %v2914 = vunpack.c.l.b16 %v1637
    %v2915 = vunpack.c.l.b16 %v1638
    %v2916 = vunpack.c.l.b16 %v1639
    %v2917 = vunpack.c.l.b16 %v1640
    %v2918 = vunpack.c.l.b16 %v1641
    %v2919 = vunpack.c.l.b16 %v1642
    %v2920 = vunpack.c.l.b16 %v1643
    %v2921 = vunpack.c.l.b16 %v1644
    %v2922 = vunpack.c.l.b16 %v1645
    %v2923 = vunpack.c.l.b16 %v1646
    %v2924 = vunpack.c.l.b16 %v1647
    %v2925 = vunpack.c.l.b16 %v1648
    %v2926 = vunpack.c.l.b16 %v1649
    %v2927 = vunpack.c.l.b16 %v1650
    %v2928 = vunpack.c.l.b16 %v1651
    %v2929 = vunpack.c.l.b16 %v1652
    %v2930 = vunpack.c.l.b16 %v1653
    %v2931 = vunpack.c.l.b16 %v1654
    %v2932 = vunpack.c.l.b16 %v1655
    %v2933 = vunpack.c.l.b16 %v1656
    %v2934 = vunpack.c.l.b16 %v1657
    %v2935 = vunpack.c.l.b16 %v1658
    %v2936 = vunpack.c.l.b16 %v1659
    %v2937 = vunpack.c.l.b16 %v1660
    %v2938 = vunpack.c.l.b16 %v1661
    %v2939 = vunpack.c.l.b16 %v1662
    %v2940 = vunpack.c.l.b16 %v1663
    %v2941 = vunpack.c.l.b16 %v1664
    %v2942 = vunpack.c.l.b16 %v1665
    %v2943 = vunpack.c.l.b16 %v1666
    %v2944 = vunpack.c.l.b16 %v1667
    %v2945 = vunpack.c.l.b16 %v1668
    %v2946 = vunpack.c.l.b16 %v1669
    %v2947 = vunpack.c.l.b16 %v1670
    %v2948 = vunpack.c.l.b16 %v1671
    %v2949 = vunpack.c.l.b16 %v1672
    %v2950 = vunpack.c.l.b16 %v1673
    %v2951 = vunpack.c.l.b16 %v1674
    %v2952 = vunpack.c.l.b16 %v1675
    %v2953 = vpack.c.b16 %v2906, %v2905
    %v2954 = vpack.c.b16 %v2908, %v2907
    %v2955 = vpack.c.b16 %v2910, %v2909
    %v2956 = vpack.c.b16 %v2912, %v2911
    %v2957 = vpack.c.b16 %v2914, %v2913
    %v2958 = vpack.c.b16 %v2916, %v2915
    %v2959 = vpack.c.b16 %v2918, %v2917
    %v2960 = vpack.c.b16 %v2920, %v2919
    %v2961 = vpack.c.b16 %v2922, %v2921
    %v2962 = vpack.c.b16 %v2924, %v2923
    %v2963 = vpack.c.b16 %v2926, %v2925
    %v2964 = vpack.c.b16 %v2928, %v2927
    %v2965 = vpack.c.b16 %v2930, %v2929
    %v2966 = vpack.c.b16 %v2932, %v2931
    %v2967 = vpack.c.b16 %v2934, %v2933
    %v2968 = vpack.c.b16 %v2936, %v2935
    %v2969 = vpack.c.b16 %v2938, %v2937
    %v2970 = vpack.c.b16 %v2940, %v2939
    %v2971 = vpack.c.b16 %v2942, %v2941
    %v2972 = vpack.c.b16 %v2944, %v2943
    %v2973 = vpack.c.b16 %v2946, %v2945
    %v2974 = vpack.c.b16 %v2948, %v2947
    %v2975 = vpack.c.b16 %v2950, %v2949
    %v2976 = vpack.c.b16 %v2952, %v2951
    %3001 = vmatprep.subr.bf16.mxu0 0
    %3002 = vmatpush1.bf16.msra.mxu0 %v2953
    %3003 = vmatprep.subr.bf16.mxu0 0
    %3004 = vmatpush1.bf16.msra.mxu0 %v2954
    %3005 = vmatprep.subr.bf16.mxu0 0
    %3006 = vmatpush1.bf16.msra.mxu0 %v2955
    %3007 = vmatprep.subr.bf16.mxu0 0
    %3008 = vmatpush1.bf16.msra.mxu0 %v2956
    %3009 = vmatprep.subr.bf16.mxu0 0
    %3010 = vmatpush1.bf16.msra.mxu0 %v2957
    %3011 = vmatprep.subr.bf16.mxu0 0
    %3012 = vmatpush1.bf16.msra.mxu0 %v2958
    %3013 = vmatprep.subr.bf16.mxu0 0
    %3014 = vmatpush1.bf16.msra.mxu0 %v2959
    %3015 = vmatprep.subr.bf16.mxu0 0
    %3016 = vmatpush1.bf16.msra.mxu0 %v2960
    %3017 = vmatprep.subr.bf16.mxu0 0
    %3018 = vmatpush1.bf16.msra.mxu0 %v2961
    %3019 = vmatprep.subr.bf16.mxu0 0
    %3020 = vmatpush1.bf16.msra.mxu0 %v2962
    %3021 = vmatprep.subr.bf16.mxu0 0
    %3022 = vmatpush1.bf16.msra.mxu0 %v2963
    %3023 = vmatprep.subr.bf16.mxu0 0
    %3024 = vmatpush1.bf16.msra.mxu0 %v2964
    %3025 = vmatprep.subr.bf16.mxu0 0
    %3026 = vmatpush1.bf16.msra.mxu0 %v2965
    %3027 = vmatprep.subr.bf16.mxu0 0
    %3028 = vmatpush1.bf16.msra.mxu0 %v2966
    %3029 = vmatprep.subr.bf16.mxu0 0
    %3030 = vmatpush1.bf16.msra.mxu0 %v2967
    %3031 = vmatprep.subr.bf16.mxu0 0
    %3032 = vmatpush1.bf16.msra.mxu0 %v2968
    %3033 = vmatprep.mubr.bf16.mxu0 %v2849
    %3034 = vmatmul.mubr.bf16.gmra.mrb[0].mxu0 %v2848
    %v3035 = vpop.f32.mrb[0].mxu0
    %v3036 = vadd.f32 %v2855, %v3035
    %v3037 = vpop.f32.mrb[0].mxu0
    %v3038 = vpop.f32.mrb[0].mxu0
    %v3039 = vadd.f32 %v2855, %v3038
    %v3040 = vpop.f32.mrb[0].mxu0
    %3041 = vdwg.mxu0
    %3042 = vmatprep.subr.bf16.mxu0 0
    %3043 = vmatpush1.bf16.msra.mxu0 %v2969
    %3044 = vmatprep.subr.bf16.mxu0 0
    %3045 = vmatpush1.bf16.msra.mxu0 %v2970
    %3046 = vmatprep.subr.bf16.mxu0 0
    %3047 = vmatpush1.bf16.msra.mxu0 %v2971
    %3048 = vmatprep.subr.bf16.mxu0 0
    %3049 = vmatpush1.bf16.msra.mxu0 %v2972
    %3050 = vmatprep.subr.bf16.mxu0 0
    %3051 = vmatpush1.bf16.msra.mxu0 %v2973
    %3052 = vmatprep.subr.bf16.mxu0 0
    %3053 = vmatpush1.bf16.msra.mxu0 %v2974
    %3054 = vmatprep.subr.bf16.mxu0 0
    %3055 = vmatpush1.bf16.msra.mxu0 %v2975
    %3056 = vmatprep.subr.bf16.mxu0 0
    %3057 = vmatpush1.bf16.msra.mxu0 %v2976
    %3058 = vmatprep.subr.bf16.mxu0 0
    %3059 = vmatpush1.bf16.msra.mxu0 0
    %3060 = vmatprep.subr.bf16.mxu0 0
    %3061 = vmatpush1.bf16.msra.mxu0 0
    %3062 = vmatprep.subr.bf16.mxu0 0
    %3063 = vmatpush1.bf16.msra.mxu0 0
    %3064 = vmatprep.subr.bf16.mxu0 0
    %3065 = vmatpush1.bf16.msra.mxu0 0
    %3066 = vmatprep.subr.bf16.mxu0 0
    %3067 = vmatpush1.bf16.msra.mxu0 0
    %3068 = vmatprep.subr.bf16.mxu0 0
    %3069 = vmatpush1.bf16.msra.mxu0 0
    %3070 = vmatprep.subr.bf16.mxu0 0
    %3071 = vmatpush1.bf16.msra.mxu0 0
    %3072 = vmatprep.subr.bf16.mxu0 0
    %3073 = vmatpush1.bf16.msra.mxu0 0
    %3074 = vmatprep.mubr.bf16.mxu0 0
    %3075 = vmatmul.mubr.bf16.gmra.mrb[0].mxu0 %v2850
    %v3076 = vpop.f32.mrb[0].mxu0
    %v3077 = vadd.f32 %v3036, %v3076
    %v3078 = vpop.f32.mrb[0].mxu0
    %v3079 = vpop.f32.mrb[0].mxu0
    %v3080 = vadd.f32 %v3039, %v3079
    %v3081 = vpop.f32.mrb[0].mxu0
    %3082 = vdwg.mxu0
    %v3083 = vsel %vm453, %v3077, 0.0
    %3084 = vadd.xlane.f32.xlu0 %v3083
    %v3085 = vpop.xlane.xlu0 %3084
    %v3086 = vsel %vm453, %v3080, 0.0
    %3087 = vadd.xlane.f32.xlu0 %v3086
    %v3088 = vpop.xlane.xlu0 %3087
    %v3089 = vmul.f32 %v3085, %v1556
    %v3090 = vmul.f32 %v3088, %v1556
    %v3091 = vmul.f32 %v3077, %v3089
    %v3092 = vmul.f32 %v3080, %v3090
    %v3093 = vadd.f32 %v1561, %v3091
    %v3094 = vadd.f32 %v1562, %v3092
    %v3095 = vld [vmem:[%s5] sm:$0xff]
    %v3096 = vld [vmem:[%s5 + $0x8] sm:$0xff]
    %v3097 = vld [vmem:[%s5 + $0x10] sm:$0xff]
    %v3098 = vld [vmem:[%s5 + $0x18] sm:$0xff]
    %v3099 = vld [vmem:[%s5 + $0x20] sm:$0xff]
    %v3100 = vld [vmem:[%s5 + $0x28] sm:$0xff]
    %v3101 = vld [vmem:[%s5 + $0x30] sm:$0xff]
    %v3102 = vld [vmem:[%s5 + $0x38] sm:$0xff]
    %v3103 = vld [vmem:[%s5 + $0x40] sm:$0xff]
    %v3104 = vld [vmem:[%s5 + $0x48] sm:$0xff]
    %v3105 = vld [vmem:[%s5 + $0x50] sm:$0xff]
    %v3106 = vld [vmem:[%s5 + $0x58] sm:$0x1f]
    %v3108 = vsel %vm453, %v3093, 0
    %v3111 = vsel %vm453, %v3094, 0
    %vm3113 = vcmask 1044480
    %v3115 = vsel %vm3113, %v3106, 0
    %3117 = vmatprep.subr.mxu0 0.0
    %3118 = vmatpush1.msra.mxu0 %v3095
    %3119 = vmatprep.subr.mxu0 0.0
    %3120 = vmatpush1.msra.mxu0 %v3096
    %3121 = vmatprep.subr.mxu0 0.0
    %3122 = vmatpush1.msra.mxu0 %v3097
    %3123 = vmatprep.subr.mxu0 0.0
    %3124 = vmatpush1.msra.mxu0 %v3098
    %3125 = vmatprep.subr.mxu0 0.0
    %3126 = vmatpush1.msra.mxu0 %v3099
    %3127 = vmatprep.subr.mxu0 0.0
    %3128 = vmatpush1.msra.mxu0 %v3100
    %3129 = vmatprep.subr.mxu0 0.0
    %3130 = vmatpush1.msra.mxu0 %v3101
    %3131 = vmatprep.subr.mxu0 0.0
    %3132 = vmatpush1.msra.mxu0 %v3102
    %3133 = vmatprep.subr.mxu0 0.0
    %3134 = vmatpush1.msra.mxu0 %v3103
    %3135 = vmatprep.subr.mxu0 0.0
    %3136 = vmatpush1.msra.mxu0 %v3104
    %3137 = vmatprep.subr.mxu0 0.0
    %3138 = vmatpush1.msra.mxu0 %v3105
    %3139 = vmatprep.subr.mxu0 0.0
    %3140 = vmatpush1.msra.mxu0 %v3115
    %3141 = vmatprep.subr.mxu0 0.0
    %3142 = vmatpush1.msra.mxu0 0.0
    %3143 = vmatprep.subr.mxu0 0.0
    %3144 = vmatpush1.msra.mxu0 0.0
    %3145 = vmatprep.subr.mxu0 0.0
    %3146 = vmatpush1.msra.mxu0 0.0
    %3147 = vmatprep.subr.mxu0 0.0
    %3148 = vmatpush1.msra.mxu0 0.0
    %3149 = vmatprep.subr.mxu0 0.0
    %3150 = vmatpush1.msra.mxu0 0.0
    %3151 = vmatprep.subr.mxu0 0.0
    %3152 = vmatpush1.msra.mxu0 0.0
    %3153 = vmatprep.subr.mxu0 0.0
    %3154 = vmatpush1.msra.mxu0 0.0
    %3155 = vmatprep.subr.mxu0 0.0
    %3156 = vmatpush1.msra.mxu0 0.0
    %3157 = vmatprep.subr.mxu0 0.0
    %3158 = vmatpush1.msra.mxu0 0.0
    %3159 = vmatprep.subr.mxu0 0.0
    %3160 = vmatpush1.msra.mxu0 0.0
    %3161 = vmatprep.subr.mxu0 0.0
    %3162 = vmatpush1.msra.mxu0 0.0
    %3163 = vmatprep.subr.mxu0 0.0
    %3164 = vmatpush1.msra.mxu0 0.0
    %3165 = vmatprep.subr.mxu0 0.0
    %3166 = vmatpush1.msra.mxu0 0.0
    %3167 = vmatprep.subr.mxu0 0.0
    %3168 = vmatpush1.msra.mxu0 0.0
    %3169 = vmatprep.subr.mxu0 0.0
    %3170 = vmatpush1.msra.mxu0 0.0
    %3171 = vmatprep.subr.mxu0 0.0
    %3172 = vmatpush1.msra.mxu0 0.0
    %3173 = vmatprep.subr.mxu0 0.0
    %3174 = vmatpush1.msra.mxu0 0.0
    %3175 = vmatprep.subr.mxu0 0.0
    %3176 = vmatpush1.msra.mxu0 0.0
    %3177 = vmatprep.subr.mxu0 0.0
    %3178 = vmatpush1.msra.mxu0 0.0
    %3179 = vmatprep.subr.mxu0 0.0
    %3180 = vmatpush1.msra.mxu0 0.0
    %3181 = vmatprep.mubr.f32.mxu0 0.0
    %3182 = vmatmul.mubr.f32.gmra.mrb[0].mxu0 %v3108
    %v3183 = vpop.f32.mrb[0].mxu0
    %v3184 = vadd.f32 0.0, %v3183
    %v3185 = vpop.f32.mrb[0].mxu0
    %3186 = vmatprep.mubr.f32.mxu0 0.0
    %3187 = vmatmul.mubr.f32.gmra.mrb[0].mxu0 %v3111
    %v3188 = vpop.f32.mrb[0].mxu0
    %v3189 = vadd.f32 0.0, %v3188
    %v3190 = vpop.f32.mrb[0].mxu0
    %3191 = vdwg.mxu0
    %3192 = vst [vmem:[#allocation2] sm:$0xff] %v3184
    %3193 = vst [vmem:[#allocation2 + $0x8] sm:$0xff] %v3189
    // Predicated region
    $region26: #{tpu_custom_call.1} parent=1 // pred_check
      _
    $region27: #{tpu_custom_call.1} parent=1 // pred_check_branch
      %3195 = sbr.rel (0) target = $region29
    $region28: #{tpu_custom_call.1} parent=1 // pred_region
      %s3197 = ssub.s32 256, 256
      %3198 = vsyncadd [#allocation3], %s3197
      %s3199 = sshll.u32 [#allocation2], 4
      %s3200 = int_to_ptr.vmem [resolvable:$true] %s3199
      %3205 = dma.vmem_to_hbm [thread:$0]  %s3200, 256, %s6, [#allocation3], 128, 128, 8
    $region29: #{tpu_custom_call.1} parent=1 // pred_fallthru
      _
    // Predicated region
    $region30: #{tpu_custom_call.1} parent=1 // pred_check
      _
    $region31: #{tpu_custom_call.1} parent=1 // pred_check_branch
      %3207 = sbr.rel (0) target = $region33
    $region32: #{tpu_custom_call.1} parent=1 // pred_region
      %3208 = dma.done [#allocation3], 256
    $region33: #{tpu_custom_call.1} parent=1 // pred_fallthru
      _
    %3209 = vsyncpa [#allocation3], 1

</llo_original>
